<compile_context>
chip_gen: v5e
topology: v5e:2x2
jax: 0.10.0
libtpu: 0.0.40
codegen_flags: <defaults>
</compile_context>

<pallas_src>
import functools

import jax
import jax.numpy as jnp
import numpy as np
from jax.experimental import pallas as pl
from jax.experimental.pallas import tpu as pltpu


def _round_up(x, m):
    return (x + m - 1) // m * m


# ---------------------------------------------------------------------------
# Fused Pallas kernel (one grid step == nb images)
# ---------------------------------------------------------------------------
def _block_kernel(x_ref, inm_ref, colm_ref, s1_ref, b1_ref, w1_ref,
                  s2_ref, b2_ref, w2_ref, wsc_ref, o_ref,
                  ap_ref, zp_ref, acc_ref, *, bk1, wpad, nb):
    # x_ref   : (nb, Mp1, cin_b)   zero-padded, flattened s2d input, f32
    # inm_ref : (Mp1, 1)           1.0 on interior rows of the padded input, else 0
    # colm_ref: (Ma, 1)            1.0 on valid output columns (x < wo), else 0
    # w1_ref  : (bk1*bk1, cin_b, cout_p)  conv1 tap weights, bf16
    # w2_ref  : (9, cout_p, cout_p)       conv2 tap weights, bf16
    # wsc_ref : (cin_b, cout_p)           1x1 shortcut weights, bf16
    # ap_ref  : (Mp1, cin_b)  bf16  flattened, zero-padded activated input
    # zp_ref  : (Mzp, cout_p) bf16  flattened, zero-padded conv1 activation
    # acc_ref : (Ma, cout_p)  f32   accumulator (Ma = ho * wpad)
    ma = acc_ref.shape[0]
    mzp = zp_ref.shape[0]
    cout_p = acc_ref.shape[1]
    z_off = wpad + 1                      # flat offset of padded interior position (1, 1)

    for j in range(nb):
        # ---- BN1 + ReLU (f32) with padding mask; stored once as bf16 ----
        a = jnp.maximum(x_ref[j] * s1_ref[0, :] + b1_ref[0, :], 0.0) * inm_ref[...]
        ap_ref[...] = a.astype(jnp.bfloat16)

        # ---- conv1 (3x3 / s2d-folded) as bk1*bk1 contiguous-window MXU matmuls ----
        # TODO(synk): for tiny K (first WRN stage) the taps could be concatenated along
        # K into one deep matmul to better fill the MXU systolic depth.
        for t in range(bk1 * bk1):
            off = (t // bk1) * wpad + (t % bk1)
            d = jnp.dot(ap_ref[pl.ds(off, ma), :], w1_ref[t],
                        preferred_element_type=jnp.float32)
            if t == 0:
                acc_ref[...] = d
            else:
                acc_ref[...] += d

        # ---- BN2 + ReLU (f32); garbage columns masked to zero so they double as
        #      conv2's left/right zero padding; one contiguous bf16 store ----
        z = jnp.maximum(acc_ref[...] * s2_ref[0, :] + b2_ref[0, :], 0.0) * colm_ref[...]
        # TODO(synk): F.dropout not implemented (drop_rate=0.0 in this configuration).
        zp_ref[pl.ds(0, z_off), :] = jnp.zeros((z_off, cout_p), jnp.bfloat16)
        tail = mzp - z_off - ma
        zp_ref[pl.ds(z_off + ma, tail), :] = jnp.zeros((tail, cout_p), jnp.bfloat16)
        zp_ref[pl.ds(z_off, ma), :] = z.astype(jnp.bfloat16)

        # ---- 1x1 shortcut conv initialises acc; conv2 taps accumulate on top,
        #      back-to-back with no interleaved VMEM writes ----
        acc_ref[...] = jnp.dot(ap_ref[pl.ds(z_off, ma), :], wsc_ref[...],
                               preferred_element_type=jnp.float32)
        for t in range(9):
            off = (t // 3) * wpad + (t % 3)
            acc_ref[...] += jnp.dot(zp_ref[pl.ds(off, ma), :], w2_ref[t],
                                    preferred_element_type=jnp.float32)

        o_ref[j] = acc_ref[...]


# ---------------------------------------------------------------------------
# Wrapper-side parameter plumbing (weight re-bases, BN affine folding)
# ---------------------------------------------------------------------------
def _bn_affine(gamma, beta, mean, var, eps=1e-5):
    scale = gamma / jnp.sqrt(var + eps)
    return scale, beta - mean * scale


def _conv1_weights_s2d(w1, f, bk, cout_p):
    """(Cout,Cin,3,3) -> (bk*bk, f*f*Cin, Cout_p) block-tap matrices in the
    space-to-depth basis (channel order (py, px, c)); Cout zero-padded."""
    cout, cin, kh, kw = w1.shape
    wt = jnp.transpose(w1, (2, 3, 1, 0))                       # (3, 3, cin, cout)
    out = jnp.zeros((bk, bk, f, f, cin, cout_p), jnp.float32)
    for bdy in range(bk):
        for py in range(f):
            dy = f * (bdy - 1) + py + 1
            if not 0 <= dy < kh:
                continue
            for bdx in range(bk):
                for px in range(f):
                    dx = f * (bdx - 1) + px + 1
                    if not 0 <= dx < kw:
                        continue
                    out = out.at[bdy, bdx, py, px, :, :cout].set(wt[dy, dx])
    return out.reshape(bk * bk, f * f * cin, cout_p).astype(jnp.bfloat16)


def _conv2_weights(w2, cout_p):
    cout = w2.shape[0]
    wt = jnp.transpose(w2, (2, 3, 1, 0))                       # (3, 3, cout, cout)
    out = jnp.zeros((3, 3, cout_p, cout_p), jnp.float32)
    out = out.at[:, :, :cout, :cout].set(wt)
    return out.reshape(9, cout_p, cout_p).astype(jnp.bfloat16)


def _shortcut_weights(wsc, cin_b, cout_p):
    cout, cin = wsc.shape[0], wsc.shape[1]
    out = jnp.zeros((cin_b, cout_p), jnp.float32)
    out = out.at[:cin, :cout].set(wsc[:, :, 0, 0].T)           # phase (0,0) rows only
    return out.astype(jnp.bfloat16)


@functools.partial(jax.jit, static_argnames=("stride",))
def basic_block_forward(x_nchw, params, stride):
    """BasicBlock forward (in_planes != out_planes path, eval-mode BN, drop_rate=0)."""
    # TODO(synk): identity-shortcut (equalInOut) residual path not implemented; this
    # covers the convShortcut path used by the reference configuration.
    # TODO(synk): for full-model use keep activations NHWC with 128-padded channels
    # between blocks to drop the NCHW<->NHWC transposes / channel strip below.
    w1 = params["w1"]
    cout, cin = w1.shape[0], w1.shape[1]
    cout_p = _round_up(cout, 128)          # lane-dense output channels
    f = stride                             # space-to-depth factor
    bk1 = 3 if stride == 1 else 2          # conv1 tap extent after s2d

    x = jnp.transpose(x_nchw, (0, 2, 3, 1)).astype(jnp.float32)    # NCHW -> NHWC
    n, h, w, _ = x.shape
    assert h % f == 0 and w % f == 0
    ho, wo = h // f, w // f
    cin_b = f * f * cin

    wpad = wo + 2                          # shared flat row-stride of ap / zp / acc
    hpad1 = ho + bk1 - 1                   # padded conv1-input rows
    ma = ho * wpad                         # accumulator rows (incl. 2 garbage cols/row)
    mp1 = _round_up(hpad1 * wpad + bk1 - 1, 8)
    mzp = _round_up((ho + 2) * wpad + 2, 8)

    # space-to-depth + spatial zero pad + flatten (pure layout ops, fused by XLA)
    xb = (x.reshape(n, ho, f, wo, f, cin)
           .transpose(0, 1, 3, 2, 4, 5)
           .reshape(n, ho, wo, cin_b))
    xp = jnp.pad(xb, ((0, 0), (1, bk1 - 2), (1, 1), (0, 0)))   # (n, hpad1, wpad, cin_b)
    xf = xp.reshape(n, hpad1 * wpad, cin_b)
    xf = jnp.pad(xf, ((0, 0), (0, mp1 - hpad1 * wpad), (0, 0)))

    # BN affine folds
    s1, b1 = _bn_affine(params["g1"], params["b1"], params["m1"], params["v1"])
    s2, b2 = _bn_affine(params["g2"], params["b2"], params["m2"], params["v2"])
    s1b = jnp.tile(s1, f * f).reshape(1, cin_b)
    b1b = jnp.tile(b1, f * f).reshape(1, cin_b)
    s2p = jnp.zeros((1, cout_p), jnp.float32).at[0, :cout].set(s2)
    b2p = jnp.zeros((1, cout_p), jnp.float32).at[0, :cout].set(b2)

    # static masks (interior rows of padded input / valid output columns)
    inm = np.zeros((hpad1, wpad), np.float32)
    inm[1:ho + 1, 1:wo + 1] = 1.0
    inm = np.concatenate([inm.reshape(-1), np.zeros(mp1 - hpad1 * wpad, np.float32)])
    inm = jnp.asarray(inm.reshape(mp1, 1))
    colm = jnp.asarray((np.arange(ma) % wpad < wo).astype(np.float32).reshape(ma, 1))

    w1b = _conv1_weights_s2d(w1, f, bk1, cout_p)        # (bk1*bk1, cin_b, cout_p) bf16
    w2b = _conv2_weights(params["w2"], cout_p)          # (9, cout_p, cout_p)      bf16
    wscb = _shortcut_weights(params["wsc"], cin_b, cout_p)

    # batch blocking: nb images per grid step (target M >= ~256-512 rows of work)
    nb = 1
    for d in range(min(n, 8), 0, -1):
        if (n % d == 0 and d * ma <= 1024
                and d * (mp1 * cin_b + ma * cout_p) * 4 <= (6 << 20)):
            nb = d
            break

    kernel = functools.partial(_block_kernel, bk1=bk1, wpad=wpad, nb=nb)

    def _const(shape):
        nd = len(shape)
        return pl.BlockSpec(shape, lambda i: (0,) * nd)

    # VMEM budget: double-buffered in/out tiles, (conservatively double-buffered)
    # constants, plus scratches and margin; capped for v7x headroom.
    const_bytes = 2 * (w1b.size + w2b.size + wscb.size) + 4 * (
        s1b.size + b1b.size + s2p.size + b2p.size + inm.size + colm.size)
    need = (2 * nb * (mp1 * cin_b + ma * cout_p) * 4
            + 2 * const_bytes
            + mp1 * cin_b * 2 + mzp * cout_p * 2 + ma * cout_p * 4
            + (4 << 20))
    vmem_limit = int(min(max(need, 8 << 20), 48 << 20))

    out = pl.pallas_call(
        kernel,
        grid=(n // nb,),
        in_specs=[
            pl.BlockSpec((nb, mp1, cin_b), lambda i: (i, 0, 0)),
            _const((mp1, 1)),
            _const((ma, 1)),
            _const((1, cin_b)),
            _const((1, cin_b)),
            _const((bk1 * bk1, cin_b, cout_p)),
            _const((1, cout_p)),
            _const((1, cout_p)),
            _const((9, cout_p, cout_p)),
            _const((cin_b, cout_p)),
        ],
        out_specs=pl.BlockSpec((nb, ma, cout_p), lambda i: (i, 0, 0)),
        out_shape=jax.ShapeDtypeStruct((n, ma, cout_p), jnp.float32),
        scratch_shapes=[
            pltpu.VMEM((mp1, cin_b), jnp.bfloat16),     # padded activated input (bf16)
            pltpu.VMEM((mzp, cout_p), jnp.bfloat16),    # padded conv1 activation (bf16)
            pltpu.VMEM((ma, cout_p), jnp.float32),      # f32 accumulator
        ],
        compiler_params=pltpu.CompilerParams(
            dimension_semantics=("parallel",),
            vmem_limit_bytes=vmem_limit,
        ),
    )(xf, inm, colm, s1b, b1b, w1b, s2p, b2p, w2b, wscb)

    out = out.reshape(n, ho, wpad, cout_p)[:, :, :wo, :cout]   # strip garbage cols/pad
    return jnp.transpose(out, (0, 3, 1, 2))                    # NHWC -> NCHW


# ---------------------------------------------------------------------------
# Pure-JAX reference (for verification)
# ---------------------------------------------------------------------------
def _conv_ref(x_nhwc, w, stride, pad):
    return jax.lax.conv_general_dilated(
        x_nhwc, jnp.transpose(w, (2, 3, 1, 0)),
        window_strides=(stride, stride), padding=((pad, pad), (pad, pad)),
        dimension_numbers=("NHWC", "HWIO", "NHWC"))


def reference_forward(x_nchw, params, stride):
    x = jnp.transpose(x_nchw, (0, 2, 3, 1))
    s1, b1 = _bn_affine(params["g1"], params["b1"], params["m1"], params["v1"])
    s2, b2 = _bn_affine(params["g2"], params["b2"], params["m2"], params["v2"])
    y1 = jnp.maximum(x * s1 + b1, 0.0)
    c1 = _conv_ref(y1, params["w1"], stride, 1)
    z = jnp.maximum(c1 * s2 + b2, 0.0)
    c2 = _conv_ref(z, params["w2"], 1, 1)
    sc = _conv_ref(y1, params["wsc"], stride, 0)
    return jnp.transpose(sc + c2, (0, 3, 1, 2))


# ---------------------------------------------------------------------------
# Main
# ---------------------------------------------------------------------------
if __name__ == "__main__":
    N, CIN, H, W = 2, 4, 16, 16
    COUT = 8   # in_planes != out_planes -> convShortcut path

    key = jax.random.PRNGKey(0)
    ks = jax.random.split(key, 12)
    params = {
        "w1": 0.1 * jax.random.normal(ks[0], (COUT, CIN, 3, 3), jnp.float32),
        "w2": 0.1 * jax.random.normal(ks[1], (COUT, COUT, 3, 3), jnp.float32),
        "wsc": 0.1 * jax.random.normal(ks[2], (COUT, CIN, 1, 1), jnp.float32),
        "g1": 1.0 + 0.1 * jax.random.normal(ks[3], (CIN,), jnp.float32),
        "b1": 0.1 * jax.random.normal(ks[4], (CIN,), jnp.float32),
        "m1": 0.1 * jax.random.normal(ks[5], (CIN,), jnp.float32),
        "v1": 1.0 + 0.1 * jnp.abs(jax.random.normal(ks[6], (CIN,), jnp.float32)),
        "g2": 1.0 + 0.1 * jax.random.normal(ks[7], (COUT,), jnp.float32),
        "b2": 0.1 * jax.random.normal(ks[8], (COUT,), jnp.float32),
        "m2": 0.1 * jax.random.normal(ks[9], (COUT,), jnp.float32),
        "v2": 1.0 + 0.1 * jnp.abs(jax.random.normal(ks[10], (COUT,), jnp.float32)),
    }
    x = jax.random.normal(ks[11], (N, CIN, H, W), jnp.float32)

    # Exercise both the stride-2 (space-to-depth, 2x2 block taps) and stride-1
    # (plain 3x3 taps) paths.  Tolerances account for bf16 MXU operands.
    for stride in (2, 1):
        out = jax.block_until_ready(basic_block_forward(x, params, stride))
        ref = jax.block_until_ready(reference_forward(x, params, stride))
        np.testing.assert_allclose(np.asarray(out), np.asarray(ref),
                                   rtol=5e-2, atol=5e-2)
        assert out.shape == (N, COUT, H // stride, W // stride)

    print("KERNEL_OK")
</pallas_src>

<mosaic_0001>
module attributes {stable_mosaic.version = 11 : i64} {
  func.func @_block_kernel(%arg0: i32, %arg1: memref<2x96x16xf32, #tpu.memory_space<vmem>>, %arg2: memref<96x1xf32, #tpu.memory_space<vmem>>, %arg3: memref<80x1xf32, #tpu.memory_space<vmem>>, %arg4: memref<1x16xf32, #tpu.memory_space<vmem>>, %arg5: memref<1x16xf32, #tpu.memory_space<vmem>>, %arg6: memref<4x16x128xbf16, #tpu.memory_space<vmem>>, %arg7: memref<1x128xf32, #tpu.memory_space<vmem>>, %arg8: memref<1x128xf32, #tpu.memory_space<vmem>>, %arg9: memref<9x128x128xbf16, #tpu.memory_space<vmem>>, %arg10: memref<16x128xbf16, #tpu.memory_space<vmem>>, %arg11: memref<2x80x128xf32, #tpu.memory_space<vmem>>, %arg12: memref<96x16xbf16, #tpu.memory_space<vmem>>, %arg13: memref<104x128xbf16, #tpu.memory_space<vmem>>, %arg14: memref<80x128xf32, #tpu.memory_space<vmem>>) attributes {dimension_semantics = [#tpu.dimension_semantics<parallel>], iteration_bounds = array<i64: 1>, scalar_prefetch = 0 : i64, scratch_operands = 3 : i64, tpu.core_type = #tpu.core_type<tc>, window_params = [{transform_indices = @transform_0, window_bounds = array<i64: 2, 96, 16>}, {pipeline_mode = #tpu.pipeline_mode<synchronous>, transform_indices = @transform_1, window_bounds = array<i64: 96, 1>}, {pipeline_mode = #tpu.pipeline_mode<synchronous>, transform_indices = @transform_2, window_bounds = array<i64: 80, 1>}, {pipeline_mode = #tpu.pipeline_mode<synchronous>, transform_indices = @transform_3, window_bounds = array<i64: 1, 16>}, {pipeline_mode = #tpu.pipeline_mode<synchronous>, transform_indices = @transform_4, window_bounds = array<i64: 1, 16>}, {pipeline_mode = #tpu.pipeline_mode<synchronous>, transform_indices = @transform_5, window_bounds = array<i64: 4, 16, 128>}, {pipeline_mode = #tpu.pipeline_mode<synchronous>, transform_indices = @transform_6, window_bounds = array<i64: 1, 128>}, {pipeline_mode = #tpu.pipeline_mode<synchronous>, transform_indices = @transform_7, window_bounds = array<i64: 1, 128>}, {pipeline_mode = #tpu.pipeline_mode<synchronous>, transform_indices = @transform_8, window_bounds = array<i64: 9, 128, 128>}, {pipeline_mode = #tpu.pipeline_mode<synchronous>, transform_indices = @transform_9, window_bounds = array<i64: 16, 128>}, {transform_indices = @transform_10, window_bounds = array<i64: 2, 80, 128>}]} {
    %c0 = arith.constant 0 : index
    %c0_0 = arith.constant 0 : index
    %c0_1 = arith.constant 0 : index
    %0 = vector.load %arg1[%c0, %c0_0, %c0_1] : memref<2x96x16xf32, #tpu.memory_space<vmem>>, vector<1x96x16xf32>
    %1 = vector.shape_cast %0 : vector<1x96x16xf32> to vector<96x16xf32>
    %c0_2 = arith.constant 0 : index
    %c0_3 = arith.constant 0 : index
    %2 = vector.load %arg4[%c0_2, %c0_3] : memref<1x16xf32, #tpu.memory_space<vmem>>, vector<1x16xf32>
    %3 = vector.shape_cast %2 : vector<1x16xf32> to vector<16xf32>
    %4 = vector.shape_cast %3 : vector<16xf32> to vector<1x16xf32>
    %5 = vector.broadcast %4 : vector<1x16xf32> to vector<96x16xf32>
    %6 = arith.mulf %1, %5 : vector<96x16xf32>
    %c0_4 = arith.constant 0 : index
    %c0_5 = arith.constant 0 : index
    %7 = vector.load %arg5[%c0_4, %c0_5] : memref<1x16xf32, #tpu.memory_space<vmem>>, vector<1x16xf32>
    %8 = vector.shape_cast %7 : vector<1x16xf32> to vector<16xf32>
    %9 = vector.shape_cast %8 : vector<16xf32> to vector<1x16xf32>
    %10 = vector.broadcast %9 : vector<1x16xf32> to vector<96x16xf32>
    %11 = arith.addf %6, %10 : vector<96x16xf32>
    %cst = arith.constant 0.000000e+00 : f32
    %12 = vector.broadcast %cst : f32 to vector<96x16xf32>
    %13 = arith.maximumf %11, %12 : vector<96x16xf32>
    %c0_6 = arith.constant 0 : index
    %c0_7 = arith.constant 0 : index
    %14 = vector.load %arg2[%c0_6, %c0_7] : memref<96x1xf32, #tpu.memory_space<vmem>>, vector<96x1xf32>
    %15 = vector.broadcast %14 : vector<96x1xf32> to vector<96x16xf32>
    %16 = arith.mulf %13, %15 : vector<96x16xf32>
    %17 = arith.truncf %16 : vector<96x16xf32> to vector<96x16xbf16>
    %c0_8 = arith.constant 0 : index
    %c0_9 = arith.constant 0 : index
    %18 = vector.load %arg12[%c0_8, %c0_9] : memref<96x16xbf16, #tpu.memory_space<vmem>>, vector<96x16xbf16>
    tpu.vector_store %arg12[%c0_8, %c0_9], %17 {strides = array<i32>} : memref<96x16xbf16, #tpu.memory_space<vmem>>, vector<96x16xbf16>,
    %c0_10 = arith.constant 0 : index
    %c0_11 = arith.constant 0 : index
    %19 = vector.load %arg12[%c0_10, %c0_11] : memref<96x16xbf16, #tpu.memory_space<vmem>>, vector<80x16xbf16>
    %c0_12 = arith.constant 0 : index
    %c0_13 = arith.constant 0 : index
    %c0_14 = arith.constant 0 : index
    %20 = vector.load %arg6[%c0_12, %c0_13, %c0_14] : memref<4x16x128xbf16, #tpu.memory_space<vmem>>, vector<1x16x128xbf16>
    %21 = vector.shape_cast %20 : vector<1x16x128xbf16> to vector<16x128xbf16>
    %cst_15 = arith.constant dense<0.000000e+00> : vector<80x128xf32>
    %22 = tpu.matmul %19, %21, %cst_15 {dimension_numbers = #tpu.dot_dimension_numbers<[1], [0], [0], [1], [0, 0, 1, 1], [], []>} : vector<80x16xbf16>, vector<16x128xbf16>, vector<80x128xf32> -> vector<80x128xf32>
    %c0_16 = arith.constant 0 : index
    %c0_17 = arith.constant 0 : index
    %23 = vector.load %arg14[%c0_16, %c0_17] : memref<80x128xf32, #tpu.memory_space<vmem>>, vector<80x128xf32>
    tpu.vector_store %arg14[%c0_16, %c0_17], %22 {strides = array<i32>} : memref<80x128xf32, #tpu.memory_space<vmem>>, vector<80x128xf32>,
    %c1 = arith.constant 1 : index
    %c0_18 = arith.constant 0 : index
    %24 = vector.load %arg12[%c1, %c0_18] : memref<96x16xbf16, #tpu.memory_space<vmem>>, vector<80x16xbf16>
    %c1_19 = arith.constant 1 : index
    %c0_20 = arith.constant 0 : index
    %c0_21 = arith.constant 0 : index
    %25 = vector.load %arg6[%c1_19, %c0_20, %c0_21] : memref<4x16x128xbf16, #tpu.memory_space<vmem>>, vector<1x16x128xbf16>
    %26 = vector.shape_cast %25 : vector<1x16x128xbf16> to vector<16x128xbf16>
    %cst_22 = arith.constant dense<0.000000e+00> : vector<80x128xf32>
    %27 = tpu.matmul %24, %26, %cst_22 {dimension_numbers = #tpu.dot_dimension_numbers<[1], [0], [0], [1], [0, 0, 1, 1], [], []>} : vector<80x16xbf16>, vector<16x128xbf16>, vector<80x128xf32> -> vector<80x128xf32>
    %c0_23 = arith.constant 0 : index
    %c0_24 = arith.constant 0 : index
    %28 = vector.load %arg14[%c0_23, %c0_24] : memref<80x128xf32, #tpu.memory_space<vmem>>, vector<80x128xf32>
    %29 = arith.addf %28, %27 : vector<80x128xf32>
    %c0_25 = arith.constant 0 : index
    %c0_26 = arith.constant 0 : index
    %30 = vector.load %arg14[%c0_25, %c0_26] : memref<80x128xf32, #tpu.memory_space<vmem>>, vector<80x128xf32>
    tpu.vector_store %arg14[%c0_25, %c0_26], %29 {strides = array<i32>} : memref<80x128xf32, #tpu.memory_space<vmem>>, vector<80x128xf32>,
    %c10 = arith.constant 10 : index
    %c0_27 = arith.constant 0 : index
    %31 = vector.load %arg12[%c10, %c0_27] : memref<96x16xbf16, #tpu.memory_space<vmem>>, vector<80x16xbf16>
    %c2 = arith.constant 2 : index
    %c0_28 = arith.constant 0 : index
    %c0_29 = arith.constant 0 : index
    %32 = vector.load %arg6[%c2, %c0_28, %c0_29] : memref<4x16x128xbf16, #tpu.memory_space<vmem>>, vector<1x16x128xbf16>
    %33 = vector.shape_cast %32 : vector<1x16x128xbf16> to vector<16x128xbf16>
    %cst_30 = arith.constant dense<0.000000e+00> : vector<80x128xf32>
    %34 = tpu.matmul %31, %33, %cst_30 {dimension_numbers = #tpu.dot_dimension_numbers<[1], [0], [0], [1], [0, 0, 1, 1], [], []>} : vector<80x16xbf16>, vector<16x128xbf16>, vector<80x128xf32> -> vector<80x128xf32>
    %c0_31 = arith.constant 0 : index
    %c0_32 = arith.constant 0 : index
    %35 = vector.load %arg14[%c0_31, %c0_32] : memref<80x128xf32, #tpu.memory_space<vmem>>, vector<80x128xf32>
    %36 = arith.addf %35, %34 : vector<80x128xf32>
    %c0_33 = arith.constant 0 : index
    %c0_34 = arith.constant 0 : index
    %37 = vector.load %arg14[%c0_33, %c0_34] : memref<80x128xf32, #tpu.memory_space<vmem>>, vector<80x128xf32>
    tpu.vector_store %arg14[%c0_33, %c0_34], %36 {strides = array<i32>} : memref<80x128xf32, #tpu.memory_space<vmem>>, vector<80x128xf32>,
    %c11 = arith.constant 11 : index
    %c0_35 = arith.constant 0 : index
    %38 = vector.load %arg12[%c11, %c0_35] : memref<96x16xbf16, #tpu.memory_space<vmem>>, vector<80x16xbf16>
    %c3 = arith.constant 3 : index
    %c0_36 = arith.constant 0 : index
    %c0_37 = arith.constant 0 : index
    %39 = vector.load %arg6[%c3, %c0_36, %c0_37] : memref<4x16x128xbf16, #tpu.memory_space<vmem>>, vector<1x16x128xbf16>
    %40 = vector.shape_cast %39 : vector<1x16x128xbf16> to vector<16x128xbf16>
    %cst_38 = arith.constant dense<0.000000e+00> : vector<80x128xf32>
    %41 = tpu.matmul %38, %40, %cst_38 {dimension_numbers = #tpu.dot_dimension_numbers<[1], [0], [0], [1], [0, 0, 1, 1], [], []>} : vector<80x16xbf16>, vector<16x128xbf16>, vector<80x128xf32> -> vector<80x128xf32>
    %c0_39 = arith.constant 0 : index
    %c0_40 = arith.constant 0 : index
    %42 = vector.load %arg14[%c0_39, %c0_40] : memref<80x128xf32, #tpu.memory_space<vmem>>, vector<80x128xf32>
    %43 = arith.addf %42, %41 : vector<80x128xf32>
    %c0_41 = arith.constant 0 : index
    %c0_42 = arith.constant 0 : index
    %44 = vector.load %arg14[%c0_41, %c0_42] : memref<80x128xf32, #tpu.memory_space<vmem>>, vector<80x128xf32>
    tpu.vector_store %arg14[%c0_41, %c0_42], %43 {strides = array<i32>} : memref<80x128xf32, #tpu.memory_space<vmem>>, vector<80x128xf32>,
    %c0_43 = arith.constant 0 : index
    %c0_44 = arith.constant 0 : index
    %45 = vector.load %arg14[%c0_43, %c0_44] : memref<80x128xf32, #tpu.memory_space<vmem>>, vector<80x128xf32>
    %c0_45 = arith.constant 0 : index
    %c0_46 = arith.constant 0 : index
    %46 = vector.load %arg7[%c0_45, %c0_46] : memref<1x128xf32, #tpu.memory_space<vmem>>, vector<1x128xf32>
    %47 = vector.shape_cast %46 : vector<1x128xf32> to vector<128xf32>
    %48 = vector.shape_cast %47 : vector<128xf32> to vector<1x128xf32>
    %49 = vector.broadcast %48 : vector<1x128xf32> to vector<80x128xf32>
    %50 = arith.mulf %45, %49 : vector<80x128xf32>
    %c0_47 = arith.constant 0 : index
    %c0_48 = arith.constant 0 : index
    %51 = vector.load %arg8[%c0_47, %c0_48] : memref<1x128xf32, #tpu.memory_space<vmem>>, vector<1x128xf32>
    %52 = vector.shape_cast %51 : vector<1x128xf32> to vector<128xf32>
    %53 = vector.shape_cast %52 : vector<128xf32> to vector<1x128xf32>
    %54 = vector.broadcast %53 : vector<1x128xf32> to vector<80x128xf32>
    %55 = arith.addf %50, %54 : vector<80x128xf32>
    %cst_49 = arith.constant 0.000000e+00 : f32
    %56 = vector.broadcast %cst_49 : f32 to vector<80x128xf32>
    %57 = arith.maximumf %55, %56 : vector<80x128xf32>
    %c0_50 = arith.constant 0 : index
    %c0_51 = arith.constant 0 : index
    %58 = vector.load %arg3[%c0_50, %c0_51] : memref<80x1xf32, #tpu.memory_space<vmem>>, vector<80x1xf32>
    %59 = vector.broadcast %58 : vector<80x1xf32> to vector<80x128xf32>
    %60 = arith.mulf %57, %59 : vector<80x128xf32>
    %cst_52 = arith.constant 0.000000e+00 : bf16
    %61 = vector.broadcast %cst_52 : bf16 to vector<11x128xbf16>
    %c0_53 = arith.constant 0 : index
    %c0_54 = arith.constant 0 : index
    %62 = vector.load %arg13[%c0_53, %c0_54] : memref<104x128xbf16, #tpu.memory_space<vmem>>, vector<11x128xbf16>
    tpu.vector_store %arg13[%c0_53, %c0_54], %61 {strides = array<i32>} : memref<104x128xbf16, #tpu.memory_space<vmem>>, vector<11x128xbf16>,
    %cst_55 = arith.constant 0.000000e+00 : bf16
    %63 = vector.broadcast %cst_55 : bf16 to vector<13x128xbf16>
    %c91 = arith.constant 91 : index
    %c0_56 = arith.constant 0 : index
    %64 = vector.load %arg13[%c91, %c0_56] : memref<104x128xbf16, #tpu.memory_space<vmem>>, vector<13x128xbf16>
    tpu.vector_store %arg13[%c91, %c0_56], %63 {strides = array<i32>} : memref<104x128xbf16, #tpu.memory_space<vmem>>, vector<13x128xbf16>,
    %65 = arith.truncf %60 : vector<80x128xf32> to vector<80x128xbf16>
    %c11_57 = arith.constant 11 : index
    %c0_58 = arith.constant 0 : index
    %66 = vector.load %arg13[%c11_57, %c0_58] : memref<104x128xbf16, #tpu.memory_space<vmem>>, vector<80x128xbf16>
    tpu.vector_store %arg13[%c11_57, %c0_58], %65 {strides = array<i32>} : memref<104x128xbf16, #tpu.memory_space<vmem>>, vector<80x128xbf16>,
    %c11_59 = arith.constant 11 : index
    %c0_60 = arith.constant 0 : index
    %67 = vector.load %arg12[%c11_59, %c0_60] : memref<96x16xbf16, #tpu.memory_space<vmem>>, vector<80x16xbf16>
    %c0_61 = arith.constant 0 : index
    %c0_62 = arith.constant 0 : index
    %68 = vector.load %arg10[%c0_61, %c0_62] : memref<16x128xbf16, #tpu.memory_space<vmem>>, vector<16x128xbf16>
    %cst_63 = arith.constant dense<0.000000e+00> : vector<80x128xf32>
    %69 = tpu.matmul %67, %68, %cst_63 {dimension_numbers = #tpu.dot_dimension_numbers<[1], [0], [0], [1], [0, 0, 1, 1], [], []>} : vector<80x16xbf16>, vector<16x128xbf16>, vector<80x128xf32> -> vector<80x128xf32>
    %c0_64 = arith.constant 0 : index
    %c0_65 = arith.constant 0 : index
    %70 = vector.load %arg14[%c0_64, %c0_65] : memref<80x128xf32, #tpu.memory_space<vmem>>, vector<80x128xf32>
    tpu.vector_store %arg14[%c0_64, %c0_65], %69 {strides = array<i32>} : memref<80x128xf32, #tpu.memory_space<vmem>>, vector<80x128xf32>,
    %c0_66 = arith.constant 0 : index
    %c0_67 = arith.constant 0 : index
    %71 = vector.load %arg14[%c0_66, %c0_67] : memref<80x128xf32, #tpu.memory_space<vmem>>, vector<80x128xf32>
    %c0_68 = arith.constant 0 : index
    %c0_69 = arith.constant 0 : index
    %72 = vector.load %arg13[%c0_68, %c0_69] : memref<104x128xbf16, #tpu.memory_space<vmem>>, vector<80x128xbf16>
    %c0_70 = arith.constant 0 : index
    %c0_71 = arith.constant 0 : index
    %c0_72 = arith.constant 0 : index
    %73 = vector.load %arg9[%c0_70, %c0_71, %c0_72] : memref<9x128x128xbf16, #tpu.memory_space<vmem>>, vector<1x128x128xbf16>
    %74 = vector.shape_cast %73 : vector<1x128x128xbf16> to vector<128x128xbf16>
    %cst_73 = arith.constant dense<0.000000e+00> : vector<80x128xf32>
    %75 = tpu.matmul %72, %74, %cst_73 {dimension_numbers = #tpu.dot_dimension_numbers<[1], [0], [0], [1], [0, 0, 1, 1], [], []>} : vector<80x128xbf16>, vector<128x128xbf16>, vector<80x128xf32> -> vector<80x128xf32>
    %76 = arith.addf %71, %75 : vector<80x128xf32>
    %c0_74 = arith.constant 0 : index
    %c0_75 = arith.constant 0 : index
    %77 = vector.load %arg14[%c0_74, %c0_75] : memref<80x128xf32, #tpu.memory_space<vmem>>, vector<80x128xf32>
    tpu.vector_store %arg14[%c0_74, %c0_75], %76 {strides = array<i32>} : memref<80x128xf32, #tpu.memory_space<vmem>>, vector<80x128xf32>,
    %c0_76 = arith.constant 0 : index
    %c0_77 = arith.constant 0 : index
    %78 = vector.load %arg14[%c0_76, %c0_77] : memref<80x128xf32, #tpu.memory_space<vmem>>, vector<80x128xf32>
    %c1_78 = arith.constant 1 : index
    %c0_79 = arith.constant 0 : index
    %79 = vector.load %arg13[%c1_78, %c0_79] : memref<104x128xbf16, #tpu.memory_space<vmem>>, vector<80x128xbf16>
    %c1_80 = arith.constant 1 : index
    %c0_81 = arith.constant 0 : index
    %c0_82 = arith.constant 0 : index
    %80 = vector.load %arg9[%c1_80, %c0_81, %c0_82] : memref<9x128x128xbf16, #tpu.memory_space<vmem>>, vector<1x128x128xbf16>
    %81 = vector.shape_cast %80 : vector<1x128x128xbf16> to vector<128x128xbf16>
    %cst_83 = arith.constant dense<0.000000e+00> : vector<80x128xf32>
    %82 = tpu.matmul %79, %81, %cst_83 {dimension_numbers = #tpu.dot_dimension_numbers<[1], [0], [0], [1], [0, 0, 1, 1], [], []>} : vector<80x128xbf16>, vector<128x128xbf16>, vector<80x128xf32> -> vector<80x128xf32>
    %83 = arith.addf %78, %82 : vector<80x128xf32>
    %c0_84 = arith.constant 0 : index
    %c0_85 = arith.constant 0 : index
    %84 = vector.load %arg14[%c0_84, %c0_85] : memref<80x128xf32, #tpu.memory_space<vmem>>, vector<80x128xf32>
    tpu.vector_store %arg14[%c0_84, %c0_85], %83 {strides = array<i32>} : memref<80x128xf32, #tpu.memory_space<vmem>>, vector<80x128xf32>,
    %c0_86 = arith.constant 0 : index
    %c0_87 = arith.constant 0 : index
    %85 = vector.load %arg14[%c0_86, %c0_87] : memref<80x128xf32, #tpu.memory_space<vmem>>, vector<80x128xf32>
    %c2_88 = arith.constant 2 : index
    %c0_89 = arith.constant 0 : index
    %86 = vector.load %arg13[%c2_88, %c0_89] : memref<104x128xbf16, #tpu.memory_space<vmem>>, vector<80x128xbf16>
    %c2_90 = arith.constant 2 : index
    %c0_91 = arith.constant 0 : index
    %c0_92 = arith.constant 0 : index
    %87 = vector.load %arg9[%c2_90, %c0_91, %c0_92] : memref<9x128x128xbf16, #tpu.memory_space<vmem>>, vector<1x128x128xbf16>
    %88 = vector.shape_cast %87 : vector<1x128x128xbf16> to vector<128x128xbf16>
    %cst_93 = arith.constant dense<0.000000e+00> : vector<80x128xf32>
    %89 = tpu.matmul %86, %88, %cst_93 {dimension_numbers = #tpu.dot_dimension_numbers<[1], [0], [0], [1], [0, 0, 1, 1], [], []>} : vector<80x128xbf16>, vector<128x128xbf16>, vector<80x128xf32> -> vector<80x128xf32>
    %90 = arith.addf %85, %89 : vector<80x128xf32>
    %c0_94 = arith.constant 0 : index
    %c0_95 = arith.constant 0 : index
    %91 = vector.load %arg14[%c0_94, %c0_95] : memref<80x128xf32, #tpu.memory_space<vmem>>, vector<80x128xf32>
    tpu.vector_store %arg14[%c0_94, %c0_95], %90 {strides = array<i32>} : memref<80x128xf32, #tpu.memory_space<vmem>>, vector<80x128xf32>,
    %c0_96 = arith.constant 0 : index
    %c0_97 = arith.constant 0 : index
    %92 = vector.load %arg14[%c0_96, %c0_97] : memref<80x128xf32, #tpu.memory_space<vmem>>, vector<80x128xf32>
    %c10_98 = arith.constant 10 : index
    %c0_99 = arith.constant 0 : index
    %93 = vector.load %arg13[%c10_98, %c0_99] : memref<104x128xbf16, #tpu.memory_space<vmem>>, vector<80x128xbf16>
    %c3_100 = arith.constant 3 : index
    %c0_101 = arith.constant 0 : index
    %c0_102 = arith.constant 0 : index
    %94 = vector.load %arg9[%c3_100, %c0_101, %c0_102] : memref<9x128x128xbf16, #tpu.memory_space<vmem>>, vector<1x128x128xbf16>
    %95 = vector.shape_cast %94 : vector<1x128x128xbf16> to vector<128x128xbf16>
    %cst_103 = arith.constant dense<0.000000e+00> : vector<80x128xf32>
    %96 = tpu.matmul %93, %95, %cst_103 {dimension_numbers = #tpu.dot_dimension_numbers<[1], [0], [0], [1], [0, 0, 1, 1], [], []>} : vector<80x128xbf16>, vector<128x128xbf16>, vector<80x128xf32> -> vector<80x128xf32>
    %97 = arith.addf %92, %96 : vector<80x128xf32>
    %c0_104 = arith.constant 0 : index
    %c0_105 = arith.constant 0 : index
    %98 = vector.load %arg14[%c0_104, %c0_105] : memref<80x128xf32, #tpu.memory_space<vmem>>, vector<80x128xf32>
    tpu.vector_store %arg14[%c0_104, %c0_105], %97 {strides = array<i32>} : memref<80x128xf32, #tpu.memory_space<vmem>>, vector<80x128xf32>,
    %c0_106 = arith.constant 0 : index
    %c0_107 = arith.constant 0 : index
    %99 = vector.load %arg14[%c0_106, %c0_107] : memref<80x128xf32, #tpu.memory_space<vmem>>, vector<80x128xf32>
    %c11_108 = arith.constant 11 : index
    %c0_109 = arith.constant 0 : index
    %100 = vector.load %arg13[%c11_108, %c0_109] : memref<104x128xbf16, #tpu.memory_space<vmem>>, vector<80x128xbf16>
    %c4 = arith.constant 4 : index
    %c0_110 = arith.constant 0 : index
    %c0_111 = arith.constant 0 : index
    %101 = vector.load %arg9[%c4, %c0_110, %c0_111] : memref<9x128x128xbf16, #tpu.memory_space<vmem>>, vector<1x128x128xbf16>
    %102 = vector.shape_cast %101 : vector<1x128x128xbf16> to vector<128x128xbf16>
    %cst_112 = arith.constant dense<0.000000e+00> : vector<80x128xf32>
    %103 = tpu.matmul %100, %102, %cst_112 {dimension_numbers = #tpu.dot_dimension_numbers<[1], [0], [0], [1], [0, 0, 1, 1], [], []>} : vector<80x128xbf16>, vector<128x128xbf16>, vector<80x128xf32> -> vector<80x128xf32>
    %104 = arith.addf %99, %103 : vector<80x128xf32>
    %c0_113 = arith.constant 0 : index
    %c0_114 = arith.constant 0 : index
    %105 = vector.load %arg14[%c0_113, %c0_114] : memref<80x128xf32, #tpu.memory_space<vmem>>, vector<80x128xf32>
    tpu.vector_store %arg14[%c0_113, %c0_114], %104 {strides = array<i32>} : memref<80x128xf32, #tpu.memory_space<vmem>>, vector<80x128xf32>,
    %c0_115 = arith.constant 0 : index
    %c0_116 = arith.constant 0 : index
    %106 = vector.load %arg14[%c0_115, %c0_116] : memref<80x128xf32, #tpu.memory_space<vmem>>, vector<80x128xf32>
    %c12 = arith.constant 12 : index
    %c0_117 = arith.constant 0 : index
    %107 = vector.load %arg13[%c12, %c0_117] : memref<104x128xbf16, #tpu.memory_space<vmem>>, vector<80x128xbf16>
    %c5 = arith.constant 5 : index
    %c0_118 = arith.constant 0 : index
    %c0_119 = arith.constant 0 : index
    %108 = vector.load %arg9[%c5, %c0_118, %c0_119] : memref<9x128x128xbf16, #tpu.memory_space<vmem>>, vector<1x128x128xbf16>
    %109 = vector.shape_cast %108 : vector<1x128x128xbf16> to vector<128x128xbf16>
    %cst_120 = arith.constant dense<0.000000e+00> : vector<80x128xf32>
    %110 = tpu.matmul %107, %109, %cst_120 {dimension_numbers = #tpu.dot_dimension_numbers<[1], [0], [0], [1], [0, 0, 1, 1], [], []>} : vector<80x128xbf16>, vector<128x128xbf16>, vector<80x128xf32> -> vector<80x128xf32>
    %111 = arith.addf %106, %110 : vector<80x128xf32>
    %c0_121 = arith.constant 0 : index
    %c0_122 = arith.constant 0 : index
    %112 = vector.load %arg14[%c0_121, %c0_122] : memref<80x128xf32, #tpu.memory_space<vmem>>, vector<80x128xf32>
    tpu.vector_store %arg14[%c0_121, %c0_122], %111 {strides = array<i32>} : memref<80x128xf32, #tpu.memory_space<vmem>>, vector<80x128xf32>,
    %c0_123 = arith.constant 0 : index
    %c0_124 = arith.constant 0 : index
    %113 = vector.load %arg14[%c0_123, %c0_124] : memref<80x128xf32, #tpu.memory_space<vmem>>, vector<80x128xf32>
    %c20 = arith.constant 20 : index
    %c0_125 = arith.constant 0 : index
    %114 = vector.load %arg13[%c20, %c0_125] : memref<104x128xbf16, #tpu.memory_space<vmem>>, vector<80x128xbf16>
    %c6 = arith.constant 6 : index
    %c0_126 = arith.constant 0 : index
    %c0_127 = arith.constant 0 : index
    %115 = vector.load %arg9[%c6, %c0_126, %c0_127] : memref<9x128x128xbf16, #tpu.memory_space<vmem>>, vector<1x128x128xbf16>
    %116 = vector.shape_cast %115 : vector<1x128x128xbf16> to vector<128x128xbf16>
    %cst_128 = arith.constant dense<0.000000e+00> : vector<80x128xf32>
    %117 = tpu.matmul %114, %116, %cst_128 {dimension_numbers = #tpu.dot_dimension_numbers<[1], [0], [0], [1], [0, 0, 1, 1], [], []>} : vector<80x128xbf16>, vector<128x128xbf16>, vector<80x128xf32> -> vector<80x128xf32>
    %118 = arith.addf %113, %117 : vector<80x128xf32>
    %c0_129 = arith.constant 0 : index
    %c0_130 = arith.constant 0 : index
    %119 = vector.load %arg14[%c0_129, %c0_130] : memref<80x128xf32, #tpu.memory_space<vmem>>, vector<80x128xf32>
    tpu.vector_store %arg14[%c0_129, %c0_130], %118 {strides = array<i32>} : memref<80x128xf32, #tpu.memory_space<vmem>>, vector<80x128xf32>,
    %c0_131 = arith.constant 0 : index
    %c0_132 = arith.constant 0 : index
    %120 = vector.load %arg14[%c0_131, %c0_132] : memref<80x128xf32, #tpu.memory_space<vmem>>, vector<80x128xf32>
    %c21 = arith.constant 21 : index
    %c0_133 = arith.constant 0 : index
    %121 = vector.load %arg13[%c21, %c0_133] : memref<104x128xbf16, #tpu.memory_space<vmem>>, vector<80x128xbf16>
    %c7 = arith.constant 7 : index
    %c0_134 = arith.constant 0 : index
    %c0_135 = arith.constant 0 : index
    %122 = vector.load %arg9[%c7, %c0_134, %c0_135] : memref<9x128x128xbf16, #tpu.memory_space<vmem>>, vector<1x128x128xbf16>
    %123 = vector.shape_cast %122 : vector<1x128x128xbf16> to vector<128x128xbf16>
    %cst_136 = arith.constant dense<0.000000e+00> : vector<80x128xf32>
    %124 = tpu.matmul %121, %123, %cst_136 {dimension_numbers = #tpu.dot_dimension_numbers<[1], [0], [0], [1], [0, 0, 1, 1], [], []>} : vector<80x128xbf16>, vector<128x128xbf16>, vector<80x128xf32> -> vector<80x128xf32>
    %125 = arith.addf %120, %124 : vector<80x128xf32>
    %c0_137 = arith.constant 0 : index
    %c0_138 = arith.constant 0 : index
    %126 = vector.load %arg14[%c0_137, %c0_138] : memref<80x128xf32, #tpu.memory_space<vmem>>, vector<80x128xf32>
    tpu.vector_store %arg14[%c0_137, %c0_138], %125 {strides = array<i32>} : memref<80x128xf32, #tpu.memory_space<vmem>>, vector<80x128xf32>,
    %c0_139 = arith.constant 0 : index
    %c0_140 = arith.constant 0 : index
    %127 = vector.load %arg14[%c0_139, %c0_140] : memref<80x128xf32, #tpu.memory_space<vmem>>, vector<80x128xf32>
    %c22 = arith.constant 22 : index
    %c0_141 = arith.constant 0 : index
    %128 = vector.load %arg13[%c22, %c0_141] : memref<104x128xbf16, #tpu.memory_space<vmem>>, vector<80x128xbf16>
    %c8 = arith.constant 8 : index
    %c0_142 = arith.constant 0 : index
    %c0_143 = arith.constant 0 : index
    %129 = vector.load %arg9[%c8, %c0_142, %c0_143] : memref<9x128x128xbf16, #tpu.memory_space<vmem>>, vector<1x128x128xbf16>
    %130 = vector.shape_cast %129 : vector<1x128x128xbf16> to vector<128x128xbf16>
    %cst_144 = arith.constant dense<0.000000e+00> : vector<80x128xf32>
    %131 = tpu.matmul %128, %130, %cst_144 {dimension_numbers = #tpu.dot_dimension_numbers<[1], [0], [0], [1], [0, 0, 1, 1], [], []>} : vector<80x128xbf16>, vector<128x128xbf16>, vector<80x128xf32> -> vector<80x128xf32>
    %132 = arith.addf %127, %131 : vector<80x128xf32>
    %c0_145 = arith.constant 0 : index
    %c0_146 = arith.constant 0 : index
    %133 = vector.load %arg14[%c0_145, %c0_146] : memref<80x128xf32, #tpu.memory_space<vmem>>, vector<80x128xf32>
    tpu.vector_store %arg14[%c0_145, %c0_146], %132 {strides = array<i32>} : memref<80x128xf32, #tpu.memory_space<vmem>>, vector<80x128xf32>,
    %c0_147 = arith.constant 0 : index
    %c0_148 = arith.constant 0 : index
    %134 = vector.load %arg14[%c0_147, %c0_148] : memref<80x128xf32, #tpu.memory_space<vmem>>, vector<80x128xf32>
    %c0_149 = arith.constant 0 : index
    %c0_150 = arith.constant 0 : index
    %c0_151 = arith.constant 0 : index
    %135 = vector.load %arg11[%c0_149, %c0_150, %c0_151] : memref<2x80x128xf32, #tpu.memory_space<vmem>>, vector<1x80x128xf32>
    %136 = vector.shape_cast %135 : vector<1x80x128xf32> to vector<80x128xf32>
    %137 = vector.shape_cast %134 : vector<80x128xf32> to vector<1x80x128xf32>
    tpu.vector_store %arg11[%c0_149, %c0_150, %c0_151], %137 {strides = array<i32>} : memref<2x80x128xf32, #tpu.memory_space<vmem>>, vector<1x80x128xf32>,
    %c1_152 = arith.constant 1 : index
    %c0_153 = arith.constant 0 : index
    %c0_154 = arith.constant 0 : index
    %138 = vector.load %arg1[%c1_152, %c0_153, %c0_154] : memref<2x96x16xf32, #tpu.memory_space<vmem>>, vector<1x96x16xf32>
    %139 = vector.shape_cast %138 : vector<1x96x16xf32> to vector<96x16xf32>
    %c0_155 = arith.constant 0 : index
    %c0_156 = arith.constant 0 : index
    %140 = vector.load %arg4[%c0_155, %c0_156] : memref<1x16xf32, #tpu.memory_space<vmem>>, vector<1x16xf32>
    %141 = vector.shape_cast %140 : vector<1x16xf32> to vector<16xf32>
    %142 = vector.shape_cast %141 : vector<16xf32> to vector<1x16xf32>
    %143 = vector.broadcast %142 : vector<1x16xf32> to vector<96x16xf32>
    %144 = arith.mulf %139, %143 : vector<96x16xf32>
    %c0_157 = arith.constant 0 : index
    %c0_158 = arith.constant 0 : index
    %145 = vector.load %arg5[%c0_157, %c0_158] : memref<1x16xf32, #tpu.memory_space<vmem>>, vector<1x16xf32>
    %146 = vector.shape_cast %145 : vector<1x16xf32> to vector<16xf32>
    %147 = vector.shape_cast %146 : vector<16xf32> to vector<1x16xf32>
    %148 = vector.broadcast %147 : vector<1x16xf32> to vector<96x16xf32>
    %149 = arith.addf %144, %148 : vector<96x16xf32>
    %cst_159 = arith.constant 0.000000e+00 : f32
    %150 = vector.broadcast %cst_159 : f32 to vector<96x16xf32>
    %151 = arith.maximumf %149, %150 : vector<96x16xf32>
    %c0_160 = arith.constant 0 : index
    %c0_161 = arith.constant 0 : index
    %152 = vector.load %arg2[%c0_160, %c0_161] : memref<96x1xf32, #tpu.memory_space<vmem>>, vector<96x1xf32>
    %153 = vector.broadcast %152 : vector<96x1xf32> to vector<96x16xf32>
    %154 = arith.mulf %151, %153 : vector<96x16xf32>
    %155 = arith.truncf %154 : vector<96x16xf32> to vector<96x16xbf16>
    %c0_162 = arith.constant 0 : index
    %c0_163 = arith.constant 0 : index
    %156 = vector.load %arg12[%c0_162, %c0_163] : memref<96x16xbf16, #tpu.memory_space<vmem>>, vector<96x16xbf16>
    tpu.vector_store %arg12[%c0_162, %c0_163], %155 {strides = array<i32>} : memref<96x16xbf16, #tpu.memory_space<vmem>>, vector<96x16xbf16>,
    %c0_164 = arith.constant 0 : index
    %c0_165 = arith.constant 0 : index
    %157 = vector.load %arg12[%c0_164, %c0_165] : memref<96x16xbf16, #tpu.memory_space<vmem>>, vector<80x16xbf16>
    %c0_166 = arith.constant 0 : index
    %c0_167 = arith.constant 0 : index
    %c0_168 = arith.constant 0 : index
    %158 = vector.load %arg6[%c0_166, %c0_167, %c0_168] : memref<4x16x128xbf16, #tpu.memory_space<vmem>>, vector<1x16x128xbf16>
    %159 = vector.shape_cast %158 : vector<1x16x128xbf16> to vector<16x128xbf16>
    %cst_169 = arith.constant dense<0.000000e+00> : vector<80x128xf32>
    %160 = tpu.matmul %157, %159, %cst_169 {dimension_numbers = #tpu.dot_dimension_numbers<[1], [0], [0], [1], [0, 0, 1, 1], [], []>} : vector<80x16xbf16>, vector<16x128xbf16>, vector<80x128xf32> -> vector<80x128xf32>
    %c0_170 = arith.constant 0 : index
    %c0_171 = arith.constant 0 : index
    %161 = vector.load %arg14[%c0_170, %c0_171] : memref<80x128xf32, #tpu.memory_space<vmem>>, vector<80x128xf32>
    tpu.vector_store %arg14[%c0_170, %c0_171], %160 {strides = array<i32>} : memref<80x128xf32, #tpu.memory_space<vmem>>, vector<80x128xf32>,
    %c1_172 = arith.constant 1 : index
    %c0_173 = arith.constant 0 : index
    %162 = vector.load %arg12[%c1_172, %c0_173] : memref<96x16xbf16, #tpu.memory_space<vmem>>, vector<80x16xbf16>
    %c1_174 = arith.constant 1 : index
    %c0_175 = arith.constant 0 : index
    %c0_176 = arith.constant 0 : index
    %163 = vector.load %arg6[%c1_174, %c0_175, %c0_176] : memref<4x16x128xbf16, #tpu.memory_space<vmem>>, vector<1x16x128xbf16>
    %164 = vector.shape_cast %163 : vector<1x16x128xbf16> to vector<16x128xbf16>
    %cst_177 = arith.constant dense<0.000000e+00> : vector<80x128xf32>
    %165 = tpu.matmul %162, %164, %cst_177 {dimension_numbers = #tpu.dot_dimension_numbers<[1], [0], [0], [1], [0, 0, 1, 1], [], []>} : vector<80x16xbf16>, vector<16x128xbf16>, vector<80x128xf32> -> vector<80x128xf32>
    %c0_178 = arith.constant 0 : index
    %c0_179 = arith.constant 0 : index
    %166 = vector.load %arg14[%c0_178, %c0_179] : memref<80x128xf32, #tpu.memory_space<vmem>>, vector<80x128xf32>
    %167 = arith.addf %166, %165 : vector<80x128xf32>
    %c0_180 = arith.constant 0 : index
    %c0_181 = arith.constant 0 : index
    %168 = vector.load %arg14[%c0_180, %c0_181] : memref<80x128xf32, #tpu.memory_space<vmem>>, vector<80x128xf32>
    tpu.vector_store %arg14[%c0_180, %c0_181], %167 {strides = array<i32>} : memref<80x128xf32, #tpu.memory_space<vmem>>, vector<80x128xf32>,
    %c10_182 = arith.constant 10 : index
    %c0_183 = arith.constant 0 : index
    %169 = vector.load %arg12[%c10_182, %c0_183] : memref<96x16xbf16, #tpu.memory_space<vmem>>, vector<80x16xbf16>
    %c2_184 = arith.constant 2 : index
    %c0_185 = arith.constant 0 : index
    %c0_186 = arith.constant 0 : index
    %170 = vector.load %arg6[%c2_184, %c0_185, %c0_186] : memref<4x16x128xbf16, #tpu.memory_space<vmem>>, vector<1x16x128xbf16>
    %171 = vector.shape_cast %170 : vector<1x16x128xbf16> to vector<16x128xbf16>
    %cst_187 = arith.constant dense<0.000000e+00> : vector<80x128xf32>
    %172 = tpu.matmul %169, %171, %cst_187 {dimension_numbers = #tpu.dot_dimension_numbers<[1], [0], [0], [1], [0, 0, 1, 1], [], []>} : vector<80x16xbf16>, vector<16x128xbf16>, vector<80x128xf32> -> vector<80x128xf32>
    %c0_188 = arith.constant 0 : index
    %c0_189 = arith.constant 0 : index
    %173 = vector.load %arg14[%c0_188, %c0_189] : memref<80x128xf32, #tpu.memory_space<vmem>>, vector<80x128xf32>
    %174 = arith.addf %173, %172 : vector<80x128xf32>
    %c0_190 = arith.constant 0 : index
    %c0_191 = arith.constant 0 : index
    %175 = vector.load %arg14[%c0_190, %c0_191] : memref<80x128xf32, #tpu.memory_space<vmem>>, vector<80x128xf32>
    tpu.vector_store %arg14[%c0_190, %c0_191], %174 {strides = array<i32>} : memref<80x128xf32, #tpu.memory_space<vmem>>, vector<80x128xf32>,
    %c11_192 = arith.constant 11 : index
    %c0_193 = arith.constant 0 : index
    %176 = vector.load %arg12[%c11_192, %c0_193] : memref<96x16xbf16, #tpu.memory_space<vmem>>, vector<80x16xbf16>
    %c3_194 = arith.constant 3 : index
    %c0_195 = arith.constant 0 : index
    %c0_196 = arith.constant 0 : index
    %177 = vector.load %arg6[%c3_194, %c0_195, %c0_196] : memref<4x16x128xbf16, #tpu.memory_space<vmem>>, vector<1x16x128xbf16>
    %178 = vector.shape_cast %177 : vector<1x16x128xbf16> to vector<16x128xbf16>
    %cst_197 = arith.constant dense<0.000000e+00> : vector<80x128xf32>
    %179 = tpu.matmul %176, %178, %cst_197 {dimension_numbers = #tpu.dot_dimension_numbers<[1], [0], [0], [1], [0, 0, 1, 1], [], []>} : vector<80x16xbf16>, vector<16x128xbf16>, vector<80x128xf32> -> vector<80x128xf32>
    %c0_198 = arith.constant 0 : index
    %c0_199 = arith.constant 0 : index
    %180 = vector.load %arg14[%c0_198, %c0_199] : memref<80x128xf32, #tpu.memory_space<vmem>>, vector<80x128xf32>
    %181 = arith.addf %180, %179 : vector<80x128xf32>
    %c0_200 = arith.constant 0 : index
    %c0_201 = arith.constant 0 : index
    %182 = vector.load %arg14[%c0_200, %c0_201] : memref<80x128xf32, #tpu.memory_space<vmem>>, vector<80x128xf32>
    tpu.vector_store %arg14[%c0_200, %c0_201], %181 {strides = array<i32>} : memref<80x128xf32, #tpu.memory_space<vmem>>, vector<80x128xf32>,
    %c0_202 = arith.constant 0 : index
    %c0_203 = arith.constant 0 : index
    %183 = vector.load %arg14[%c0_202, %c0_203] : memref<80x128xf32, #tpu.memory_space<vmem>>, vector<80x128xf32>
    %c0_204 = arith.constant 0 : index
    %c0_205 = arith.constant 0 : index
    %184 = vector.load %arg7[%c0_204, %c0_205] : memref<1x128xf32, #tpu.memory_space<vmem>>, vector<1x128xf32>
    %185 = vector.shape_cast %184 : vector<1x128xf32> to vector<128xf32>
    %186 = vector.shape_cast %185 : vector<128xf32> to vector<1x128xf32>
    %187 = vector.broadcast %186 : vector<1x128xf32> to vector<80x128xf32>
    %188 = arith.mulf %183, %187 : vector<80x128xf32>
    %c0_206 = arith.constant 0 : index
    %c0_207 = arith.constant 0 : index
    %189 = vector.load %arg8[%c0_206, %c0_207] : memref<1x128xf32, #tpu.memory_space<vmem>>, vector<1x128xf32>
    %190 = vector.shape_cast %189 : vector<1x128xf32> to vector<128xf32>
    %191 = vector.shape_cast %190 : vector<128xf32> to vector<1x128xf32>
    %192 = vector.broadcast %191 : vector<1x128xf32> to vector<80x128xf32>
    %193 = arith.addf %188, %192 : vector<80x128xf32>
    %cst_208 = arith.constant 0.000000e+00 : f32
    %194 = vector.broadcast %cst_208 : f32 to vector<80x128xf32>
    %195 = arith.maximumf %193, %194 : vector<80x128xf32>
    %c0_209 = arith.constant 0 : index
    %c0_210 = arith.constant 0 : index
    %196 = vector.load %arg3[%c0_209, %c0_210] : memref<80x1xf32, #tpu.memory_space<vmem>>, vector<80x1xf32>
    %197 = vector.broadcast %196 : vector<80x1xf32> to vector<80x128xf32>
    %198 = arith.mulf %195, %197 : vector<80x128xf32>
    %cst_211 = arith.constant 0.000000e+00 : bf16
    %199 = vector.broadcast %cst_211 : bf16 to vector<11x128xbf16>
    %c0_212 = arith.constant 0 : index
    %c0_213 = arith.constant 0 : index
    %200 = vector.load %arg13[%c0_212, %c0_213] : memref<104x128xbf16, #tpu.memory_space<vmem>>, vector<11x128xbf16>
    tpu.vector_store %arg13[%c0_212, %c0_213], %199 {strides = array<i32>} : memref<104x128xbf16, #tpu.memory_space<vmem>>, vector<11x128xbf16>,
    %cst_214 = arith.constant 0.000000e+00 : bf16
    %201 = vector.broadcast %cst_214 : bf16 to vector<13x128xbf16>
    %c91_215 = arith.constant 91 : index
    %c0_216 = arith.constant 0 : index
    %202 = vector.load %arg13[%c91_215, %c0_216] : memref<104x128xbf16, #tpu.memory_space<vmem>>, vector<13x128xbf16>
    tpu.vector_store %arg13[%c91_215, %c0_216], %201 {strides = array<i32>} : memref<104x128xbf16, #tpu.memory_space<vmem>>, vector<13x128xbf16>,
    %203 = arith.truncf %198 : vector<80x128xf32> to vector<80x128xbf16>
    %c11_217 = arith.constant 11 : index
    %c0_218 = arith.constant 0 : index
    %204 = vector.load %arg13[%c11_217, %c0_218] : memref<104x128xbf16, #tpu.memory_space<vmem>>, vector<80x128xbf16>
    tpu.vector_store %arg13[%c11_217, %c0_218], %203 {strides = array<i32>} : memref<104x128xbf16, #tpu.memory_space<vmem>>, vector<80x128xbf16>,
    %c11_219 = arith.constant 11 : index
    %c0_220 = arith.constant 0 : index
    %205 = vector.load %arg12[%c11_219, %c0_220] : memref<96x16xbf16, #tpu.memory_space<vmem>>, vector<80x16xbf16>
    %c0_221 = arith.constant 0 : index
    %c0_222 = arith.constant 0 : index
    %206 = vector.load %arg10[%c0_221, %c0_222] : memref<16x128xbf16, #tpu.memory_space<vmem>>, vector<16x128xbf16>
    %cst_223 = arith.constant dense<0.000000e+00> : vector<80x128xf32>
    %207 = tpu.matmul %205, %206, %cst_223 {dimension_numbers = #tpu.dot_dimension_numbers<[1], [0], [0], [1], [0, 0, 1, 1], [], []>} : vector<80x16xbf16>, vector<16x128xbf16>, vector<80x128xf32> -> vector<80x128xf32>
    %c0_224 = arith.constant 0 : index
    %c0_225 = arith.constant 0 : index
    %208 = vector.load %arg14[%c0_224, %c0_225] : memref<80x128xf32, #tpu.memory_space<vmem>>, vector<80x128xf32>
    tpu.vector_store %arg14[%c0_224, %c0_225], %207 {strides = array<i32>} : memref<80x128xf32, #tpu.memory_space<vmem>>, vector<80x128xf32>,
    %c0_226 = arith.constant 0 : index
    %c0_227 = arith.constant 0 : index
    %209 = vector.load %arg14[%c0_226, %c0_227] : memref<80x128xf32, #tpu.memory_space<vmem>>, vector<80x128xf32>
    %c0_228 = arith.constant 0 : index
    %c0_229 = arith.constant 0 : index
    %210 = vector.load %arg13[%c0_228, %c0_229] : memref<104x128xbf16, #tpu.memory_space<vmem>>, vector<80x128xbf16>
    %c0_230 = arith.constant 0 : index
    %c0_231 = arith.constant 0 : index
    %c0_232 = arith.constant 0 : index
    %211 = vector.load %arg9[%c0_230, %c0_231, %c0_232] : memref<9x128x128xbf16, #tpu.memory_space<vmem>>, vector<1x128x128xbf16>
    %212 = vector.shape_cast %211 : vector<1x128x128xbf16> to vector<128x128xbf16>
    %cst_233 = arith.constant dense<0.000000e+00> : vector<80x128xf32>
    %213 = tpu.matmul %210, %212, %cst_233 {dimension_numbers = #tpu.dot_dimension_numbers<[1], [0], [0], [1], [0, 0, 1, 1], [], []>} : vector<80x128xbf16>, vector<128x128xbf16>, vector<80x128xf32> -> vector<80x128xf32>
    %214 = arith.addf %209, %213 : vector<80x128xf32>
    %c0_234 = arith.constant 0 : index
    %c0_235 = arith.constant 0 : index
    %215 = vector.load %arg14[%c0_234, %c0_235] : memref<80x128xf32, #tpu.memory_space<vmem>>, vector<80x128xf32>
    tpu.vector_store %arg14[%c0_234, %c0_235], %214 {strides = array<i32>} : memref<80x128xf32, #tpu.memory_space<vmem>>, vector<80x128xf32>,
    %c0_236 = arith.constant 0 : index
    %c0_237 = arith.constant 0 : index
    %216 = vector.load %arg14[%c0_236, %c0_237] : memref<80x128xf32, #tpu.memory_space<vmem>>, vector<80x128xf32>
    %c1_238 = arith.constant 1 : index
    %c0_239 = arith.constant 0 : index
    %217 = vector.load %arg13[%c1_238, %c0_239] : memref<104x128xbf16, #tpu.memory_space<vmem>>, vector<80x128xbf16>
    %c1_240 = arith.constant 1 : index
    %c0_241 = arith.constant 0 : index
    %c0_242 = arith.constant 0 : index
    %218 = vector.load %arg9[%c1_240, %c0_241, %c0_242] : memref<9x128x128xbf16, #tpu.memory_space<vmem>>, vector<1x128x128xbf16>
    %219 = vector.shape_cast %218 : vector<1x128x128xbf16> to vector<128x128xbf16>
    %cst_243 = arith.constant dense<0.000000e+00> : vector<80x128xf32>
    %220 = tpu.matmul %217, %219, %cst_243 {dimension_numbers = #tpu.dot_dimension_numbers<[1], [0], [0], [1], [0, 0, 1, 1], [], []>} : vector<80x128xbf16>, vector<128x128xbf16>, vector<80x128xf32> -> vector<80x128xf32>
    %221 = arith.addf %216, %220 : vector<80x128xf32>
    %c0_244 = arith.constant 0 : index
    %c0_245 = arith.constant 0 : index
    %222 = vector.load %arg14[%c0_244, %c0_245] : memref<80x128xf32, #tpu.memory_space<vmem>>, vector<80x128xf32>
    tpu.vector_store %arg14[%c0_244, %c0_245], %221 {strides = array<i32>} : memref<80x128xf32, #tpu.memory_space<vmem>>, vector<80x128xf32>,
    %c0_246 = arith.constant 0 : index
    %c0_247 = arith.constant 0 : index
    %223 = vector.load %arg14[%c0_246, %c0_247] : memref<80x128xf32, #tpu.memory_space<vmem>>, vector<80x128xf32>
    %c2_248 = arith.constant 2 : index
    %c0_249 = arith.constant 0 : index
    %224 = vector.load %arg13[%c2_248, %c0_249] : memref<104x128xbf16, #tpu.memory_space<vmem>>, vector<80x128xbf16>
    %c2_250 = arith.constant 2 : index
    %c0_251 = arith.constant 0 : index
    %c0_252 = arith.constant 0 : index
    %225 = vector.load %arg9[%c2_250, %c0_251, %c0_252] : memref<9x128x128xbf16, #tpu.memory_space<vmem>>, vector<1x128x128xbf16>
    %226 = vector.shape_cast %225 : vector<1x128x128xbf16> to vector<128x128xbf16>
    %cst_253 = arith.constant dense<0.000000e+00> : vector<80x128xf32>
    %227 = tpu.matmul %224, %226, %cst_253 {dimension_numbers = #tpu.dot_dimension_numbers<[1], [0], [0], [1], [0, 0, 1, 1], [], []>} : vector<80x128xbf16>, vector<128x128xbf16>, vector<80x128xf32> -> vector<80x128xf32>
    %228 = arith.addf %223, %227 : vector<80x128xf32>
    %c0_254 = arith.constant 0 : index
    %c0_255 = arith.constant 0 : index
    %229 = vector.load %arg14[%c0_254, %c0_255] : memref<80x128xf32, #tpu.memory_space<vmem>>, vector<80x128xf32>
    tpu.vector_store %arg14[%c0_254, %c0_255], %228 {strides = array<i32>} : memref<80x128xf32, #tpu.memory_space<vmem>>, vector<80x128xf32>,
    %c0_256 = arith.constant 0 : index
    %c0_257 = arith.constant 0 : index
    %230 = vector.load %arg14[%c0_256, %c0_257] : memref<80x128xf32, #tpu.memory_space<vmem>>, vector<80x128xf32>
    %c10_258 = arith.constant 10 : index
    %c0_259 = arith.constant 0 : index
    %231 = vector.load %arg13[%c10_258, %c0_259] : memref<104x128xbf16, #tpu.memory_space<vmem>>, vector<80x128xbf16>
    %c3_260 = arith.constant 3 : index
    %c0_261 = arith.constant 0 : index
    %c0_262 = arith.constant 0 : index
    %232 = vector.load %arg9[%c3_260, %c0_261, %c0_262] : memref<9x128x128xbf16, #tpu.memory_space<vmem>>, vector<1x128x128xbf16>
    %233 = vector.shape_cast %232 : vector<1x128x128xbf16> to vector<128x128xbf16>
    %cst_263 = arith.constant dense<0.000000e+00> : vector<80x128xf32>
    %234 = tpu.matmul %231, %233, %cst_263 {dimension_numbers = #tpu.dot_dimension_numbers<[1], [0], [0], [1], [0, 0, 1, 1], [], []>} : vector<80x128xbf16>, vector<128x128xbf16>, vector<80x128xf32> -> vector<80x128xf32>
    %235 = arith.addf %230, %234 : vector<80x128xf32>
    %c0_264 = arith.constant 0 : index
    %c0_265 = arith.constant 0 : index
    %236 = vector.load %arg14[%c0_264, %c0_265] : memref<80x128xf32, #tpu.memory_space<vmem>>, vector<80x128xf32>
    tpu.vector_store %arg14[%c0_264, %c0_265], %235 {strides = array<i32>} : memref<80x128xf32, #tpu.memory_space<vmem>>, vector<80x128xf32>,
    %c0_266 = arith.constant 0 : index
    %c0_267 = arith.constant 0 : index
    %237 = vector.load %arg14[%c0_266, %c0_267] : memref<80x128xf32, #tpu.memory_space<vmem>>, vector<80x128xf32>
    %c11_268 = arith.constant 11 : index
    %c0_269 = arith.constant 0 : index
    %238 = vector.load %arg13[%c11_268, %c0_269] : memref<104x128xbf16, #tpu.memory_space<vmem>>, vector<80x128xbf16>
    %c4_270 = arith.constant 4 : index
    %c0_271 = arith.constant 0 : index
    %c0_272 = arith.constant 0 : index
    %239 = vector.load %arg9[%c4_270, %c0_271, %c0_272] : memref<9x128x128xbf16, #tpu.memory_space<vmem>>, vector<1x128x128xbf16>
    %240 = vector.shape_cast %239 : vector<1x128x128xbf16> to vector<128x128xbf16>
    %cst_273 = arith.constant dense<0.000000e+00> : vector<80x128xf32>
    %241 = tpu.matmul %238, %240, %cst_273 {dimension_numbers = #tpu.dot_dimension_numbers<[1], [0], [0], [1], [0, 0, 1, 1], [], []>} : vector<80x128xbf16>, vector<128x128xbf16>, vector<80x128xf32> -> vector<80x128xf32>
    %242 = arith.addf %237, %241 : vector<80x128xf32>
    %c0_274 = arith.constant 0 : index
    %c0_275 = arith.constant 0 : index
    %243 = vector.load %arg14[%c0_274, %c0_275] : memref<80x128xf32, #tpu.memory_space<vmem>>, vector<80x128xf32>
    tpu.vector_store %arg14[%c0_274, %c0_275], %242 {strides = array<i32>} : memref<80x128xf32, #tpu.memory_space<vmem>>, vector<80x128xf32>,
    %c0_276 = arith.constant 0 : index
    %c0_277 = arith.constant 0 : index
    %244 = vector.load %arg14[%c0_276, %c0_277] : memref<80x128xf32, #tpu.memory_space<vmem>>, vector<80x128xf32>
    %c12_278 = arith.constant 12 : index
    %c0_279 = arith.constant 0 : index
    %245 = vector.load %arg13[%c12_278, %c0_279] : memref<104x128xbf16, #tpu.memory_space<vmem>>, vector<80x128xbf16>
    %c5_280 = arith.constant 5 : index
    %c0_281 = arith.constant 0 : index
    %c0_282 = arith.constant 0 : index
    %246 = vector.load %arg9[%c5_280, %c0_281, %c0_282] : memref<9x128x128xbf16, #tpu.memory_space<vmem>>, vector<1x128x128xbf16>
    %247 = vector.shape_cast %246 : vector<1x128x128xbf16> to vector<128x128xbf16>
    %cst_283 = arith.constant dense<0.000000e+00> : vector<80x128xf32>
    %248 = tpu.matmul %245, %247, %cst_283 {dimension_numbers = #tpu.dot_dimension_numbers<[1], [0], [0], [1], [0, 0, 1, 1], [], []>} : vector<80x128xbf16>, vector<128x128xbf16>, vector<80x128xf32> -> vector<80x128xf32>
    %249 = arith.addf %244, %248 : vector<80x128xf32>
    %c0_284 = arith.constant 0 : index
    %c0_285 = arith.constant 0 : index
    %250 = vector.load %arg14[%c0_284, %c0_285] : memref<80x128xf32, #tpu.memory_space<vmem>>, vector<80x128xf32>
    tpu.vector_store %arg14[%c0_284, %c0_285], %249 {strides = array<i32>} : memref<80x128xf32, #tpu.memory_space<vmem>>, vector<80x128xf32>,
    %c0_286 = arith.constant 0 : index
    %c0_287 = arith.constant 0 : index
    %251 = vector.load %arg14[%c0_286, %c0_287] : memref<80x128xf32, #tpu.memory_space<vmem>>, vector<80x128xf32>
    %c20_288 = arith.constant 20 : index
    %c0_289 = arith.constant 0 : index
    %252 = vector.load %arg13[%c20_288, %c0_289] : memref<104x128xbf16, #tpu.memory_space<vmem>>, vector<80x128xbf16>
    %c6_290 = arith.constant 6 : index
    %c0_291 = arith.constant 0 : index
    %c0_292 = arith.constant 0 : index
    %253 = vector.load %arg9[%c6_290, %c0_291, %c0_292] : memref<9x128x128xbf16, #tpu.memory_space<vmem>>, vector<1x128x128xbf16>
    %254 = vector.shape_cast %253 : vector<1x128x128xbf16> to vector<128x128xbf16>
    %cst_293 = arith.constant dense<0.000000e+00> : vector<80x128xf32>
    %255 = tpu.matmul %252, %254, %cst_293 {dimension_numbers = #tpu.dot_dimension_numbers<[1], [0], [0], [1], [0, 0, 1, 1], [], []>} : vector<80x128xbf16>, vector<128x128xbf16>, vector<80x128xf32> -> vector<80x128xf32>
    %256 = arith.addf %251, %255 : vector<80x128xf32>
    %c0_294 = arith.constant 0 : index
    %c0_295 = arith.constant 0 : index
    %257 = vector.load %arg14[%c0_294, %c0_295] : memref<80x128xf32, #tpu.memory_space<vmem>>, vector<80x128xf32>
    tpu.vector_store %arg14[%c0_294, %c0_295], %256 {strides = array<i32>} : memref<80x128xf32, #tpu.memory_space<vmem>>, vector<80x128xf32>,
    %c0_296 = arith.constant 0 : index
    %c0_297 = arith.constant 0 : index
    %258 = vector.load %arg14[%c0_296, %c0_297] : memref<80x128xf32, #tpu.memory_space<vmem>>, vector<80x128xf32>
    %c21_298 = arith.constant 21 : index
    %c0_299 = arith.constant 0 : index
    %259 = vector.load %arg13[%c21_298, %c0_299] : memref<104x128xbf16, #tpu.memory_space<vmem>>, vector<80x128xbf16>
    %c7_300 = arith.constant 7 : index
    %c0_301 = arith.constant 0 : index
    %c0_302 = arith.constant 0 : index
    %260 = vector.load %arg9[%c7_300, %c0_301, %c0_302] : memref<9x128x128xbf16, #tpu.memory_space<vmem>>, vector<1x128x128xbf16>
    %261 = vector.shape_cast %260 : vector<1x128x128xbf16> to vector<128x128xbf16>
    %cst_303 = arith.constant dense<0.000000e+00> : vector<80x128xf32>
    %262 = tpu.matmul %259, %261, %cst_303 {dimension_numbers = #tpu.dot_dimension_numbers<[1], [0], [0], [1], [0, 0, 1, 1], [], []>} : vector<80x128xbf16>, vector<128x128xbf16>, vector<80x128xf32> -> vector<80x128xf32>
    %263 = arith.addf %258, %262 : vector<80x128xf32>
    %c0_304 = arith.constant 0 : index
    %c0_305 = arith.constant 0 : index
    %264 = vector.load %arg14[%c0_304, %c0_305] : memref<80x128xf32, #tpu.memory_space<vmem>>, vector<80x128xf32>
    tpu.vector_store %arg14[%c0_304, %c0_305], %263 {strides = array<i32>} : memref<80x128xf32, #tpu.memory_space<vmem>>, vector<80x128xf32>,
    %c0_306 = arith.constant 0 : index
    %c0_307 = arith.constant 0 : index
    %265 = vector.load %arg14[%c0_306, %c0_307] : memref<80x128xf32, #tpu.memory_space<vmem>>, vector<80x128xf32>
    %c22_308 = arith.constant 22 : index
    %c0_309 = arith.constant 0 : index
    %266 = vector.load %arg13[%c22_308, %c0_309] : memref<104x128xbf16, #tpu.memory_space<vmem>>, vector<80x128xbf16>
    %c8_310 = arith.constant 8 : index
    %c0_311 = arith.constant 0 : index
    %c0_312 = arith.constant 0 : index
    %267 = vector.load %arg9[%c8_310, %c0_311, %c0_312] : memref<9x128x128xbf16, #tpu.memory_space<vmem>>, vector<1x128x128xbf16>
    %268 = vector.shape_cast %267 : vector<1x128x128xbf16> to vector<128x128xbf16>
    %cst_313 = arith.constant dense<0.000000e+00> : vector<80x128xf32>
    %269 = tpu.matmul %266, %268, %cst_313 {dimension_numbers = #tpu.dot_dimension_numbers<[1], [0], [0], [1], [0, 0, 1, 1], [], []>} : vector<80x128xbf16>, vector<128x128xbf16>, vector<80x128xf32> -> vector<80x128xf32>
    %270 = arith.addf %265, %269 : vector<80x128xf32>
    %c0_314 = arith.constant 0 : index
    %c0_315 = arith.constant 0 : index
    %271 = vector.load %arg14[%c0_314, %c0_315] : memref<80x128xf32, #tpu.memory_space<vmem>>, vector<80x128xf32>
    tpu.vector_store %arg14[%c0_314, %c0_315], %270 {strides = array<i32>} : memref<80x128xf32, #tpu.memory_space<vmem>>, vector<80x128xf32>,
    %c0_316 = arith.constant 0 : index
    %c0_317 = arith.constant 0 : index
    %272 = vector.load %arg14[%c0_316, %c0_317] : memref<80x128xf32, #tpu.memory_space<vmem>>, vector<80x128xf32>
    %c1_318 = arith.constant 1 : index
    %c0_319 = arith.constant 0 : index
    %c0_320 = arith.constant 0 : index
    %273 = vector.load %arg11[%c1_318, %c0_319, %c0_320] : memref<2x80x128xf32, #tpu.memory_space<vmem>>, vector<1x80x128xf32>
    %274 = vector.shape_cast %273 : vector<1x80x128xf32> to vector<80x128xf32>
    %275 = vector.shape_cast %272 : vector<80x128xf32> to vector<1x80x128xf32>
    tpu.vector_store %arg11[%c1_318, %c0_319, %c0_320], %275 {strides = array<i32>} : memref<2x80x128xf32, #tpu.memory_space<vmem>>, vector<1x80x128xf32>,
    return
  }
  func.func @transform_0(%arg0: i32) -> (i32, i32, i32) {
    %c0_i32 = arith.constant 0 : i32
    %c0_i32_0 = arith.constant 0 : i32
    %c0_i32_1 = arith.constant 0 : i32
    return %arg0, %c0_i32, %c0_i32_0 : i32, i32, i32
  }
  func.func @transform_1(%arg0: i32) -> (i32, i32) {
    %c0_i32 = arith.constant 0 : i32
    %c0_i32_0 = arith.constant 0 : i32
    %c0_i32_1 = arith.constant 0 : i32
    return %c0_i32, %c0_i32_0 : i32, i32
  }
  func.func @transform_2(%arg0: i32) -> (i32, i32) {
    %c0_i32 = arith.constant 0 : i32
    %c0_i32_0 = arith.constant 0 : i32
    %c0_i32_1 = arith.constant 0 : i32
    return %c0_i32, %c0_i32_0 : i32, i32
  }
  func.func @transform_3(%arg0: i32) -> (i32, i32) {
    %c0_i32 = arith.constant 0 : i32
    %c0_i32_0 = arith.constant 0 : i32
    %c0_i32_1 = arith.constant 0 : i32
    return %c0_i32, %c0_i32_0 : i32, i32
  }
  func.func @transform_4(%arg0: i32) -> (i32, i32) {
    %c0_i32 = arith.constant 0 : i32
    %c0_i32_0 = arith.constant 0 : i32
    %c0_i32_1 = arith.constant 0 : i32
    return %c0_i32, %c0_i32_0 : i32, i32
  }
  func.func @transform_5(%arg0: i32) -> (i32, i32, i32) {
    %c0_i32 = arith.constant 0 : i32
    %c0_i32_0 = arith.constant 0 : i32
    %c0_i32_1 = arith.constant 0 : i32
    %c0_i32_2 = arith.constant 0 : i32
    return %c0_i32, %c0_i32_0, %c0_i32_1 : i32, i32, i32
  }
  func.func @transform_6(%arg0: i32) -> (i32, i32) {
    %c0_i32 = arith.constant 0 : i32
    %c0_i32_0 = arith.constant 0 : i32
    %c0_i32_1 = arith.constant 0 : i32
    return %c0_i32, %c0_i32_0 : i32, i32
  }
  func.func @transform_7(%arg0: i32) -> (i32, i32) {
    %c0_i32 = arith.constant 0 : i32
    %c0_i32_0 = arith.constant 0 : i32
    %c0_i32_1 = arith.constant 0 : i32
    return %c0_i32, %c0_i32_0 : i32, i32
  }
  func.func @transform_8(%arg0: i32) -> (i32, i32, i32) {
    %c0_i32 = arith.constant 0 : i32
    %c0_i32_0 = arith.constant 0 : i32
    %c0_i32_1 = arith.constant 0 : i32
    %c0_i32_2 = arith.constant 0 : i32
    return %c0_i32, %c0_i32_0, %c0_i32_1 : i32, i32, i32
  }
  func.func @transform_9(%arg0: i32) -> (i32, i32) {
    %c0_i32 = arith.constant 0 : i32
    %c0_i32_0 = arith.constant 0 : i32
    %c0_i32_1 = arith.constant 0 : i32
    return %c0_i32, %c0_i32_0 : i32, i32
  }
  func.func @transform_10(%arg0: i32) -> (i32, i32, i32) {
    %c0_i32 = arith.constant 0 : i32
    %c0_i32_0 = arith.constant 0 : i32
    %c0_i32_1 = arith.constant 0 : i32
    return %arg0, %c0_i32, %c0_i32_0 : i32, i32, i32
  }
}

</mosaic_0001>

<llo_original>
// kernel: tile.18
$region0: #{tile.18}
  #allocation0 [shape = 's32[1]{0}', space=sflag, size = 0x4, scoped, tag = 'scoped memory for tile.18']
  %s0 = inlined_call_operand.vmem [shape: f32[4], index: 0, kind: input, shape index: {}]
  %s1 = inlined_call_operand.vmem [shape: f32[4,4], index: 1, kind: output, shape index: {}]
  // Predicated region
  $region2: #{tile.18} parent=0 // pred_check
    _
  $region3: #{tile.18} parent=0 // pred_check_branch
    %3 = sbr.rel (0) target = $region5
  $region4: #{tile.18} parent=0 // pred_region
    _
  $region5: #{tile.18} parent=0 // pred_fallthru
    _
  %v4 = vld [vmem:[%s0] ss:$0 sm:$0xff]
  %5 = vst [vmem:[%s1] sm:$0xf] %v4

// kernel: tile.19
$region0: #{tile.19}
  %s0 = inlined_call_operand.vmem [shape: f32[4,4], index: 0, kind: input, shape index: {}]
  %s1 = inlined_call_operand.vmem [shape: f32[1,16], index: 1, kind: output, shape index: {}]
  $region1: #{tile.19} parent=0
    #allocation0 [shape = 'u8[4096]{0}', space=vmem, size = 0x1000, scoped, tag = 'scoped mem for output reshape']
    #allocation1 [shape = 'u8[4096]{0}', space=vmem, size = 0x1000, scoped, tag = 'scoped mem for input reshape']
    %s3 = ssub.s32 16, 1
    %v4 = vld [vmem:[%s0] sm:%s3]
    %5 = vst [vmem:[#allocation1] sm:%s3] %v4
    %v6 = vld [vmem:[#allocation1] sm:$0x1]
    %vm7 = vcmask 31744
    %8 = vst.msk [vmem:[#allocation0] sm:$0x1] %vm7, %v6
    %s9 = scalar_lea.vmem [#allocation1], 3
    %v10 = vld [vmem:[%s9] sm:$0x1]
    %11 = vrot.lane.b32.xlu0 %v10, 12
    %v12 = vpop.permute.xlu0 %11
    %vm13 = vcmask 130144
    %14 = vst.msk [vmem:[#allocation0] sm:$0x1] %vm13, %v12
    %s15 = scalar_lea.vmem [#allocation1], 2
    %v16 = vld [vmem:[%s15] sm:$0x1]
    %17 = vrot.lane.b32.xlu0 %v16, 8
    %v18 = vpop.permute.xlu0 %17
    %vm19 = vcmask 97344
    %20 = vst.msk [vmem:[#allocation0] sm:$0x1] %vm19, %v18
    %s21 = scalar_lea.vmem [#allocation1], 1
    %v22 = vld [vmem:[%s21] sm:$0x1]
    %23 = vrot.lane.b32.xlu0 %v22, 4
    %v24 = vpop.permute.xlu0 %23
    %vm25 = vcmask 64544
    %26 = vst.msk [vmem:[#allocation0] sm:$0x1] %vm25, %v24
    %s28 = ssub.s32 2, 1
    %v29 = vld [vmem:[#allocation0] sm:%s28]
    %s31 = ssub.s32 2, 1
    %32 = vst [vmem:[%s1] sm:%s31] %v29

// kernel: basic_block_forward.1
$region0: #{basic_block_forward.1}
  #allocation0 [shape = 'u32[]', space=smem, size = 0x4, offset = 0x4, fixed_abs, tag = 'smem constant byte address 0x4 - core index']
  #allocation1 [shape = 'u32[72,128]{1,0:T(1,128)}', space=vmem, size = 0x9000, scoped, tag = 'internal scratch']
  #allocation2 [shape = 'bf16[96,16]{1,0:T(8,128)(2,1)}', space=vmem, size = 0x6000, scoped, tag = 'scratch operand']
  #allocation3 [shape = 'bf16[104,128]{1,0:T(8,128)(2,1)}', space=vmem, size = 0x6800, scoped, tag = 'scratch operand']
  #allocation4 [shape = 'f32[80,128]{1,0:T(8,128)}', space=vmem, size = 0xa000, scoped, tag = 'scratch operand']
  %s0 = inlined_call_operand.vmem [shape: f32[2,96,16], index: 0, kind: input, shape index: {}]
  %s1 = inlined_call_operand.vmem [shape: f32[96,1], index: 1, kind: input, shape index: {}]
  %s2 = inlined_call_operand.vmem [shape: f32[80,1], index: 2, kind: input, shape index: {}]
  %s3 = inlined_call_operand.vmem [shape: f32[1,16], index: 3, kind: input, shape index: {}]
  %s4 = inlined_call_operand.vmem [shape: f32[1,16], index: 4, kind: input, shape index: {}]
  %s5 = inlined_call_operand.vmem [shape: bf16[4,16,128], index: 5, kind: input, shape index: {}]
  %s6 = inlined_call_operand.vmem [shape: f32[1,128], index: 6, kind: input, shape index: {}]
  %s7 = inlined_call_operand.vmem [shape: f32[1,128], index: 7, kind: input, shape index: {}]
  %s8 = inlined_call_operand.vmem [shape: bf16[9,128,128], index: 8, kind: input, shape index: {}]
  %s9 = inlined_call_operand.vmem [shape: bf16[16,128], index: 9, kind: input, shape index: {}]
  %s10 = inlined_call_operand.vmem [shape: f32[2,80,128], index: 10, kind: output, shape index: {}]
  %s11 = sld [smem:[#allocation0]]
  $region50: #{basic_block_forward.1} parent=0
    _
  %s13 = ssub.s32 1, %s11
  %s14 = scalar_select 0, %s13, %s11
  // Predicated region
  $region2: #{basic_block_forward.1} parent=0 // pred_check
    _
  $region3: #{basic_block_forward.1} parent=0 // pred_check_branch
    %16 = sbr.rel (0) target = $region5
  $region4: #{basic_block_forward.1} parent=0 // pred_region
    _
  $region5: #{basic_block_forward.1} parent=0 // pred_fallthru
    _
  // Predicated region
  $region6: #{basic_block_forward.1} parent=0 // pred_check
    _
  $region7: #{basic_block_forward.1} parent=0 // pred_check_branch
    %18 = sbr.rel (0) target = $region9
  $region8: #{basic_block_forward.1} parent=0 // pred_region
    _
  $region9: #{basic_block_forward.1} parent=0 // pred_fallthru
    _
  // Predicated region
  $region10: #{basic_block_forward.1} parent=0 // pred_check
    _
  $region11: #{basic_block_forward.1} parent=0 // pred_check_branch
    %20 = sbr.rel (0) target = $region13
  $region12: #{basic_block_forward.1} parent=0 // pred_region
    _
  $region13: #{basic_block_forward.1} parent=0 // pred_fallthru
    _
  // Predicated region
  $region14: #{basic_block_forward.1} parent=0 // pred_check
    _
  $region15: #{basic_block_forward.1} parent=0 // pred_check_branch
    %22 = sbr.rel (0) target = $region17
  $region16: #{basic_block_forward.1} parent=0 // pred_region
    _
  $region17: #{basic_block_forward.1} parent=0 // pred_fallthru
    _
  // Predicated region
  $region18: #{basic_block_forward.1} parent=0 // pred_check
    _
  $region19: #{basic_block_forward.1} parent=0 // pred_check_branch
    %24 = sbr.rel (0) target = $region21
  $region20: #{basic_block_forward.1} parent=0 // pred_region
    _
  $region21: #{basic_block_forward.1} parent=0 // pred_fallthru
    _
  // Predicated region
  $region22: #{basic_block_forward.1} parent=0 // pred_check
    _
  $region23: #{basic_block_forward.1} parent=0 // pred_check_branch
    %26 = sbr.rel (0) target = $region25
  $region24: #{basic_block_forward.1} parent=0 // pred_region
    _
  $region25: #{basic_block_forward.1} parent=0 // pred_fallthru
    _
  // Predicated region
  $region26: #{basic_block_forward.1} parent=0 // pred_check
    _
  $region27: #{basic_block_forward.1} parent=0 // pred_check_branch
    %28 = sbr.rel (0) target = $region29
  $region28: #{basic_block_forward.1} parent=0 // pred_region
    _
  $region29: #{basic_block_forward.1} parent=0 // pred_fallthru
    _
  // Predicated region
  $region30: #{basic_block_forward.1} parent=0 // pred_check
    _
  $region31: #{basic_block_forward.1} parent=0 // pred_check_branch
    %30 = sbr.rel (0) target = $region33
  $region32: #{basic_block_forward.1} parent=0 // pred_region
    _
  $region33: #{basic_block_forward.1} parent=0 // pred_fallthru
    _
  // Predicated region
  $region34: #{basic_block_forward.1} parent=0 // pred_check
    _
  $region35: #{basic_block_forward.1} parent=0 // pred_check_branch
    %32 = sbr.rel (0) target = $region37
  $region36: #{basic_block_forward.1} parent=0 // pred_region
    _
  $region37: #{basic_block_forward.1} parent=0 // pred_fallthru
    _
  // Predicated region
  $region38: #{basic_block_forward.1} parent=0 // pred_check
    _
  $region39: #{basic_block_forward.1} parent=0 // pred_check_branch
    %34 = sbr.rel (0) target = $region41
  $region40: #{basic_block_forward.1} parent=0 // pred_region
    _
  $region41: #{basic_block_forward.1} parent=0 // pred_fallthru
    _
  %v36 = vld [vmem:[%s0] sm:$0xff]
  %v37 = vld [vmem:[%s0 + $0x8] sm:$0xff]
  %v38 = vld [vmem:[%s0 + $0x10] sm:$0xff]
  %v39 = vld [vmem:[%s0 + $0x18] sm:$0xff]
  %v40 = vld [vmem:[%s0 + $0x20] sm:$0xff]
  %v41 = vld [vmem:[%s0 + $0x28] sm:$0xff]
  %v42 = vld [vmem:[%s0 + $0x30] sm:$0xff]
  %v43 = vld [vmem:[%s0 + $0x38] sm:$0xff]
  %v44 = vld [vmem:[%s0 + $0x40] sm:$0xff]
  %v45 = vld [vmem:[%s0 + $0x48] sm:$0xff]
  %v46 = vld [vmem:[%s0 + $0x50] sm:$0xff]
  %v47 = vld [vmem:[%s0 + $0x58] sm:$0xff]
  %v48 = vld [vmem:[%s3] sm:$0x1]
  %v50 = vperm.slane %v48, 0
  %v52 = vmul.f32 %v36, %v50
  %v53 = vmul.f32 %v37, %v50
  %v54 = vmul.f32 %v38, %v50
  %v55 = vmul.f32 %v39, %v50
  %v56 = vmul.f32 %v40, %v50
  %v57 = vmul.f32 %v41, %v50
  %v58 = vmul.f32 %v42, %v50
  %v59 = vmul.f32 %v43, %v50
  %v60 = vmul.f32 %v44, %v50
  %v61 = vmul.f32 %v45, %v50
  %v62 = vmul.f32 %v46, %v50
  %v63 = vmul.f32 %v47, %v50
  %v64 = vld [vmem:[%s4] sm:$0x1]
  %v66 = vperm.slane %v64, 0
  %v68 = vadd.f32 %v52, %v66
  %v69 = vadd.f32 %v53, %v66
  %v70 = vadd.f32 %v54, %v66
  %v71 = vadd.f32 %v55, %v66
  %v72 = vadd.f32 %v56, %v66
  %v73 = vadd.f32 %v57, %v66
  %v74 = vadd.f32 %v58, %v66
  %v75 = vadd.f32 %v59, %v66
  %v76 = vadd.f32 %v60, %v66
  %v77 = vadd.f32 %v61, %v66
  %v78 = vadd.f32 %v62, %v66
  %v79 = vadd.f32 %v63, %v66
  %v80 = vmax.f32 %v68, 0.0
  %v81 = vmax.f32 %v69, 0.0
  %v82 = vmax.f32 %v70, 0.0
  %v83 = vmax.f32 %v71, 0.0
  %v84 = vmax.f32 %v72, 0.0
  %v85 = vmax.f32 %v73, 0.0
  %v86 = vmax.f32 %v74, 0.0
  %v87 = vmax.f32 %v75, 0.0
  %v88 = vmax.f32 %v76, 0.0
  %v89 = vmax.f32 %v77, 0.0
  %v90 = vmax.f32 %v78, 0.0
  %v91 = vmax.f32 %v79, 0.0
  %v92 = vld [vmem:[%s1] sm:$0xff]
  %v93 = vld [vmem:[%s1 + $0x8] sm:$0xff]
  %v94 = vld [vmem:[%s1 + $0x10] sm:$0xff]
  %v95 = vld [vmem:[%s1 + $0x18] sm:$0xff]
  %v96 = vld [vmem:[%s1 + $0x20] sm:$0xff]
  %v97 = vld [vmem:[%s1 + $0x28] sm:$0xff]
  %v98 = vld [vmem:[%s1 + $0x30] sm:$0xff]
  %v99 = vld [vmem:[%s1 + $0x38] sm:$0xff]
  %v100 = vld [vmem:[%s1 + $0x40] sm:$0xff]
  %v101 = vld [vmem:[%s1 + $0x48] sm:$0xff]
  %v102 = vld [vmem:[%s1 + $0x50] sm:$0xff]
  %v103 = vld [vmem:[%s1 + $0x58] sm:$0xff]
  %105 = vset.pattern.permute.xlu0 0
  %106 = vperm.xlu0 %105, %v92
  %v107 = vpop.permute.xlu0 %106
  %110 = vset.pattern.permute.xlu0 0
  %111 = vperm.xlu0 %110, %v93
  %v112 = vpop.permute.xlu0 %111
  %115 = vset.pattern.permute.xlu0 0
  %116 = vperm.xlu0 %115, %v94
  %v117 = vpop.permute.xlu0 %116
  %120 = vset.pattern.permute.xlu0 0
  %121 = vperm.xlu0 %120, %v95
  %v122 = vpop.permute.xlu0 %121
  %125 = vset.pattern.permute.xlu0 0
  %126 = vperm.xlu0 %125, %v96
  %v127 = vpop.permute.xlu0 %126
  %130 = vset.pattern.permute.xlu0 0
  %131 = vperm.xlu0 %130, %v97
  %v132 = vpop.permute.xlu0 %131
  %135 = vset.pattern.permute.xlu0 0
  %136 = vperm.xlu0 %135, %v98
  %v137 = vpop.permute.xlu0 %136
  %140 = vset.pattern.permute.xlu0 0
  %141 = vperm.xlu0 %140, %v99
  %v142 = vpop.permute.xlu0 %141
  %145 = vset.pattern.permute.xlu0 0
  %146 = vperm.xlu0 %145, %v100
  %v147 = vpop.permute.xlu0 %146
  %150 = vset.pattern.permute.xlu0 0
  %151 = vperm.xlu0 %150, %v101
  %v152 = vpop.permute.xlu0 %151
  %155 = vset.pattern.permute.xlu0 0
  %156 = vperm.xlu0 %155, %v102
  %v157 = vpop.permute.xlu0 %156
  %160 = vset.pattern.permute.xlu0 0
  %161 = vperm.xlu0 %160, %v103
  %v162 = vpop.permute.xlu0 %161
  %v164 = vmul.f32 %v80, %v107
  %v165 = vmul.f32 %v81, %v112
  %v166 = vmul.f32 %v82, %v117
  %v167 = vmul.f32 %v83, %v122
  %v168 = vmul.f32 %v84, %v127
  %v169 = vmul.f32 %v85, %v132
  %v170 = vmul.f32 %v86, %v137
  %v171 = vmul.f32 %v87, %v142
  %v172 = vmul.f32 %v88, %v147
  %v173 = vmul.f32 %v89, %v152
  %v174 = vmul.f32 %v90, %v157
  %v175 = vmul.f32 %v91, %v162
  %v176 = vpack.c.bf16 %v164, %v164
  %v177 = vpack.c.bf16 %v165, %v165
  %v178 = vpack.c.bf16 %v166, %v166
  %v179 = vpack.c.bf16 %v167, %v167
  %v180 = vpack.c.bf16 %v168, %v168
  %v181 = vpack.c.bf16 %v169, %v169
  %v182 = vpack.c.bf16 %v170, %v170
  %v183 = vpack.c.bf16 %v171, %v171
  %v184 = vpack.c.bf16 %v172, %v172
  %v185 = vpack.c.bf16 %v173, %v173
  %v186 = vpack.c.bf16 %v174, %v174
  %v187 = vpack.c.bf16 %v175, %v175
  %vm188 = vcmask 125952
  %189 = vst.msk [vmem:[#allocation2] sm:$0xf] %vm188, %v176
  %190 = vst.msk [vmem:[#allocation2 + $0x4] sm:$0xf] %vm188, %v177
  %191 = vst.msk [vmem:[#allocation2 + $0x8] sm:$0xf] %vm188, %v178
  %192 = vst.msk [vmem:[#allocation2 + $0xc] sm:$0xf] %vm188, %v179
  %193 = vst.msk [vmem:[#allocation2 + $0x10] sm:$0xf] %vm188, %v180
  %194 = vst.msk [vmem:[#allocation2 + $0x14] sm:$0xf] %vm188, %v181
  %195 = vst.msk [vmem:[#allocation2 + $0x18] sm:$0xf] %vm188, %v182
  %196 = vst.msk [vmem:[#allocation2 + $0x1c] sm:$0xf] %vm188, %v183
  %197 = vst.msk [vmem:[#allocation2 + $0x20] sm:$0xf] %vm188, %v184
  %198 = vst.msk [vmem:[#allocation2 + $0x24] sm:$0xf] %vm188, %v185
  %199 = vst.msk [vmem:[#allocation2 + $0x28] sm:$0xf] %vm188, %v186
  %200 = vst.msk [vmem:[#allocation2 + $0x2c] sm:$0xf] %vm188, %v187
  %v201 = vld [vmem:[#allocation2] sm:$0xf]
  %v202 = vld [vmem:[#allocation2 + $0x4] sm:$0xf]
  %v203 = vld [vmem:[#allocation2 + $0x8] sm:$0xf]
  %v204 = vld [vmem:[#allocation2 + $0xc] sm:$0xf]
  %v205 = vld [vmem:[#allocation2 + $0x10] sm:$0xf]
  %v206 = vld [vmem:[#allocation2 + $0x14] sm:$0xf]
  %v207 = vld [vmem:[#allocation2 + $0x18] sm:$0xf]
  %v208 = vld [vmem:[#allocation2 + $0x1c] sm:$0xf]
  %v209 = vld [vmem:[#allocation2 + $0x20] sm:$0xf]
  %v210 = vld [vmem:[#allocation2 + $0x24] sm:$0xf]
  %v211 = vld [vmem:[%s5] sm:$0xf]
  %v212 = vld [vmem:[%s5 + $0x4] sm:$0xf]
  %v223 = vunpack.c.l.b16 %v201
  %v224 = vunpack.c.l.b16 %v202
  %v225 = vunpack.c.l.b16 %v203
  %v226 = vunpack.c.l.b16 %v204
  %v227 = vunpack.c.l.b16 %v205
  %v228 = vunpack.c.l.b16 %v206
  %v229 = vunpack.c.l.b16 %v207
  %v230 = vunpack.c.l.b16 %v208
  %v231 = vunpack.c.l.b16 %v209
  %v232 = vunpack.c.l.b16 %v210
  %v233 = vpack.c.b16 %v224, %v223
  %v234 = vpack.c.b16 %v226, %v225
  %v235 = vpack.c.b16 %v228, %v227
  %v236 = vpack.c.b16 %v230, %v229
  %v237 = vpack.c.b16 %v232, %v231
  %v240 = vunpack.c.l.b16 %v211
  %v241 = vunpack.c.l.b16 %v212
  %v242 = vpack.c.b16 %v241, %v240
  %vm244 = vcmask 130048
  %v246 = vsel %vm244, %v233, 0
  %v249 = vsel %vm244, %v234, 0
  %v252 = vsel %vm244, %v235, 0
  %v255 = vsel %vm244, %v236, 0
  %v258 = vsel %vm244, %v237, 0
  %260 = vmatpush.bf16.msra.mxu0 0
  %261 = vmatpush.bf16.msra.mxu0 0
  %262 = vmatpush.bf16.msra.mxu0 0
  %263 = vmatpush.bf16.msra.mxu0 0
  %264 = vmatpush.bf16.msra.mxu0 0
  %265 = vmatpush.bf16.msra.mxu0 0
  %266 = vmatpush.bf16.msra.mxu0 0
  %267 = vmatpush.bf16.msra.mxu0 %v242
  %268 = vmatmul.bf16.gmra.mxu0 %v246
  %v269 = vpop.f32.mrf.mxu0
  %v270 = vadd.f32 0.0, %v269
  %v271 = vpop.f32.mrf.mxu0
  %v272 = vadd.f32 0.0, %v271
  %273 = vmatmul.bf16.gmra.mxu0 %v249
  %v274 = vpop.f32.mrf.mxu0
  %v275 = vadd.f32 0.0, %v274
  %v276 = vpop.f32.mrf.mxu0
  %v277 = vadd.f32 0.0, %v276
  %278 = vmatmul.bf16.gmra.mxu0 %v252
  %v279 = vpop.f32.mrf.mxu0
  %v280 = vadd.f32 0.0, %v279
  %v281 = vpop.f32.mrf.mxu0
  %v282 = vadd.f32 0.0, %v281
  %283 = vmatmul.bf16.gmra.mxu0 %v255
  %v284 = vpop.f32.mrf.mxu0
  %v285 = vadd.f32 0.0, %v284
  %v286 = vpop.f32.mrf.mxu0
  %v287 = vadd.f32 0.0, %v286
  %288 = vmatmul.bf16.gmra.mxu0 %v258
  %v289 = vpop.f32.mrf.mxu0
  %v290 = vadd.f32 0.0, %v289
  %v291 = vpop.f32.mrf.mxu0
  %v292 = vadd.f32 0.0, %v291
  %293 = vdwg.mxu0
  %294 = vst [vmem:[#allocation4] sm:$0xff] %v270
  %295 = vst [vmem:[#allocation4 + $0x8] sm:$0xff] %v272
  %296 = vst [vmem:[#allocation4 + $0x10] sm:$0xff] %v275
  %297 = vst [vmem:[#allocation4 + $0x18] sm:$0xff] %v277
  %298 = vst [vmem:[#allocation4 + $0x20] sm:$0xff] %v280
  %299 = vst [vmem:[#allocation4 + $0x28] sm:$0xff] %v282
  %300 = vst [vmem:[#allocation4 + $0x30] sm:$0xff] %v285
  %301 = vst [vmem:[#allocation4 + $0x38] sm:$0xff] %v287
  %302 = vst [vmem:[#allocation4 + $0x40] sm:$0xff] %v290
  %303 = vst [vmem:[#allocation4 + $0x48] sm:$0xff] %v292
  %v304 = vld [vmem:[#allocation2] sm:$0xf]
  %v305 = vld [vmem:[#allocation2 + $0x4] sm:$0xf]
  %v306 = vld [vmem:[#allocation2 + $0x8] sm:$0xf]
  %v307 = vld [vmem:[#allocation2 + $0xc] sm:$0xf]
  %v308 = vld [vmem:[#allocation2 + $0x10] sm:$0xf]
  %v309 = vld [vmem:[#allocation2 + $0x14] sm:$0xf]
  %v310 = vld [vmem:[#allocation2 + $0x18] sm:$0xf]
  %v311 = vld [vmem:[#allocation2 + $0x1c] sm:$0xf]
  %v312 = vld [vmem:[#allocation2 + $0x20] sm:$0xf]
  %v313 = vld [vmem:[#allocation2 + $0x24] sm:$0xf]
  %v314 = vld [vmem:[#allocation2 + $0x28] sm:$0x1]
  %s315 = scalar_lea.vmem %s5, 8
  %v316 = vld [vmem:[%s315] sm:$0xf]
  %v317 = vld [vmem:[%s315 + $0x4] sm:$0xf]
  %v329 = vunpack.c.l.b16 %v304
  %v330 = vunpack.c.l.b16 %v305
  %v331 = vunpack.c.l.b16 %v306
  %v332 = vunpack.c.l.b16 %v307
  %v333 = vunpack.c.l.b16 %v308
  %v334 = vunpack.c.l.b16 %v309
  %v335 = vunpack.c.l.b16 %v310
  %v336 = vunpack.c.l.b16 %v311
  %v337 = vunpack.c.l.b16 %v312
  %v338 = vunpack.c.l.b16 %v313
  %v339 = vunpack.c.l.b16 %v314
  %v340 = vpack.c.b16 %v330, %v329
  %v341 = vpack.c.b16 %v332, %v331
  %v342 = vpack.c.b16 %v334, %v333
  %v343 = vpack.c.b16 %v336, %v335
  %v344 = vpack.c.b16 %v338, %v337
  %v345 = vpack.c.b16 %v339, %v339
  %vm346 = vsmask.f32 7424
  %v348 = vshrl.u32 %v340, 16
  %v350 = vshll.u32 %v340, 16
  %v352 = vrot.slane %v350, 1
  %v353 = vor.u32 %v348, %v352
  %v355 = vshll.u32 %v341, 16
  %v357 = vrot.slane %v355, 1
  %v358 = vsel %vm346, %v353, %v357
  %v359 = vshrl.u32 %v341, 16
  %v361 = vor.u32 %v359, %v357
  %v363 = vshll.u32 %v342, 16
  %v365 = vrot.slane %v363, 1
  %v366 = vsel %vm346, %v361, %v365
  %v367 = vshrl.u32 %v342, 16
  %v369 = vor.u32 %v367, %v365
  %v371 = vshll.u32 %v343, 16
  %v373 = vrot.slane %v371, 1
  %v374 = vsel %vm346, %v369, %v373
  %v375 = vshrl.u32 %v343, 16
  %v377 = vor.u32 %v375, %v373
  %v379 = vshll.u32 %v344, 16
  %v381 = vrot.slane %v379, 1
  %v382 = vsel %vm346, %v377, %v381
  %v383 = vshrl.u32 %v344, 16
  %v385 = vor.u32 %v383, %v381
  %v387 = vshll.u32 %v345, 16
  %v389 = vrot.slane %v387, 1
  %v390 = vsel %vm346, %v385, %v389
  %v393 = vunpack.c.l.b16 %v316
  %v394 = vunpack.c.l.b16 %v317
  %v395 = vpack.c.b16 %v394, %v393
  %v398 = vsel %vm244, %v358, 0
  %v401 = vsel %vm244, %v366, 0
  %v404 = vsel %vm244, %v374, 0
  %v407 = vsel %vm244, %v382, 0
  %v410 = vsel %vm244, %v390, 0
  %412 = vmatpush.bf16.msra.mxu0 0
  %413 = vmatpush.bf16.msra.mxu0 0
  %414 = vmatpush.bf16.msra.mxu0 0
  %415 = vmatpush.bf16.msra.mxu0 0
  %416 = vmatpush.bf16.msra.mxu0 0
  %417 = vmatpush.bf16.msra.mxu0 0
  %418 = vmatpush.bf16.msra.mxu0 0
  %419 = vmatpush.bf16.msra.mxu0 %v395
  %420 = vmatmul.bf16.gmra.mxu0 %v398
  %v421 = vpop.f32.mrf.mxu0
  %v422 = vadd.f32 0.0, %v421
  %v423 = vpop.f32.mrf.mxu0
  %v424 = vadd.f32 0.0, %v423
  %425 = vmatmul.bf16.gmra.mxu0 %v401
  %v426 = vpop.f32.mrf.mxu0
  %v427 = vadd.f32 0.0, %v426
  %v428 = vpop.f32.mrf.mxu0
  %v429 = vadd.f32 0.0, %v428
  %430 = vmatmul.bf16.gmra.mxu0 %v404
  %v431 = vpop.f32.mrf.mxu0
  %v432 = vadd.f32 0.0, %v431
  %v433 = vpop.f32.mrf.mxu0
  %v434 = vadd.f32 0.0, %v433
  %435 = vmatmul.bf16.gmra.mxu0 %v407
  %v436 = vpop.f32.mrf.mxu0
  %v437 = vadd.f32 0.0, %v436
  %v438 = vpop.f32.mrf.mxu0
  %v439 = vadd.f32 0.0, %v438
  %440 = vmatmul.bf16.gmra.mxu0 %v410
  %v441 = vpop.f32.mrf.mxu0
  %v442 = vadd.f32 0.0, %v441
  %v443 = vpop.f32.mrf.mxu0
  %v444 = vadd.f32 0.0, %v443
  %445 = vdwg.mxu0
  %v446 = vld [vmem:[#allocation4] sm:$0xff]
  %v447 = vld [vmem:[#allocation4 + $0x8] sm:$0xff]
  %v448 = vld [vmem:[#allocation4 + $0x10] sm:$0xff]
  %v449 = vld [vmem:[#allocation4 + $0x18] sm:$0xff]
  %v450 = vld [vmem:[#allocation4 + $0x20] sm:$0xff]
  %v451 = vld [vmem:[#allocation4 + $0x28] sm:$0xff]
  %v452 = vld [vmem:[#allocation4 + $0x30] sm:$0xff]
  %v453 = vld [vmem:[#allocation4 + $0x38] sm:$0xff]
  %v454 = vld [vmem:[#allocation4 + $0x40] sm:$0xff]
  %v455 = vld [vmem:[#allocation4 + $0x48] sm:$0xff]
  %v456 = vadd.f32 %v446, %v422
  %v457 = vadd.f32 %v447, %v424
  %v458 = vadd.f32 %v448, %v427
  %v459 = vadd.f32 %v449, %v429
  %v460 = vadd.f32 %v450, %v432
  %v461 = vadd.f32 %v451, %v434
  %v462 = vadd.f32 %v452, %v437
  %v463 = vadd.f32 %v453, %v439
  %v464 = vadd.f32 %v454, %v442
  %v465 = vadd.f32 %v455, %v444
  %466 = vst [vmem:[#allocation4] sm:$0xff] %v456
  %467 = vst [vmem:[#allocation4 + $0x8] sm:$0xff] %v457
  %468 = vst [vmem:[#allocation4 + $0x10] sm:$0xff] %v458
  %469 = vst [vmem:[#allocation4 + $0x18] sm:$0xff] %v459
  %470 = vst [vmem:[#allocation4 + $0x20] sm:$0xff] %v460
  %471 = vst [vmem:[#allocation4 + $0x28] sm:$0xff] %v461
  %472 = vst [vmem:[#allocation4 + $0x30] sm:$0xff] %v462
  %473 = vst [vmem:[#allocation4 + $0x38] sm:$0xff] %v463
  %474 = vst [vmem:[#allocation4 + $0x40] sm:$0xff] %v464
  %475 = vst [vmem:[#allocation4 + $0x48] sm:$0xff] %v465
  %v476 = vld [vmem:[#allocation2 + $0x4] sm:$0xe]
  %v477 = vld [vmem:[#allocation2 + $0x8] sm:$0xf]
  %v478 = vld [vmem:[#allocation2 + $0xc] sm:$0xf]
  %v479 = vld [vmem:[#allocation2 + $0x10] sm:$0xf]
  %v480 = vld [vmem:[#allocation2 + $0x14] sm:$0xf]
  %v481 = vld [vmem:[#allocation2 + $0x18] sm:$0xf]
  %v482 = vld [vmem:[#allocation2 + $0x1c] sm:$0xf]
  %v483 = vld [vmem:[#allocation2 + $0x20] sm:$0xf]
  %v484 = vld [vmem:[#allocation2 + $0x24] sm:$0xf]
  %v485 = vld [vmem:[#allocation2 + $0x28] sm:$0xf]
  %v486 = vld [vmem:[#allocation2 + $0x2c] sm:$0x1]
  %s487 = scalar_lea.vmem %s5, 16
  %v488 = vld [vmem:[%s487] sm:$0xf]
  %v489 = vld [vmem:[%s487 + $0x4] sm:$0xf]
  %v501 = vunpack.c.l.b16 %v476
  %v502 = vunpack.c.l.b16 %v477
  %v503 = vunpack.c.l.b16 %v478
  %v504 = vunpack.c.l.b16 %v479
  %v505 = vunpack.c.l.b16 %v480
  %v506 = vunpack.c.l.b16 %v481
  %v507 = vunpack.c.l.b16 %v482
  %v508 = vunpack.c.l.b16 %v483
  %v509 = vunpack.c.l.b16 %v484
  %v510 = vunpack.c.l.b16 %v485
  %v511 = vunpack.c.l.b16 %v486
  %v512 = vpack.c.b16 %v502, %v501
  %v513 = vpack.c.b16 %v504, %v503
  %v514 = vpack.c.b16 %v506, %v505
  %v515 = vpack.c.b16 %v508, %v507
  %v516 = vpack.c.b16 %v510, %v509
  %v517 = vpack.c.b16 %v511, %v511
  %vm518 = vcmask 1046528
  %v519 = vrot.slane %v512, 1
  %v520 = vrot.slane %v513, 1
  %v521 = vsel %vm518, %v519, %v520
  %v522 = vrot.slane %v514, 1
  %v523 = vsel %vm518, %v520, %v522
  %v524 = vrot.slane %v515, 1
  %v525 = vsel %vm518, %v522, %v524
  %v526 = vrot.slane %v516, 1
  %v527 = vsel %vm518, %v524, %v526
  %v528 = vrot.slane %v517, 1
  %v529 = vsel %vm518, %v526, %v528
  %v532 = vunpack.c.l.b16 %v488
  %v533 = vunpack.c.l.b16 %v489
  %v534 = vpack.c.b16 %v533, %v532
  %v537 = vsel %vm244, %v521, 0
  %v540 = vsel %vm244, %v523, 0
  %v543 = vsel %vm244, %v525, 0
  %v546 = vsel %vm244, %v527, 0
  %v549 = vsel %vm244, %v529, 0
  %551 = vmatpush.bf16.msra.mxu0 0
  %552 = vmatpush.bf16.msra.mxu0 0
  %553 = vmatpush.bf16.msra.mxu0 0
  %554 = vmatpush.bf16.msra.mxu0 0
  %555 = vmatpush.bf16.msra.mxu0 0
  %556 = vmatpush.bf16.msra.mxu0 0
  %557 = vmatpush.bf16.msra.mxu0 0
  %558 = vmatpush.bf16.msra.mxu0 %v534
  %559 = vmatmul.bf16.gmra.mxu0 %v537
  %v560 = vpop.f32.mrf.mxu0
  %v561 = vadd.f32 0.0, %v560
  %v562 = vpop.f32.mrf.mxu0
  %v563 = vadd.f32 0.0, %v562
  %564 = vmatmul.bf16.gmra.mxu0 %v540
  %v565 = vpop.f32.mrf.mxu0
  %v566 = vadd.f32 0.0, %v565
  %v567 = vpop.f32.mrf.mxu0
  %v568 = vadd.f32 0.0, %v567
  %569 = vmatmul.bf16.gmra.mxu0 %v543
  %v570 = vpop.f32.mrf.mxu0
  %v571 = vadd.f32 0.0, %v570
  %v572 = vpop.f32.mrf.mxu0
  %v573 = vadd.f32 0.0, %v572
  %574 = vmatmul.bf16.gmra.mxu0 %v546
  %v575 = vpop.f32.mrf.mxu0
  %v576 = vadd.f32 0.0, %v575
  %v577 = vpop.f32.mrf.mxu0
  %v578 = vadd.f32 0.0, %v577
  %579 = vmatmul.bf16.gmra.mxu0 %v549
  %v580 = vpop.f32.mrf.mxu0
  %v581 = vadd.f32 0.0, %v580
  %v582 = vpop.f32.mrf.mxu0
  %v583 = vadd.f32 0.0, %v582
  %584 = vdwg.mxu0
  %v585 = vld [vmem:[#allocation4] sm:$0xff]
  %v586 = vld [vmem:[#allocation4 + $0x8] sm:$0xff]
  %v587 = vld [vmem:[#allocation4 + $0x10] sm:$0xff]
  %v588 = vld [vmem:[#allocation4 + $0x18] sm:$0xff]
  %v589 = vld [vmem:[#allocation4 + $0x20] sm:$0xff]
  %v590 = vld [vmem:[#allocation4 + $0x28] sm:$0xff]
  %v591 = vld [vmem:[#allocation4 + $0x30] sm:$0xff]
  %v592 = vld [vmem:[#allocation4 + $0x38] sm:$0xff]
  %v593 = vld [vmem:[#allocation4 + $0x40] sm:$0xff]
  %v594 = vld [vmem:[#allocation4 + $0x48] sm:$0xff]
  %v595 = vadd.f32 %v585, %v561
  %v596 = vadd.f32 %v586, %v563
  %v597 = vadd.f32 %v587, %v566
  %v598 = vadd.f32 %v588, %v568
  %v599 = vadd.f32 %v589, %v571
  %v600 = vadd.f32 %v590, %v573
  %v601 = vadd.f32 %v591, %v576
  %v602 = vadd.f32 %v592, %v578
  %v603 = vadd.f32 %v593, %v581
  %v604 = vadd.f32 %v594, %v583
  %605 = vst [vmem:[#allocation4] sm:$0xff] %v595
  %606 = vst [vmem:[#allocation4 + $0x8] sm:$0xff] %v596
  %607 = vst [vmem:[#allocation4 + $0x10] sm:$0xff] %v597
  %608 = vst [vmem:[#allocation4 + $0x18] sm:$0xff] %v598
  %609 = vst [vmem:[#allocation4 + $0x20] sm:$0xff] %v599
  %610 = vst [vmem:[#allocation4 + $0x28] sm:$0xff] %v600
  %611 = vst [vmem:[#allocation4 + $0x30] sm:$0xff] %v601
  %612 = vst [vmem:[#allocation4 + $0x38] sm:$0xff] %v602
  %613 = vst [vmem:[#allocation4 + $0x40] sm:$0xff] %v603
  %614 = vst [vmem:[#allocation4 + $0x48] sm:$0xff] %v604
  %v615 = vld [vmem:[#allocation2 + $0x4] sm:$0xe]
  %v616 = vld [vmem:[#allocation2 + $0x8] sm:$0xf]
  %v617 = vld [vmem:[#allocation2 + $0xc] sm:$0xf]
  %v618 = vld [vmem:[#allocation2 + $0x10] sm:$0xf]
  %v619 = vld [vmem:[#allocation2 + $0x14] sm:$0xf]
  %v620 = vld [vmem:[#allocation2 + $0x18] sm:$0xf]
  %v621 = vld [vmem:[#allocation2 + $0x1c] sm:$0xf]
  %v622 = vld [vmem:[#allocation2 + $0x20] sm:$0xf]
  %v623 = vld [vmem:[#allocation2 + $0x24] sm:$0xf]
  %v624 = vld [vmem:[#allocation2 + $0x28] sm:$0xf]
  %v625 = vld [vmem:[#allocation2 + $0x2c] sm:$0x3]
  %s626 = scalar_lea.vmem %s5, 24
  %v627 = vld [vmem:[%s626] sm:$0xf]
  %v628 = vld [vmem:[%s626 + $0x4] sm:$0xf]
  %v640 = vunpack.c.l.b16 %v615
  %v641 = vunpack.c.l.b16 %v616
  %v642 = vunpack.c.l.b16 %v617
  %v643 = vunpack.c.l.b16 %v618
  %v644 = vunpack.c.l.b16 %v619
  %v645 = vunpack.c.l.b16 %v620
  %v646 = vunpack.c.l.b16 %v621
  %v647 = vunpack.c.l.b16 %v622
  %v648 = vunpack.c.l.b16 %v623
  %v649 = vunpack.c.l.b16 %v624
  %v650 = vunpack.c.l.b16 %v625
  %v651 = vpack.c.b16 %v641, %v640
  %v652 = vpack.c.b16 %v643, %v642
  %v653 = vpack.c.b16 %v645, %v644
  %v654 = vpack.c.b16 %v647, %v646
  %v655 = vpack.c.b16 %v649, %v648
  %v656 = vpack.c.b16 %v650, %v650
  %vm657 = vsmask.f32 6400
  %v659 = vshrl.u32 %v651, 16
  %v661 = vrot.slane %v659, 1
  %v662 = vshll.u32 %v651, 16
  %v664 = vrot.slane %v662, 2
  %v665 = vor.u32 %v661, %v664
  %v667 = vshrl.u32 %v652, 16
  %v669 = vrot.slane %v667, 1
  %v670 = vshll.u32 %v652, 16
  %v672 = vrot.slane %v670, 2
  %v673 = vor.u32 %v669, %v672
  %v674 = vsel %vm657, %v665, %v673
  %v676 = vshrl.u32 %v653, 16
  %v678 = vrot.slane %v676, 1
  %v679 = vshll.u32 %v653, 16
  %v681 = vrot.slane %v679, 2
  %v682 = vor.u32 %v678, %v681
  %v683 = vsel %vm657, %v673, %v682
  %v685 = vshrl.u32 %v654, 16
  %v687 = vrot.slane %v685, 1
  %v688 = vshll.u32 %v654, 16
  %v690 = vrot.slane %v688, 2
  %v691 = vor.u32 %v687, %v690
  %v692 = vsel %vm657, %v682, %v691
  %v694 = vshrl.u32 %v655, 16
  %v696 = vrot.slane %v694, 1
  %v697 = vshll.u32 %v655, 16
  %v699 = vrot.slane %v697, 2
  %v700 = vor.u32 %v696, %v699
  %v701 = vsel %vm657, %v691, %v700
  %v703 = vshrl.u32 %v656, 16
  %v705 = vrot.slane %v703, 1
  %v706 = vshll.u32 %v656, 16
  %v708 = vrot.slane %v706, 2
  %v709 = vor.u32 %v705, %v708
  %v710 = vsel %vm657, %v700, %v709
  %v713 = vunpack.c.l.b16 %v627
  %v714 = vunpack.c.l.b16 %v628
  %v715 = vpack.c.b16 %v714, %v713
  %v718 = vsel %vm244, %v674, 0
  %v721 = vsel %vm244, %v683, 0
  %v724 = vsel %vm244, %v692, 0
  %v727 = vsel %vm244, %v701, 0
  %v730 = vsel %vm244, %v710, 0
  %732 = vmatpush.bf16.msra.mxu0 0
  %733 = vmatpush.bf16.msra.mxu0 0
  %734 = vmatpush.bf16.msra.mxu0 0
  %735 = vmatpush.bf16.msra.mxu0 0
  %736 = vmatpush.bf16.msra.mxu0 0
  %737 = vmatpush.bf16.msra.mxu0 0
  %738 = vmatpush.bf16.msra.mxu0 0
  %739 = vmatpush.bf16.msra.mxu0 %v715
  %740 = vmatmul.bf16.gmra.mxu0 %v718
  %v741 = vpop.f32.mrf.mxu0
  %v742 = vadd.f32 0.0, %v741
  %v743 = vpop.f32.mrf.mxu0
  %v744 = vadd.f32 0.0, %v743
  %745 = vmatmul.bf16.gmra.mxu0 %v721
  %v746 = vpop.f32.mrf.mxu0
  %v747 = vadd.f32 0.0, %v746
  %v748 = vpop.f32.mrf.mxu0
  %v749 = vadd.f32 0.0, %v748
  %750 = vmatmul.bf16.gmra.mxu0 %v724
  %v751 = vpop.f32.mrf.mxu0
  %v752 = vadd.f32 0.0, %v751
  %v753 = vpop.f32.mrf.mxu0
  %v754 = vadd.f32 0.0, %v753
  %755 = vmatmul.bf16.gmra.mxu0 %v727
  %v756 = vpop.f32.mrf.mxu0
  %v757 = vadd.f32 0.0, %v756
  %v758 = vpop.f32.mrf.mxu0
  %v759 = vadd.f32 0.0, %v758
  %760 = vmatmul.bf16.gmra.mxu0 %v730
  %v761 = vpop.f32.mrf.mxu0
  %v762 = vadd.f32 0.0, %v761
  %v763 = vpop.f32.mrf.mxu0
  %v764 = vadd.f32 0.0, %v763
  %765 = vdwg.mxu0
  %v766 = vld [vmem:[#allocation4] sm:$0xff]
  %v767 = vld [vmem:[#allocation4 + $0x8] sm:$0xff]
  %v768 = vld [vmem:[#allocation4 + $0x10] sm:$0xff]
  %v769 = vld [vmem:[#allocation4 + $0x18] sm:$0xff]
  %v770 = vld [vmem:[#allocation4 + $0x20] sm:$0xff]
  %v771 = vld [vmem:[#allocation4 + $0x28] sm:$0xff]
  %v772 = vld [vmem:[#allocation4 + $0x30] sm:$0xff]
  %v773 = vld [vmem:[#allocation4 + $0x38] sm:$0xff]
  %v774 = vld [vmem:[#allocation4 + $0x40] sm:$0xff]
  %v775 = vld [vmem:[#allocation4 + $0x48] sm:$0xff]
  %v776 = vadd.f32 %v766, %v742
  %v777 = vadd.f32 %v767, %v744
  %v778 = vadd.f32 %v768, %v747
  %v779 = vadd.f32 %v769, %v749
  %v780 = vadd.f32 %v770, %v752
  %v781 = vadd.f32 %v771, %v754
  %v782 = vadd.f32 %v772, %v757
  %v783 = vadd.f32 %v773, %v759
  %v784 = vadd.f32 %v774, %v762
  %v785 = vadd.f32 %v775, %v764
  %786 = vst [vmem:[#allocation4] sm:$0xff] %v776
  %787 = vst [vmem:[#allocation4 + $0x8] sm:$0xff] %v777
  %788 = vst [vmem:[#allocation4 + $0x10] sm:$0xff] %v778
  %789 = vst [vmem:[#allocation4 + $0x18] sm:$0xff] %v779
  %790 = vst [vmem:[#allocation4 + $0x20] sm:$0xff] %v780
  %791 = vst [vmem:[#allocation4 + $0x28] sm:$0xff] %v781
  %792 = vst [vmem:[#allocation4 + $0x30] sm:$0xff] %v782
  %793 = vst [vmem:[#allocation4 + $0x38] sm:$0xff] %v783
  %794 = vst [vmem:[#allocation4 + $0x40] sm:$0xff] %v784
  %795 = vst [vmem:[#allocation4 + $0x48] sm:$0xff] %v785
  %v796 = vld [vmem:[#allocation4] sm:$0xff]
  %v797 = vld [vmem:[#allocation4 + $0x8] sm:$0xff]
  %v798 = vld [vmem:[#allocation4 + $0x10] sm:$0xff]
  %v799 = vld [vmem:[#allocation4 + $0x18] sm:$0xff]
  %v800 = vld [vmem:[#allocation4 + $0x20] sm:$0xff]
  %v801 = vld [vmem:[#allocation4 + $0x28] sm:$0xff]
  %v802 = vld [vmem:[#allocation4 + $0x30] sm:$0xff]
  %v803 = vld [vmem:[#allocation4 + $0x38] sm:$0xff]
  %v804 = vld [vmem:[#allocation4 + $0x40] sm:$0xff]
  %v805 = vld [vmem:[#allocation4 + $0x48] sm:$0xff]
  %v806 = vld [vmem:[%s6] sm:$0x1]
  %v808 = vperm.slane %v806, 0
  %v810 = vmul.f32 %v796, %v808
  %v811 = vmul.f32 %v797, %v808
  %v812 = vmul.f32 %v798, %v808
  %v813 = vmul.f32 %v799, %v808
  %v814 = vmul.f32 %v800, %v808
  %v815 = vmul.f32 %v801, %v808
  %v816 = vmul.f32 %v802, %v808
  %v817 = vmul.f32 %v803, %v808
  %v818 = vmul.f32 %v804, %v808
  %v819 = vmul.f32 %v805, %v808
  %v820 = vld [vmem:[%s7] sm:$0x1]
  %v822 = vperm.slane %v820, 0
  %v824 = vadd.f32 %v810, %v822
  %v825 = vadd.f32 %v811, %v822
  %v826 = vadd.f32 %v812, %v822
  %v827 = vadd.f32 %v813, %v822
  %v828 = vadd.f32 %v814, %v822
  %v829 = vadd.f32 %v815, %v822
  %v830 = vadd.f32 %v816, %v822
  %v831 = vadd.f32 %v817, %v822
  %v832 = vadd.f32 %v818, %v822
  %v833 = vadd.f32 %v819, %v822
  %v834 = vmax.f32 %v824, 0.0
  %v835 = vmax.f32 %v825, 0.0
  %v836 = vmax.f32 %v826, 0.0
  %v837 = vmax.f32 %v827, 0.0
  %v838 = vmax.f32 %v828, 0.0
  %v839 = vmax.f32 %v829, 0.0
  %v840 = vmax.f32 %v830, 0.0
  %v841 = vmax.f32 %v831, 0.0
  %v842 = vmax.f32 %v832, 0.0
  %v843 = vmax.f32 %v833, 0.0
  %v844 = vld [vmem:[%s2] sm:$0xff]
  %v845 = vld [vmem:[%s2 + $0x8] sm:$0xff]
  %v846 = vld [vmem:[%s2 + $0x10] sm:$0xff]
  %v847 = vld [vmem:[%s2 + $0x18] sm:$0xff]
  %v848 = vld [vmem:[%s2 + $0x20] sm:$0xff]
  %v849 = vld [vmem:[%s2 + $0x28] sm:$0xff]
  %v850 = vld [vmem:[%s2 + $0x30] sm:$0xff]
  %v851 = vld [vmem:[%s2 + $0x38] sm:$0xff]
  %v852 = vld [vmem:[%s2 + $0x40] sm:$0xff]
  %v853 = vld [vmem:[%s2 + $0x48] sm:$0xff]
  %855 = vset.pattern.permute.xlu0 0
  %856 = vperm.xlu0 %855, %v844
  %v857 = vpop.permute.xlu0 %856
  %860 = vset.pattern.permute.xlu0 0
  %861 = vperm.xlu0 %860, %v845
  %v862 = vpop.permute.xlu0 %861
  %865 = vset.pattern.permute.xlu0 0
  %866 = vperm.xlu0 %865, %v846
  %v867 = vpop.permute.xlu0 %866
  %870 = vset.pattern.permute.xlu0 0
  %871 = vperm.xlu0 %870, %v847
  %v872 = vpop.permute.xlu0 %871
  %875 = vset.pattern.permute.xlu0 0
  %876 = vperm.xlu0 %875, %v848
  %v877 = vpop.permute.xlu0 %876
  %880 = vset.pattern.permute.xlu0 0
  %881 = vperm.xlu0 %880, %v849
  %v882 = vpop.permute.xlu0 %881
  %885 = vset.pattern.permute.xlu0 0
  %886 = vperm.xlu0 %885, %v850
  %v887 = vpop.permute.xlu0 %886
  %890 = vset.pattern.permute.xlu0 0
  %891 = vperm.xlu0 %890, %v851
  %v892 = vpop.permute.xlu0 %891
  %895 = vset.pattern.permute.xlu0 0
  %896 = vperm.xlu0 %895, %v852
  %v897 = vpop.permute.xlu0 %896
  %900 = vset.pattern.permute.xlu0 0
  %901 = vperm.xlu0 %900, %v853
  %v902 = vpop.permute.xlu0 %901
  %v904 = vmul.f32 %v834, %v857
  %v905 = vmul.f32 %v835, %v862
  %v906 = vmul.f32 %v836, %v867
  %v907 = vmul.f32 %v837, %v872
  %v908 = vmul.f32 %v838, %v877
  %v909 = vmul.f32 %v839, %v882
  %v910 = vmul.f32 %v840, %v887
  %v911 = vmul.f32 %v841, %v892
  %v912 = vmul.f32 %v842, %v897
  %v913 = vmul.f32 %v843, %v902
  %914 = vst [vmem:[#allocation3] sm:$0xf] 0
  %vm915 = vcmask 1041408
  %vm916 = vsmask.f32 1280
  %vm917 = vmand %vm915, %vm916
  %v918 = vld [vmem:[#allocation3 + $0x4] sm:$0x3]
  %v919 = vsel %vm917, 0, %v918
  %920 = vst [vmem:[#allocation3 + $0x4] sm:$0x3] %v919
  %vm921 = vcmask 1043457
  %vm922 = vsmask.f32 7942
  %vm923 = vmand %vm921, %vm922
  %v924 = vld [vmem:[#allocation3 + $0x2c] sm:$0xe]
  %v925 = vsel %vm923, 0, %v924
  %926 = vst [vmem:[#allocation3 + $0x2c] sm:$0xe] %v925
  %927 = vst [vmem:[#allocation3 + $0x30] sm:$0xf] 0
  %v928 = vpack.c.bf16 %v904, %v904
  %v929 = vpack.c.bf16 %v905, %v905
  %v930 = vpack.c.bf16 %v906, %v906
  %v931 = vpack.c.bf16 %v907, %v907
  %v932 = vpack.c.bf16 %v908, %v908
  %v933 = vpack.c.bf16 %v909, %v909
  %v934 = vpack.c.bf16 %v910, %v910
  %v935 = vpack.c.bf16 %v911, %v911
  %v936 = vpack.c.bf16 %v912, %v912
  %v937 = vpack.c.bf16 %v913, %v913
  %vm938 = vsmask.f32 5392
  %vm939 = vmor %vm916, %vm938
  %v941 = vshrl.u32 %v928, 16
  %v943 = vrot.slane %v941, 6
  %v944 = vshll.u32 %v928, 16
  %v946 = vrot.slane %v944, 7
  %v947 = vor.u32 %v943, %v946
  %v948 = vrot.slane %v947, 4
  %v950 = vshrl.u32 %v929, 16
  %v952 = vrot.slane %v950, 6
  %v953 = vshll.u32 %v929, 16
  %v955 = vrot.slane %v953, 7
  %v956 = vor.u32 %v952, %v955
  %v957 = vsel %vm939, %v948, %v956
  %v958 = vrot.slane %v956, 4
  %v960 = vshrl.u32 %v930, 16
  %v962 = vrot.slane %v960, 6
  %v963 = vshll.u32 %v930, 16
  %v965 = vrot.slane %v963, 7
  %v966 = vor.u32 %v962, %v965
  %v967 = vsel %vm939, %v958, %v966
  %v968 = vrot.slane %v966, 4
  %v970 = vshrl.u32 %v931, 16
  %v972 = vrot.slane %v970, 6
  %v973 = vshll.u32 %v931, 16
  %v975 = vrot.slane %v973, 7
  %v976 = vor.u32 %v972, %v975
  %v977 = vsel %vm939, %v968, %v976
  %v978 = vrot.slane %v976, 4
  %v980 = vshrl.u32 %v932, 16
  %v982 = vrot.slane %v980, 6
  %v983 = vshll.u32 %v932, 16
  %v985 = vrot.slane %v983, 7
  %v986 = vor.u32 %v982, %v985
  %v987 = vsel %vm939, %v978, %v986
  %v988 = vrot.slane %v986, 4
  %v990 = vshrl.u32 %v933, 16
  %v992 = vrot.slane %v990, 6
  %v993 = vshll.u32 %v933, 16
  %v995 = vrot.slane %v993, 7
  %v996 = vor.u32 %v992, %v995
  %v997 = vsel %vm939, %v988, %v996
  %v998 = vrot.slane %v996, 4
  %v1000 = vshrl.u32 %v934, 16
  %v1002 = vrot.slane %v1000, 6
  %v1003 = vshll.u32 %v934, 16
  %v1005 = vrot.slane %v1003, 7
  %v1006 = vor.u32 %v1002, %v1005
  %v1007 = vsel %vm939, %v998, %v1006
  %v1008 = vrot.slane %v1006, 4
  %v1010 = vshrl.u32 %v935, 16
  %v1012 = vrot.slane %v1010, 6
  %v1013 = vshll.u32 %v935, 16
  %v1015 = vrot.slane %v1013, 7
  %v1016 = vor.u32 %v1012, %v1015
  %v1017 = vsel %vm939, %v1008, %v1016
  %v1018 = vrot.slane %v1016, 4
  %v1020 = vshrl.u32 %v936, 16
  %v1022 = vrot.slane %v1020, 6
  %v1023 = vshll.u32 %v936, 16
  %v1025 = vrot.slane %v1023, 7
  %v1026 = vor.u32 %v1022, %v1025
  %v1027 = vsel %vm939, %v1018, %v1026
  %v1028 = vrot.slane %v1026, 4
  %v1030 = vshrl.u32 %v937, 16
  %v1032 = vrot.slane %v1030, 6
  %v1033 = vshll.u32 %v937, 16
  %v1035 = vrot.slane %v1033, 7
  %v1036 = vor.u32 %v1032, %v1035
  %v1037 = vsel %vm939, %v1028, %v1036
  %v1038 = vrot.slane %v1036, 4
  %v1050 = vld [vmem:[#allocation3 + $0x4] sm:$0xe]
  %v1051 = vsel %vm923, %v947, %v1050
  %1052 = vst [vmem:[#allocation3 + $0x4] sm:$0xe] %v1051
  %1053 = vst [vmem:[#allocation3 + $0x8] sm:$0xf] %v957
  %1054 = vst [vmem:[#allocation3 + $0xc] sm:$0xf] %v967
  %1055 = vst [vmem:[#allocation3 + $0x10] sm:$0xf] %v977
  %1056 = vst [vmem:[#allocation3 + $0x14] sm:$0xf] %v987
  %1057 = vst [vmem:[#allocation3 + $0x18] sm:$0xf] %v997
  %1058 = vst [vmem:[#allocation3 + $0x1c] sm:$0xf] %v1007
  %1059 = vst [vmem:[#allocation3 + $0x20] sm:$0xf] %v1017
  %1060 = vst [vmem:[#allocation3 + $0x24] sm:$0xf] %v1027
  %1061 = vst [vmem:[#allocation3 + $0x28] sm:$0xf] %v1037
  %v1062 = vld [vmem:[#allocation3 + $0x2c] sm:$0x3]
  %v1063 = vsel %vm917, %v1038, %v1062
  %1064 = vst [vmem:[#allocation3 + $0x2c] sm:$0x3] %v1063
  %v1065 = vld [vmem:[#allocation2 + $0x4] sm:$0xe]
  %v1066 = vld [vmem:[#allocation2 + $0x8] sm:$0xf]
  %v1067 = vld [vmem:[#allocation2 + $0xc] sm:$0xf]
  %v1068 = vld [vmem:[#allocation2 + $0x10] sm:$0xf]
  %v1069 = vld [vmem:[#allocation2 + $0x14] sm:$0xf]
  %v1070 = vld [vmem:[#allocation2 + $0x18] sm:$0xf]
  %v1071 = vld [vmem:[#allocation2 + $0x1c] sm:$0xf]
  %v1072 = vld [vmem:[#allocation2 + $0x20] sm:$0xf]
  %v1073 = vld [vmem:[#allocation2 + $0x24] sm:$0xf]
  %v1074 = vld [vmem:[#allocation2 + $0x28] sm:$0xf]
  %v1075 = vld [vmem:[#allocation2 + $0x2c] sm:$0x3]
  %v1076 = vld [vmem:[%s9] sm:$0xf]
  %v1077 = vld [vmem:[%s9 + $0x4] sm:$0xf]
  %v1089 = vunpack.c.l.b16 %v1065
  %v1090 = vunpack.c.l.b16 %v1066
  %v1091 = vunpack.c.l.b16 %v1067
  %v1092 = vunpack.c.l.b16 %v1068
  %v1093 = vunpack.c.l.b16 %v1069
  %v1094 = vunpack.c.l.b16 %v1070
  %v1095 = vunpack.c.l.b16 %v1071
  %v1096 = vunpack.c.l.b16 %v1072
  %v1097 = vunpack.c.l.b16 %v1073
  %v1098 = vunpack.c.l.b16 %v1074
  %v1099 = vunpack.c.l.b16 %v1075
  %v1100 = vpack.c.b16 %v1090, %v1089
  %v1101 = vpack.c.b16 %v1092, %v1091
  %v1102 = vpack.c.b16 %v1094, %v1093
  %v1103 = vpack.c.b16 %v1096, %v1095
  %v1104 = vpack.c.b16 %v1098, %v1097
  %v1105 = vpack.c.b16 %v1099, %v1099
  %v1107 = vshrl.u32 %v1100, 16
  %v1109 = vrot.slane %v1107, 1
  %v1110 = vshll.u32 %v1100, 16
  %v1112 = vrot.slane %v1110, 2
  %v1113 = vor.u32 %v1109, %v1112
  %v1115 = vshrl.u32 %v1101, 16
  %v1117 = vrot.slane %v1115, 1
  %v1118 = vshll.u32 %v1101, 16
  %v1120 = vrot.slane %v1118, 2
  %v1121 = vor.u32 %v1117, %v1120
  %v1122 = vsel %vm657, %v1113, %v1121
  %v1124 = vshrl.u32 %v1102, 16
  %v1126 = vrot.slane %v1124, 1
  %v1127 = vshll.u32 %v1102, 16
  %v1129 = vrot.slane %v1127, 2
  %v1130 = vor.u32 %v1126, %v1129
  %v1131 = vsel %vm657, %v1121, %v1130
  %v1133 = vshrl.u32 %v1103, 16
  %v1135 = vrot.slane %v1133, 1
  %v1136 = vshll.u32 %v1103, 16
  %v1138 = vrot.slane %v1136, 2
  %v1139 = vor.u32 %v1135, %v1138
  %v1140 = vsel %vm657, %v1130, %v1139
  %v1142 = vshrl.u32 %v1104, 16
  %v1144 = vrot.slane %v1142, 1
  %v1145 = vshll.u32 %v1104, 16
  %v1147 = vrot.slane %v1145, 2
  %v1148 = vor.u32 %v1144, %v1147
  %v1149 = vsel %vm657, %v1139, %v1148
  %v1151 = vshrl.u32 %v1105, 16
  %v1153 = vrot.slane %v1151, 1
  %v1154 = vshll.u32 %v1105, 16
  %v1156 = vrot.slane %v1154, 2
  %v1157 = vor.u32 %v1153, %v1156
  %v1158 = vsel %vm657, %v1148, %v1157
  %v1161 = vunpack.c.l.b16 %v1076
  %v1162 = vunpack.c.l.b16 %v1077
  %v1163 = vpack.c.b16 %v1162, %v1161
  %v1166 = vsel %vm244, %v1122, 0
  %v1169 = vsel %vm244, %v1131, 0
  %v1172 = vsel %vm244, %v1140, 0
  %v1175 = vsel %vm244, %v1149, 0
  %v1178 = vsel %vm244, %v1158, 0
  %1180 = vmatpush.bf16.msra.mxu0 0
  %1181 = vmatpush.bf16.msra.mxu0 0
  %1182 = vmatpush.bf16.msra.mxu0 0
  %1183 = vmatpush.bf16.msra.mxu0 0
  %1184 = vmatpush.bf16.msra.mxu0 0
  %1185 = vmatpush.bf16.msra.mxu0 0
  %1186 = vmatpush.bf16.msra.mxu0 0
  %1187 = vmatpush.bf16.msra.mxu0 %v1163
  %1188 = vmatmul.bf16.gmra.mxu0 %v1166
  %v1189 = vpop.f32.mrf.mxu0
  %v1190 = vadd.f32 0.0, %v1189
  %v1191 = vpop.f32.mrf.mxu0
  %v1192 = vadd.f32 0.0, %v1191
  %1193 = vmatmul.bf16.gmra.mxu0 %v1169
  %v1194 = vpop.f32.mrf.mxu0
  %v1195 = vadd.f32 0.0, %v1194
  %v1196 = vpop.f32.mrf.mxu0
  %v1197 = vadd.f32 0.0, %v1196
  %1198 = vmatmul.bf16.gmra.mxu0 %v1172
  %v1199 = vpop.f32.mrf.mxu0
  %v1200 = vadd.f32 0.0, %v1199
  %v1201 = vpop.f32.mrf.mxu0
  %v1202 = vadd.f32 0.0, %v1201
  %1203 = vmatmul.bf16.gmra.mxu0 %v1175
  %v1204 = vpop.f32.mrf.mxu0
  %v1205 = vadd.f32 0.0, %v1204
  %v1206 = vpop.f32.mrf.mxu0
  %v1207 = vadd.f32 0.0, %v1206
  %1208 = vmatmul.bf16.gmra.mxu0 %v1178
  %v1209 = vpop.f32.mrf.mxu0
  %v1210 = vadd.f32 0.0, %v1209
  %v1211 = vpop.f32.mrf.mxu0
  %v1212 = vadd.f32 0.0, %v1211
  %1213 = vdwg.mxu0
  %1214 = vst [vmem:[#allocation4] sm:$0xff] %v1190
  %1215 = vst [vmem:[#allocation4 + $0x8] sm:$0xff] %v1192
  %1216 = vst [vmem:[#allocation4 + $0x10] sm:$0xff] %v1195
  %1217 = vst [vmem:[#allocation4 + $0x18] sm:$0xff] %v1197
  %1218 = vst [vmem:[#allocation4 + $0x20] sm:$0xff] %v1200
  %1219 = vst [vmem:[#allocation4 + $0x28] sm:$0xff] %v1202
  %1220 = vst [vmem:[#allocation4 + $0x30] sm:$0xff] %v1205
  %1221 = vst [vmem:[#allocation4 + $0x38] sm:$0xff] %v1207
  %1222 = vst [vmem:[#allocation4 + $0x40] sm:$0xff] %v1210
  %1223 = vst [vmem:[#allocation4 + $0x48] sm:$0xff] %v1212
  %v1224 = vld [vmem:[#allocation4] sm:$0xff]
  %v1225 = vld [vmem:[#allocation4 + $0x8] sm:$0xff]
  %v1226 = vld [vmem:[#allocation4 + $0x10] sm:$0xff]
  %v1227 = vld [vmem:[#allocation4 + $0x18] sm:$0xff]
  %v1228 = vld [vmem:[#allocation4 + $0x20] sm:$0xff]
  %v1229 = vld [vmem:[#allocation4 + $0x28] sm:$0xff]
  %v1230 = vld [vmem:[#allocation4 + $0x30] sm:$0xff]
  %v1231 = vld [vmem:[#allocation4 + $0x38] sm:$0xff]
  %v1232 = vld [vmem:[#allocation4 + $0x40] sm:$0xff]
  %v1233 = vld [vmem:[#allocation4 + $0x48] sm:$0xff]
  %v1234 = vld [vmem:[#allocation3] sm:$0xf]
  %v1235 = vld [vmem:[#allocation3 + $0x4] sm:$0xf]
  %v1236 = vld [vmem:[#allocation3 + $0x8] sm:$0xf]
  %v1237 = vld [vmem:[#allocation3 + $0xc] sm:$0xf]
  %v1238 = vld [vmem:[#allocation3 + $0x10] sm:$0xf]
  %v1239 = vld [vmem:[#allocation3 + $0x14] sm:$0xf]
  %v1240 = vld [vmem:[#allocation3 + $0x18] sm:$0xf]
  %v1241 = vld [vmem:[#allocation3 + $0x1c] sm:$0xf]
  %v1242 = vld [vmem:[#allocation3 + $0x20] sm:$0xf]
  %v1243 = vld [vmem:[#allocation3 + $0x24] sm:$0xf]
  %v1244 = vld [vmem:[%s8] sm:$0xf]
  %v1245 = vld [vmem:[%s8 + $0x4] sm:$0xf]
  %v1246 = vld [vmem:[%s8 + $0x8] sm:$0xf]
  %v1247 = vld [vmem:[%s8 + $0xc] sm:$0xf]
  %v1248 = vld [vmem:[%s8 + $0x10] sm:$0xf]
  %v1249 = vld [vmem:[%s8 + $0x14] sm:$0xf]
  %v1250 = vld [vmem:[%s8 + $0x18] sm:$0xf]
  %v1251 = vld [vmem:[%s8 + $0x1c] sm:$0xf]
  %v1252 = vld [vmem:[%s8 + $0x20] sm:$0xf]
  %v1253 = vld [vmem:[%s8 + $0x24] sm:$0xf]
  %v1254 = vld [vmem:[%s8 + $0x28] sm:$0xf]
  %v1255 = vld [vmem:[%s8 + $0x2c] sm:$0xf]
  %v1256 = vld [vmem:[%s8 + $0x30] sm:$0xf]
  %v1257 = vld [vmem:[%s8 + $0x34] sm:$0xf]
  %v1258 = vld [vmem:[%s8 + $0x38] sm:$0xf]
  %v1259 = vld [vmem:[%s8 + $0x3c] sm:$0xf]
  %v1270 = vunpack.c.l.b16 %v1234
  %v1271 = vunpack.c.l.b16 %v1235
  %v1272 = vunpack.c.l.b16 %v1236
  %v1273 = vunpack.c.l.b16 %v1237
  %v1274 = vunpack.c.l.b16 %v1238
  %v1275 = vunpack.c.l.b16 %v1239
  %v1276 = vunpack.c.l.b16 %v1240
  %v1277 = vunpack.c.l.b16 %v1241
  %v1278 = vunpack.c.l.b16 %v1242
  %v1279 = vunpack.c.l.b16 %v1243
  %v1280 = vpack.c.b16 %v1271, %v1270
  %v1281 = vpack.c.b16 %v1273, %v1272
  %v1282 = vpack.c.b16 %v1275, %v1274
  %v1283 = vpack.c.b16 %v1277, %v1276
  %v1284 = vpack.c.b16 %v1279, %v1278
  %v1306 = vunpack.c.l.b16 %v1244
  %v1307 = vunpack.c.l.b16 %v1245
  %v1308 = vunpack.c.l.b16 %v1246
  %v1309 = vunpack.c.l.b16 %v1247
  %v1310 = vunpack.c.l.b16 %v1248
  %v1311 = vunpack.c.l.b16 %v1249
  %v1312 = vunpack.c.l.b16 %v1250
  %v1313 = vunpack.c.l.b16 %v1251
  %v1314 = vunpack.c.l.b16 %v1252
  %v1315 = vunpack.c.l.b16 %v1253
  %v1316 = vunpack.c.l.b16 %v1254
  %v1317 = vunpack.c.l.b16 %v1255
  %v1318 = vunpack.c.l.b16 %v1256
  %v1319 = vunpack.c.l.b16 %v1257
  %v1320 = vunpack.c.l.b16 %v1258
  %v1321 = vunpack.c.l.b16 %v1259
  %v1322 = vpack.c.b16 %v1307, %v1306
  %v1323 = vpack.c.b16 %v1309, %v1308
  %v1324 = vpack.c.b16 %v1311, %v1310
  %v1325 = vpack.c.b16 %v1313, %v1312
  %v1326 = vpack.c.b16 %v1315, %v1314
  %v1327 = vpack.c.b16 %v1317, %v1316
  %v1328 = vpack.c.b16 %v1319, %v1318
  %v1329 = vpack.c.b16 %v1321, %v1320
  %1338 = vmatpush.bf16.msra.mxu0 %v1329
  %1339 = vmatpush.bf16.msra.mxu0 %v1328
  %1340 = vmatpush.bf16.msra.mxu0 %v1327
  %1341 = vmatpush.bf16.msra.mxu0 %v1326
  %1342 = vmatpush.bf16.msra.mxu0 %v1325
  %1343 = vmatpush.bf16.msra.mxu0 %v1324
  %1344 = vmatpush.bf16.msra.mxu0 %v1323
  %1345 = vmatpush.bf16.msra.mxu0 %v1322
  %1346 = vmatmul.bf16.gmra.mxu0 %v1280
  %v1347 = vpop.f32.mrf.mxu0
  %v1348 = vadd.f32 0.0, %v1347
  %v1349 = vpop.f32.mrf.mxu0
  %v1350 = vadd.f32 0.0, %v1349
  %1351 = vmatmul.bf16.gmra.mxu0 %v1281
  %v1352 = vpop.f32.mrf.mxu0
  %v1353 = vadd.f32 0.0, %v1352
  %v1354 = vpop.f32.mrf.mxu0
  %v1355 = vadd.f32 0.0, %v1354
  %1356 = vmatmul.bf16.gmra.mxu0 %v1282
  %v1357 = vpop.f32.mrf.mxu0
  %v1358 = vadd.f32 0.0, %v1357
  %v1359 = vpop.f32.mrf.mxu0
  %v1360 = vadd.f32 0.0, %v1359
  %1361 = vmatmul.bf16.gmra.mxu0 %v1283
  %v1362 = vpop.f32.mrf.mxu0
  %v1363 = vadd.f32 0.0, %v1362
  %v1364 = vpop.f32.mrf.mxu0
  %v1365 = vadd.f32 0.0, %v1364
  %1366 = vmatmul.bf16.gmra.mxu0 %v1284
  %v1367 = vpop.f32.mrf.mxu0
  %v1368 = vadd.f32 0.0, %v1367
  %v1369 = vpop.f32.mrf.mxu0
  %v1370 = vadd.f32 0.0, %v1369
  %1371 = vdwg.mxu0
  %v1372 = vadd.f32 %v1224, %v1348
  %v1373 = vadd.f32 %v1225, %v1350
  %v1374 = vadd.f32 %v1226, %v1353
  %v1375 = vadd.f32 %v1227, %v1355
  %v1376 = vadd.f32 %v1228, %v1358
  %v1377 = vadd.f32 %v1229, %v1360
  %v1378 = vadd.f32 %v1230, %v1363
  %v1379 = vadd.f32 %v1231, %v1365
  %v1380 = vadd.f32 %v1232, %v1368
  %v1381 = vadd.f32 %v1233, %v1370
  %1382 = vst [vmem:[#allocation4] sm:$0xff] %v1372
  %1383 = vst [vmem:[#allocation4 + $0x8] sm:$0xff] %v1373
  %1384 = vst [vmem:[#allocation4 + $0x10] sm:$0xff] %v1374
  %1385 = vst [vmem:[#allocation4 + $0x18] sm:$0xff] %v1375
  %1386 = vst [vmem:[#allocation4 + $0x20] sm:$0xff] %v1376
  %1387 = vst [vmem:[#allocation4 + $0x28] sm:$0xff] %v1377
  %1388 = vst [vmem:[#allocation4 + $0x30] sm:$0xff] %v1378
  %1389 = vst [vmem:[#allocation4 + $0x38] sm:$0xff] %v1379
  %1390 = vst [vmem:[#allocation4 + $0x40] sm:$0xff] %v1380
  %1391 = vst [vmem:[#allocation4 + $0x48] sm:$0xff] %v1381
  %v1392 = vld [vmem:[#allocation4] sm:$0xff]
  %v1393 = vld [vmem:[#allocation4 + $0x8] sm:$0xff]
  %v1394 = vld [vmem:[#allocation4 + $0x10] sm:$0xff]
  %v1395 = vld [vmem:[#allocation4 + $0x18] sm:$0xff]
  %v1396 = vld [vmem:[#allocation4 + $0x20] sm:$0xff]
  %v1397 = vld [vmem:[#allocation4 + $0x28] sm:$0xff]
  %v1398 = vld [vmem:[#allocation4 + $0x30] sm:$0xff]
  %v1399 = vld [vmem:[#allocation4 + $0x38] sm:$0xff]
  %v1400 = vld [vmem:[#allocation4 + $0x40] sm:$0xff]
  %v1401 = vld [vmem:[#allocation4 + $0x48] sm:$0xff]
  %v1402 = vld [vmem:[#allocation3] sm:$0xf]
  %v1403 = vld [vmem:[#allocation3 + $0x4] sm:$0xf]
  %v1404 = vld [vmem:[#allocation3 + $0x8] sm:$0xf]
  %v1405 = vld [vmem:[#allocation3 + $0xc] sm:$0xf]
  %v1406 = vld [vmem:[#allocation3 + $0x10] sm:$0xf]
  %v1407 = vld [vmem:[#allocation3 + $0x14] sm:$0xf]
  %v1408 = vld [vmem:[#allocation3 + $0x18] sm:$0xf]
  %v1409 = vld [vmem:[#allocation3 + $0x1c] sm:$0xf]
  %v1410 = vld [vmem:[#allocation3 + $0x20] sm:$0xf]
  %v1411 = vld [vmem:[#allocation3 + $0x24] sm:$0xf]
  %v1412 = vld [vmem:[#allocation3 + $0x28] sm:$0x1]
  %s1413 = scalar_lea.vmem %s8, 64
  %v1414 = vld [vmem:[%s1413] sm:$0xf]
  %v1415 = vld [vmem:[%s1413 + $0x4] sm:$0xf]
  %v1416 = vld [vmem:[%s1413 + $0x8] sm:$0xf]
  %v1417 = vld [vmem:[%s1413 + $0xc] sm:$0xf]
  %v1418 = vld [vmem:[%s1413 + $0x10] sm:$0xf]
  %v1419 = vld [vmem:[%s1413 + $0x14] sm:$0xf]
  %v1420 = vld [vmem:[%s1413 + $0x18] sm:$0xf]
  %v1421 = vld [vmem:[%s1413 + $0x1c] sm:$0xf]
  %v1422 = vld [vmem:[%s1413 + $0x20] sm:$0xf]
  %v1423 = vld [vmem:[%s1413 + $0x24] sm:$0xf]
  %v1424 = vld [vmem:[%s1413 + $0x28] sm:$0xf]
  %v1425 = vld [vmem:[%s1413 + $0x2c] sm:$0xf]
  %v1426 = vld [vmem:[%s1413 + $0x30] sm:$0xf]
  %v1427 = vld [vmem:[%s1413 + $0x34] sm:$0xf]
  %v1428 = vld [vmem:[%s1413 + $0x38] sm:$0xf]
  %v1429 = vld [vmem:[%s1413 + $0x3c] sm:$0xf]
  %v1441 = vunpack.c.l.b16 %v1402
  %v1442 = vunpack.c.l.b16 %v1403
  %v1443 = vunpack.c.l.b16 %v1404
  %v1444 = vunpack.c.l.b16 %v1405
  %v1445 = vunpack.c.l.b16 %v1406
  %v1446 = vunpack.c.l.b16 %v1407
  %v1447 = vunpack.c.l.b16 %v1408
  %v1448 = vunpack.c.l.b16 %v1409
  %v1449 = vunpack.c.l.b16 %v1410
  %v1450 = vunpack.c.l.b16 %v1411
  %v1451 = vunpack.c.l.b16 %v1412
  %v1452 = vpack.c.b16 %v1442, %v1441
  %v1453 = vpack.c.b16 %v1444, %v1443
  %v1454 = vpack.c.b16 %v1446, %v1445
  %v1455 = vpack.c.b16 %v1448, %v1447
  %v1456 = vpack.c.b16 %v1450, %v1449
  %v1457 = vpack.c.b16 %v1451, %v1451
  %v1459 = vshrl.u32 %v1452, 16
  %v1461 = vshll.u32 %v1452, 16
  %v1463 = vrot.slane %v1461, 1
  %v1464 = vor.u32 %v1459, %v1463
  %v1466 = vshll.u32 %v1453, 16
  %v1468 = vrot.slane %v1466, 1
  %v1469 = vsel %vm346, %v1464, %v1468
  %v1470 = vshrl.u32 %v1453, 16
  %v1472 = vor.u32 %v1470, %v1468
  %v1474 = vshll.u32 %v1454, 16
  %v1476 = vrot.slane %v1474, 1
  %v1477 = vsel %vm346, %v1472, %v1476
  %v1478 = vshrl.u32 %v1454, 16
  %v1480 = vor.u32 %v1478, %v1476
  %v1482 = vshll.u32 %v1455, 16
  %v1484 = vrot.slane %v1482, 1
  %v1485 = vsel %vm346, %v1480, %v1484
  %v1486 = vshrl.u32 %v1455, 16
  %v1488 = vor.u32 %v1486, %v1484
  %v1490 = vshll.u32 %v1456, 16
  %v1492 = vrot.slane %v1490, 1
  %v1493 = vsel %vm346, %v1488, %v1492
  %v1494 = vshrl.u32 %v1456, 16
  %v1496 = vor.u32 %v1494, %v1492
  %v1498 = vshll.u32 %v1457, 16
  %v1500 = vrot.slane %v1498, 1
  %v1501 = vsel %vm346, %v1496, %v1500
  %v1523 = vunpack.c.l.b16 %v1414
  %v1524 = vunpack.c.l.b16 %v1415
  %v1525 = vunpack.c.l.b16 %v1416
  %v1526 = vunpack.c.l.b16 %v1417
  %v1527 = vunpack.c.l.b16 %v1418
  %v1528 = vunpack.c.l.b16 %v1419
  %v1529 = vunpack.c.l.b16 %v1420
  %v1530 = vunpack.c.l.b16 %v1421
  %v1531 = vunpack.c.l.b16 %v1422
  %v1532 = vunpack.c.l.b16 %v1423
  %v1533 = vunpack.c.l.b16 %v1424
  %v1534 = vunpack.c.l.b16 %v1425
  %v1535 = vunpack.c.l.b16 %v1426
  %v1536 = vunpack.c.l.b16 %v1427
  %v1537 = vunpack.c.l.b16 %v1428
  %v1538 = vunpack.c.l.b16 %v1429
  %v1539 = vpack.c.b16 %v1524, %v1523
  %v1540 = vpack.c.b16 %v1526, %v1525
  %v1541 = vpack.c.b16 %v1528, %v1527
  %v1542 = vpack.c.b16 %v1530, %v1529
  %v1543 = vpack.c.b16 %v1532, %v1531
  %v1544 = vpack.c.b16 %v1534, %v1533
  %v1545 = vpack.c.b16 %v1536, %v1535
  %v1546 = vpack.c.b16 %v1538, %v1537
  %1555 = vmatpush.bf16.msra.mxu0 %v1546
  %1556 = vmatpush.bf16.msra.mxu0 %v1545
  %1557 = vmatpush.bf16.msra.mxu0 %v1544
  %1558 = vmatpush.bf16.msra.mxu0 %v1543
  %1559 = vmatpush.bf16.msra.mxu0 %v1542
  %1560 = vmatpush.bf16.msra.mxu0 %v1541
  %1561 = vmatpush.bf16.msra.mxu0 %v1540
  %1562 = vmatpush.bf16.msra.mxu0 %v1539
  %1563 = vmatmul.bf16.gmra.mxu0 %v1469
  %v1564 = vpop.f32.mrf.mxu0
  %v1565 = vadd.f32 0.0, %v1564
  %v1566 = vpop.f32.mrf.mxu0
  %v1567 = vadd.f32 0.0, %v1566
  %1568 = vmatmul.bf16.gmra.mxu0 %v1477
  %v1569 = vpop.f32.mrf.mxu0
  %v1570 = vadd.f32 0.0, %v1569
  %v1571 = vpop.f32.mrf.mxu0
  %v1572 = vadd.f32 0.0, %v1571
  %1573 = vmatmul.bf16.gmra.mxu0 %v1485
  %v1574 = vpop.f32.mrf.mxu0
  %v1575 = vadd.f32 0.0, %v1574
  %v1576 = vpop.f32.mrf.mxu0
  %v1577 = vadd.f32 0.0, %v1576
  %1578 = vmatmul.bf16.gmra.mxu0 %v1493
  %v1579 = vpop.f32.mrf.mxu0
  %v1580 = vadd.f32 0.0, %v1579
  %v1581 = vpop.f32.mrf.mxu0
  %v1582 = vadd.f32 0.0, %v1581
  %1583 = vmatmul.bf16.gmra.mxu0 %v1501
  %v1584 = vpop.f32.mrf.mxu0
  %v1585 = vadd.f32 0.0, %v1584
  %v1586 = vpop.f32.mrf.mxu0
  %v1587 = vadd.f32 0.0, %v1586
  %1588 = vdwg.mxu0
  %v1589 = vadd.f32 %v1392, %v1565
  %v1590 = vadd.f32 %v1393, %v1567
  %v1591 = vadd.f32 %v1394, %v1570
  %v1592 = vadd.f32 %v1395, %v1572
  %v1593 = vadd.f32 %v1396, %v1575
  %v1594 = vadd.f32 %v1397, %v1577
  %v1595 = vadd.f32 %v1398, %v1580
  %v1596 = vadd.f32 %v1399, %v1582
  %v1597 = vadd.f32 %v1400, %v1585
  %v1598 = vadd.f32 %v1401, %v1587
  %1599 = vst [vmem:[#allocation4] sm:$0xff] %v1589
  %1600 = vst [vmem:[#allocation4 + $0x8] sm:$0xff] %v1590
  %1601 = vst [vmem:[#allocation4 + $0x10] sm:$0xff] %v1591
  %1602 = vst [vmem:[#allocation4 + $0x18] sm:$0xff] %v1592
  %1603 = vst [vmem:[#allocation4 + $0x20] sm:$0xff] %v1593
  %1604 = vst [vmem:[#allocation4 + $0x28] sm:$0xff] %v1594
  %1605 = vst [vmem:[#allocation4 + $0x30] sm:$0xff] %v1595
  %1606 = vst [vmem:[#allocation4 + $0x38] sm:$0xff] %v1596
  %1607 = vst [vmem:[#allocation4 + $0x40] sm:$0xff] %v1597
  %1608 = vst [vmem:[#allocation4 + $0x48] sm:$0xff] %v1598
  %v1609 = vld [vmem:[#allocation4] sm:$0xff]
  %v1610 = vld [vmem:[#allocation4 + $0x8] sm:$0xff]
  %v1611 = vld [vmem:[#allocation4 + $0x10] sm:$0xff]
  %v1612 = vld [vmem:[#allocation4 + $0x18] sm:$0xff]
  %v1613 = vld [vmem:[#allocation4 + $0x20] sm:$0xff]
  %v1614 = vld [vmem:[#allocation4 + $0x28] sm:$0xff]
  %v1615 = vld [vmem:[#allocation4 + $0x30] sm:$0xff]
  %v1616 = vld [vmem:[#allocation4 + $0x38] sm:$0xff]
  %v1617 = vld [vmem:[#allocation4 + $0x40] sm:$0xff]
  %v1618 = vld [vmem:[#allocation4 + $0x48] sm:$0xff]
  %v1619 = vld [vmem:[#allocation3] sm:$0xe]
  %v1620 = vld [vmem:[#allocation3 + $0x4] sm:$0xf]
  %v1621 = vld [vmem:[#allocation3 + $0x8] sm:$0xf]
  %v1622 = vld [vmem:[#allocation3 + $0xc] sm:$0xf]
  %v1623 = vld [vmem:[#allocation3 + $0x10] sm:$0xf]
  %v1624 = vld [vmem:[#allocation3 + $0x14] sm:$0xf]
  %v1625 = vld [vmem:[#allocation3 + $0x18] sm:$0xf]
  %v1626 = vld [vmem:[#allocation3 + $0x1c] sm:$0xf]
  %v1627 = vld [vmem:[#allocation3 + $0x20] sm:$0xf]
  %v1628 = vld [vmem:[#allocation3 + $0x24] sm:$0xf]
  %v1629 = vld [vmem:[#allocation3 + $0x28] sm:$0x1]
  %s1630 = scalar_lea.vmem %s8, 128
  %v1631 = vld [vmem:[%s1630] sm:$0xf]
  %v1632 = vld [vmem:[%s1630 + $0x4] sm:$0xf]
  %v1633 = vld [vmem:[%s1630 + $0x8] sm:$0xf]
  %v1634 = vld [vmem:[%s1630 + $0xc] sm:$0xf]
  %v1635 = vld [vmem:[%s1630 + $0x10] sm:$0xf]
  %v1636 = vld [vmem:[%s1630 + $0x14] sm:$0xf]
  %v1637 = vld [vmem:[%s1630 + $0x18] sm:$0xf]
  %v1638 = vld [vmem:[%s1630 + $0x1c] sm:$0xf]
  %v1639 = vld [vmem:[%s1630 + $0x20] sm:$0xf]
  %v1640 = vld [vmem:[%s1630 + $0x24] sm:$0xf]
  %v1641 = vld [vmem:[%s1630 + $0x28] sm:$0xf]
  %v1642 = vld [vmem:[%s1630 + $0x2c] sm:$0xf]
  %v1643 = vld [vmem:[%s1630 + $0x30] sm:$0xf]
  %v1644 = vld [vmem:[%s1630 + $0x34] sm:$0xf]
  %v1645 = vld [vmem:[%s1630 + $0x38] sm:$0xf]
  %v1646 = vld [vmem:[%s1630 + $0x3c] sm:$0xf]
  %v1658 = vunpack.c.l.b16 %v1619
  %v1659 = vunpack.c.l.b16 %v1620
  %v1660 = vunpack.c.l.b16 %v1621
  %v1661 = vunpack.c.l.b16 %v1622
  %v1662 = vunpack.c.l.b16 %v1623
  %v1663 = vunpack.c.l.b16 %v1624
  %v1664 = vunpack.c.l.b16 %v1625
  %v1665 = vunpack.c.l.b16 %v1626
  %v1666 = vunpack.c.l.b16 %v1627
  %v1667 = vunpack.c.l.b16 %v1628
  %v1668 = vunpack.c.l.b16 %v1629
  %v1669 = vpack.c.b16 %v1659, %v1658
  %v1670 = vpack.c.b16 %v1661, %v1660
  %v1671 = vpack.c.b16 %v1663, %v1662
  %v1672 = vpack.c.b16 %v1665, %v1664
  %v1673 = vpack.c.b16 %v1667, %v1666
  %v1674 = vpack.c.b16 %v1668, %v1668
  %v1675 = vrot.slane %v1669, 1
  %v1676 = vrot.slane %v1670, 1
  %v1677 = vsel %vm518, %v1675, %v1676
  %v1678 = vrot.slane %v1671, 1
  %v1679 = vsel %vm518, %v1676, %v1678
  %v1680 = vrot.slane %v1672, 1
  %v1681 = vsel %vm518, %v1678, %v1680
  %v1682 = vrot.slane %v1673, 1
  %v1683 = vsel %vm518, %v1680, %v1682
  %v1684 = vrot.slane %v1674, 1
  %v1685 = vsel %vm518, %v1682, %v1684
  %v1707 = vunpack.c.l.b16 %v1631
  %v1708 = vunpack.c.l.b16 %v1632
  %v1709 = vunpack.c.l.b16 %v1633
  %v1710 = vunpack.c.l.b16 %v1634
  %v1711 = vunpack.c.l.b16 %v1635
  %v1712 = vunpack.c.l.b16 %v1636
  %v1713 = vunpack.c.l.b16 %v1637
  %v1714 = vunpack.c.l.b16 %v1638
  %v1715 = vunpack.c.l.b16 %v1639
  %v1716 = vunpack.c.l.b16 %v1640
  %v1717 = vunpack.c.l.b16 %v1641
  %v1718 = vunpack.c.l.b16 %v1642
  %v1719 = vunpack.c.l.b16 %v1643
  %v1720 = vunpack.c.l.b16 %v1644
  %v1721 = vunpack.c.l.b16 %v1645
  %v1722 = vunpack.c.l.b16 %v1646
  %v1723 = vpack.c.b16 %v1708, %v1707
  %v1724 = vpack.c.b16 %v1710, %v1709
  %v1725 = vpack.c.b16 %v1712, %v1711
  %v1726 = vpack.c.b16 %v1714, %v1713
  %v1727 = vpack.c.b16 %v1716, %v1715
  %v1728 = vpack.c.b16 %v1718, %v1717
  %v1729 = vpack.c.b16 %v1720, %v1719
  %v1730 = vpack.c.b16 %v1722, %v1721
  %1739 = vmatpush.bf16.msra.mxu0 %v1730
  %1740 = vmatpush.bf16.msra.mxu0 %v1729
  %1741 = vmatpush.bf16.msra.mxu0 %v1728
  %1742 = vmatpush.bf16.msra.mxu0 %v1727
  %1743 = vmatpush.bf16.msra.mxu0 %v1726
  %1744 = vmatpush.bf16.msra.mxu0 %v1725
  %1745 = vmatpush.bf16.msra.mxu0 %v1724
  %1746 = vmatpush.bf16.msra.mxu0 %v1723
  %1747 = vmatmul.bf16.gmra.mxu0 %v1677
  %v1748 = vpop.f32.mrf.mxu0
  %v1749 = vadd.f32 0.0, %v1748
  %v1750 = vpop.f32.mrf.mxu0
  %v1751 = vadd.f32 0.0, %v1750
  %1752 = vmatmul.bf16.gmra.mxu0 %v1679
  %v1753 = vpop.f32.mrf.mxu0
  %v1754 = vadd.f32 0.0, %v1753
  %v1755 = vpop.f32.mrf.mxu0
  %v1756 = vadd.f32 0.0, %v1755
  %1757 = vmatmul.bf16.gmra.mxu0 %v1681
  %v1758 = vpop.f32.mrf.mxu0
  %v1759 = vadd.f32 0.0, %v1758
  %v1760 = vpop.f32.mrf.mxu0
  %v1761 = vadd.f32 0.0, %v1760
  %1762 = vmatmul.bf16.gmra.mxu0 %v1683
  %v1763 = vpop.f32.mrf.mxu0
  %v1764 = vadd.f32 0.0, %v1763
  %v1765 = vpop.f32.mrf.mxu0
  %v1766 = vadd.f32 0.0, %v1765
  %1767 = vmatmul.bf16.gmra.mxu0 %v1685
  %v1768 = vpop.f32.mrf.mxu0
  %v1769 = vadd.f32 0.0, %v1768
  %v1770 = vpop.f32.mrf.mxu0
  %v1771 = vadd.f32 0.0, %v1770
  %1772 = vdwg.mxu0
  %v1773 = vadd.f32 %v1609, %v1749
  %v1774 = vadd.f32 %v1610, %v1751
  %v1775 = vadd.f32 %v1611, %v1754
  %v1776 = vadd.f32 %v1612, %v1756
  %v1777 = vadd.f32 %v1613, %v1759
  %v1778 = vadd.f32 %v1614, %v1761
  %v1779 = vadd.f32 %v1615, %v1764
  %v1780 = vadd.f32 %v1616, %v1766
  %v1781 = vadd.f32 %v1617, %v1769
  %v1782 = vadd.f32 %v1618, %v1771
  %1783 = vst [vmem:[#allocation4] sm:$0xff] %v1773
  %1784 = vst [vmem:[#allocation4 + $0x8] sm:$0xff] %v1774
  %1785 = vst [vmem:[#allocation4 + $0x10] sm:$0xff] %v1775
  %1786 = vst [vmem:[#allocation4 + $0x18] sm:$0xff] %v1776
  %1787 = vst [vmem:[#allocation4 + $0x20] sm:$0xff] %v1777
  %1788 = vst [vmem:[#allocation4 + $0x28] sm:$0xff] %v1778
  %1789 = vst [vmem:[#allocation4 + $0x30] sm:$0xff] %v1779
  %1790 = vst [vmem:[#allocation4 + $0x38] sm:$0xff] %v1780
  %1791 = vst [vmem:[#allocation4 + $0x40] sm:$0xff] %v1781
  %1792 = vst [vmem:[#allocation4 + $0x48] sm:$0xff] %v1782
  %v1793 = vld [vmem:[#allocation4] sm:$0xff]
  %v1794 = vld [vmem:[#allocation4 + $0x8] sm:$0xff]
  %v1795 = vld [vmem:[#allocation4 + $0x10] sm:$0xff]
  %v1796 = vld [vmem:[#allocation4 + $0x18] sm:$0xff]
  %v1797 = vld [vmem:[#allocation4 + $0x20] sm:$0xff]
  %v1798 = vld [vmem:[#allocation4 + $0x28] sm:$0xff]
  %v1799 = vld [vmem:[#allocation4 + $0x30] sm:$0xff]
  %v1800 = vld [vmem:[#allocation4 + $0x38] sm:$0xff]
  %v1801 = vld [vmem:[#allocation4 + $0x40] sm:$0xff]
  %v1802 = vld [vmem:[#allocation4 + $0x48] sm:$0xff]
  %v1803 = vld [vmem:[#allocation3 + $0x4] sm:$0xe]
  %v1804 = vld [vmem:[#allocation3 + $0x8] sm:$0xf]
  %v1805 = vld [vmem:[#allocation3 + $0xc] sm:$0xf]
  %v1806 = vld [vmem:[#allocation3 + $0x10] sm:$0xf]
  %v1807 = vld [vmem:[#allocation3 + $0x14] sm:$0xf]
  %v1808 = vld [vmem:[#allocation3 + $0x18] sm:$0xf]
  %v1809 = vld [vmem:[#allocation3 + $0x1c] sm:$0xf]
  %v1810 = vld [vmem:[#allocation3 + $0x20] sm:$0xf]
  %v1811 = vld [vmem:[#allocation3 + $0x24] sm:$0xf]
  %v1812 = vld [vmem:[#allocation3 + $0x28] sm:$0xf]
  %v1813 = vld [vmem:[#allocation3 + $0x2c] sm:$0x1]
  %s1814 = scalar_lea.vmem %s8, 192
  %v1815 = vld [vmem:[%s1814] sm:$0xf]
  %v1816 = vld [vmem:[%s1814 + $0x4] sm:$0xf]
  %v1817 = vld [vmem:[%s1814 + $0x8] sm:$0xf]
  %v1818 = vld [vmem:[%s1814 + $0xc] sm:$0xf]
  %v1819 = vld [vmem:[%s1814 + $0x10] sm:$0xf]
  %v1820 = vld [vmem:[%s1814 + $0x14] sm:$0xf]
  %v1821 = vld [vmem:[%s1814 + $0x18] sm:$0xf]
  %v1822 = vld [vmem:[%s1814 + $0x1c] sm:$0xf]
  %v1823 = vld [vmem:[%s1814 + $0x20] sm:$0xf]
  %v1824 = vld [vmem:[%s1814 + $0x24] sm:$0xf]
  %v1825 = vld [vmem:[%s1814 + $0x28] sm:$0xf]
  %v1826 = vld [vmem:[%s1814 + $0x2c] sm:$0xf]
  %v1827 = vld [vmem:[%s1814 + $0x30] sm:$0xf]
  %v1828 = vld [vmem:[%s1814 + $0x34] sm:$0xf]
  %v1829 = vld [vmem:[%s1814 + $0x38] sm:$0xf]
  %v1830 = vld [vmem:[%s1814 + $0x3c] sm:$0xf]
  %v1842 = vunpack.c.l.b16 %v1803
  %v1843 = vunpack.c.l.b16 %v1804
  %v1844 = vunpack.c.l.b16 %v1805
  %v1845 = vunpack.c.l.b16 %v1806
  %v1846 = vunpack.c.l.b16 %v1807
  %v1847 = vunpack.c.l.b16 %v1808
  %v1848 = vunpack.c.l.b16 %v1809
  %v1849 = vunpack.c.l.b16 %v1810
  %v1850 = vunpack.c.l.b16 %v1811
  %v1851 = vunpack.c.l.b16 %v1812
  %v1852 = vunpack.c.l.b16 %v1813
  %v1853 = vpack.c.b16 %v1843, %v1842
  %v1854 = vpack.c.b16 %v1845, %v1844
  %v1855 = vpack.c.b16 %v1847, %v1846
  %v1856 = vpack.c.b16 %v1849, %v1848
  %v1857 = vpack.c.b16 %v1851, %v1850
  %v1858 = vpack.c.b16 %v1852, %v1852
  %v1859 = vrot.slane %v1853, 1
  %v1860 = vrot.slane %v1854, 1
  %v1861 = vsel %vm518, %v1859, %v1860
  %v1862 = vrot.slane %v1855, 1
  %v1863 = vsel %vm518, %v1860, %v1862
  %v1864 = vrot.slane %v1856, 1
  %v1865 = vsel %vm518, %v1862, %v1864
  %v1866 = vrot.slane %v1857, 1
  %v1867 = vsel %vm518, %v1864, %v1866
  %v1868 = vrot.slane %v1858, 1
  %v1869 = vsel %vm518, %v1866, %v1868
  %v1891 = vunpack.c.l.b16 %v1815
  %v1892 = vunpack.c.l.b16 %v1816
  %v1893 = vunpack.c.l.b16 %v1817
  %v1894 = vunpack.c.l.b16 %v1818
  %v1895 = vunpack.c.l.b16 %v1819
  %v1896 = vunpack.c.l.b16 %v1820
  %v1897 = vunpack.c.l.b16 %v1821
  %v1898 = vunpack.c.l.b16 %v1822
  %v1899 = vunpack.c.l.b16 %v1823
  %v1900 = vunpack.c.l.b16 %v1824
  %v1901 = vunpack.c.l.b16 %v1825
  %v1902 = vunpack.c.l.b16 %v1826
  %v1903 = vunpack.c.l.b16 %v1827
  %v1904 = vunpack.c.l.b16 %v1828
  %v1905 = vunpack.c.l.b16 %v1829
  %v1906 = vunpack.c.l.b16 %v1830
  %v1907 = vpack.c.b16 %v1892, %v1891
  %v1908 = vpack.c.b16 %v1894, %v1893
  %v1909 = vpack.c.b16 %v1896, %v1895
  %v1910 = vpack.c.b16 %v1898, %v1897
  %v1911 = vpack.c.b16 %v1900, %v1899
  %v1912 = vpack.c.b16 %v1902, %v1901
  %v1913 = vpack.c.b16 %v1904, %v1903
  %v1914 = vpack.c.b16 %v1906, %v1905
  %1923 = vmatpush.bf16.msra.mxu0 %v1914
  %1924 = vmatpush.bf16.msra.mxu0 %v1913
  %1925 = vmatpush.bf16.msra.mxu0 %v1912
  %1926 = vmatpush.bf16.msra.mxu0 %v1911
  %1927 = vmatpush.bf16.msra.mxu0 %v1910
  %1928 = vmatpush.bf16.msra.mxu0 %v1909
  %1929 = vmatpush.bf16.msra.mxu0 %v1908
  %1930 = vmatpush.bf16.msra.mxu0 %v1907
  %1931 = vmatmul.bf16.gmra.mxu0 %v1861
  %v1932 = vpop.f32.mrf.mxu0
  %v1933 = vadd.f32 0.0, %v1932
  %v1934 = vpop.f32.mrf.mxu0
  %v1935 = vadd.f32 0.0, %v1934
  %1936 = vmatmul.bf16.gmra.mxu0 %v1863
  %v1937 = vpop.f32.mrf.mxu0
  %v1938 = vadd.f32 0.0, %v1937
  %v1939 = vpop.f32.mrf.mxu0
  %v1940 = vadd.f32 0.0, %v1939
  %1941 = vmatmul.bf16.gmra.mxu0 %v1865
  %v1942 = vpop.f32.mrf.mxu0
  %v1943 = vadd.f32 0.0, %v1942
  %v1944 = vpop.f32.mrf.mxu0
  %v1945 = vadd.f32 0.0, %v1944
  %1946 = vmatmul.bf16.gmra.mxu0 %v1867
  %v1947 = vpop.f32.mrf.mxu0
  %v1948 = vadd.f32 0.0, %v1947
  %v1949 = vpop.f32.mrf.mxu0
  %v1950 = vadd.f32 0.0, %v1949
  %1951 = vmatmul.bf16.gmra.mxu0 %v1869
  %v1952 = vpop.f32.mrf.mxu0
  %v1953 = vadd.f32 0.0, %v1952
  %v1954 = vpop.f32.mrf.mxu0
  %v1955 = vadd.f32 0.0, %v1954
  %1956 = vdwg.mxu0
  %v1957 = vadd.f32 %v1793, %v1933
  %v1958 = vadd.f32 %v1794, %v1935
  %v1959 = vadd.f32 %v1795, %v1938
  %v1960 = vadd.f32 %v1796, %v1940
  %v1961 = vadd.f32 %v1797, %v1943
  %v1962 = vadd.f32 %v1798, %v1945
  %v1963 = vadd.f32 %v1799, %v1948
  %v1964 = vadd.f32 %v1800, %v1950
  %v1965 = vadd.f32 %v1801, %v1953
  %v1966 = vadd.f32 %v1802, %v1955
  %1967 = vst [vmem:[#allocation4] sm:$0xff] %v1957
  %1968 = vst [vmem:[#allocation4 + $0x8] sm:$0xff] %v1958
  %1969 = vst [vmem:[#allocation4 + $0x10] sm:$0xff] %v1959
  %1970 = vst [vmem:[#allocation4 + $0x18] sm:$0xff] %v1960
  %1971 = vst [vmem:[#allocation4 + $0x20] sm:$0xff] %v1961
  %1972 = vst [vmem:[#allocation4 + $0x28] sm:$0xff] %v1962
  %1973 = vst [vmem:[#allocation4 + $0x30] sm:$0xff] %v1963
  %1974 = vst [vmem:[#allocation4 + $0x38] sm:$0xff] %v1964
  %1975 = vst [vmem:[#allocation4 + $0x40] sm:$0xff] %v1965
  %1976 = vst [vmem:[#allocation4 + $0x48] sm:$0xff] %v1966
  %v1977 = vld [vmem:[#allocation4] sm:$0xff]
  %v1978 = vld [vmem:[#allocation4 + $0x8] sm:$0xff]
  %v1979 = vld [vmem:[#allocation4 + $0x10] sm:$0xff]
  %v1980 = vld [vmem:[#allocation4 + $0x18] sm:$0xff]
  %v1981 = vld [vmem:[#allocation4 + $0x20] sm:$0xff]
  %v1982 = vld [vmem:[#allocation4 + $0x28] sm:$0xff]
  %v1983 = vld [vmem:[#allocation4 + $0x30] sm:$0xff]
  %v1984 = vld [vmem:[#allocation4 + $0x38] sm:$0xff]
  %v1985 = vld [vmem:[#allocation4 + $0x40] sm:$0xff]
  %v1986 = vld [vmem:[#allocation4 + $0x48] sm:$0xff]
  %v1987 = vld [vmem:[#allocation3 + $0x4] sm:$0xe]
  %v1988 = vld [vmem:[#allocation3 + $0x8] sm:$0xf]
  %v1989 = vld [vmem:[#allocation3 + $0xc] sm:$0xf]
  %v1990 = vld [vmem:[#allocation3 + $0x10] sm:$0xf]
  %v1991 = vld [vmem:[#allocation3 + $0x14] sm:$0xf]
  %v1992 = vld [vmem:[#allocation3 + $0x18] sm:$0xf]
  %v1993 = vld [vmem:[#allocation3 + $0x1c] sm:$0xf]
  %v1994 = vld [vmem:[#allocation3 + $0x20] sm:$0xf]
  %v1995 = vld [vmem:[#allocation3 + $0x24] sm:$0xf]
  %v1996 = vld [vmem:[#allocation3 + $0x28] sm:$0xf]
  %v1997 = vld [vmem:[#allocation3 + $0x2c] sm:$0x3]
  %s1998 = scalar_lea.vmem %s8, 256
  %v1999 = vld [vmem:[%s1998] sm:$0xf]
  %v2000 = vld [vmem:[%s1998 + $0x4] sm:$0xf]
  %v2001 = vld [vmem:[%s1998 + $0x8] sm:$0xf]
  %v2002 = vld [vmem:[%s1998 + $0xc] sm:$0xf]
  %v2003 = vld [vmem:[%s1998 + $0x10] sm:$0xf]
  %v2004 = vld [vmem:[%s1998 + $0x14] sm:$0xf]
  %v2005 = vld [vmem:[%s1998 + $0x18] sm:$0xf]
  %v2006 = vld [vmem:[%s1998 + $0x1c] sm:$0xf]
  %v2007 = vld [vmem:[%s1998 + $0x20] sm:$0xf]
  %v2008 = vld [vmem:[%s1998 + $0x24] sm:$0xf]
  %v2009 = vld [vmem:[%s1998 + $0x28] sm:$0xf]
  %v2010 = vld [vmem:[%s1998 + $0x2c] sm:$0xf]
  %v2011 = vld [vmem:[%s1998 + $0x30] sm:$0xf]
  %v2012 = vld [vmem:[%s1998 + $0x34] sm:$0xf]
  %v2013 = vld [vmem:[%s1998 + $0x38] sm:$0xf]
  %v2014 = vld [vmem:[%s1998 + $0x3c] sm:$0xf]
  %v2026 = vunpack.c.l.b16 %v1987
  %v2027 = vunpack.c.l.b16 %v1988
  %v2028 = vunpack.c.l.b16 %v1989
  %v2029 = vunpack.c.l.b16 %v1990
  %v2030 = vunpack.c.l.b16 %v1991
  %v2031 = vunpack.c.l.b16 %v1992
  %v2032 = vunpack.c.l.b16 %v1993
  %v2033 = vunpack.c.l.b16 %v1994
  %v2034 = vunpack.c.l.b16 %v1995
  %v2035 = vunpack.c.l.b16 %v1996
  %v2036 = vunpack.c.l.b16 %v1997
  %v2037 = vpack.c.b16 %v2027, %v2026
  %v2038 = vpack.c.b16 %v2029, %v2028
  %v2039 = vpack.c.b16 %v2031, %v2030
  %v2040 = vpack.c.b16 %v2033, %v2032
  %v2041 = vpack.c.b16 %v2035, %v2034
  %v2042 = vpack.c.b16 %v2036, %v2036
  %v2044 = vshrl.u32 %v2037, 16
  %v2046 = vrot.slane %v2044, 1
  %v2047 = vshll.u32 %v2037, 16
  %v2049 = vrot.slane %v2047, 2
  %v2050 = vor.u32 %v2046, %v2049
  %v2052 = vshrl.u32 %v2038, 16
  %v2054 = vrot.slane %v2052, 1
  %v2055 = vshll.u32 %v2038, 16
  %v2057 = vrot.slane %v2055, 2
  %v2058 = vor.u32 %v2054, %v2057
  %v2059 = vsel %vm657, %v2050, %v2058
  %v2061 = vshrl.u32 %v2039, 16
  %v2063 = vrot.slane %v2061, 1
  %v2064 = vshll.u32 %v2039, 16
  %v2066 = vrot.slane %v2064, 2
  %v2067 = vor.u32 %v2063, %v2066
  %v2068 = vsel %vm657, %v2058, %v2067
  %v2070 = vshrl.u32 %v2040, 16
  %v2072 = vrot.slane %v2070, 1
  %v2073 = vshll.u32 %v2040, 16
  %v2075 = vrot.slane %v2073, 2
  %v2076 = vor.u32 %v2072, %v2075
  %v2077 = vsel %vm657, %v2067, %v2076
  %v2079 = vshrl.u32 %v2041, 16
  %v2081 = vrot.slane %v2079, 1
  %v2082 = vshll.u32 %v2041, 16
  %v2084 = vrot.slane %v2082, 2
  %v2085 = vor.u32 %v2081, %v2084
  %v2086 = vsel %vm657, %v2076, %v2085
  %v2088 = vshrl.u32 %v2042, 16
  %v2090 = vrot.slane %v2088, 1
  %v2091 = vshll.u32 %v2042, 16
  %v2093 = vrot.slane %v2091, 2
  %v2094 = vor.u32 %v2090, %v2093
  %v2095 = vsel %vm657, %v2085, %v2094
  %v2117 = vunpack.c.l.b16 %v1999
  %v2118 = vunpack.c.l.b16 %v2000
  %v2119 = vunpack.c.l.b16 %v2001
  %v2120 = vunpack.c.l.b16 %v2002
  %v2121 = vunpack.c.l.b16 %v2003
  %v2122 = vunpack.c.l.b16 %v2004
  %v2123 = vunpack.c.l.b16 %v2005
  %v2124 = vunpack.c.l.b16 %v2006
  %v2125 = vunpack.c.l.b16 %v2007
  %v2126 = vunpack.c.l.b16 %v2008
  %v2127 = vunpack.c.l.b16 %v2009
  %v2128 = vunpack.c.l.b16 %v2010
  %v2129 = vunpack.c.l.b16 %v2011
  %v2130 = vunpack.c.l.b16 %v2012
  %v2131 = vunpack.c.l.b16 %v2013
  %v2132 = vunpack.c.l.b16 %v2014
  %v2133 = vpack.c.b16 %v2118, %v2117
  %v2134 = vpack.c.b16 %v2120, %v2119
  %v2135 = vpack.c.b16 %v2122, %v2121
  %v2136 = vpack.c.b16 %v2124, %v2123
  %v2137 = vpack.c.b16 %v2126, %v2125
  %v2138 = vpack.c.b16 %v2128, %v2127
  %v2139 = vpack.c.b16 %v2130, %v2129
  %v2140 = vpack.c.b16 %v2132, %v2131
  %2149 = vmatpush.bf16.msra.mxu0 %v2140
  %2150 = vmatpush.bf16.msra.mxu0 %v2139
  %2151 = vmatpush.bf16.msra.mxu0 %v2138
  %2152 = vmatpush.bf16.msra.mxu0 %v2137
  %2153 = vmatpush.bf16.msra.mxu0 %v2136
  %2154 = vmatpush.bf16.msra.mxu0 %v2135
  %2155 = vmatpush.bf16.msra.mxu0 %v2134
  %2156 = vmatpush.bf16.msra.mxu0 %v2133
  %2157 = vmatmul.bf16.gmra.mxu0 %v2059
  %v2158 = vpop.f32.mrf.mxu0
  %v2159 = vadd.f32 0.0, %v2158
  %v2160 = vpop.f32.mrf.mxu0
  %v2161 = vadd.f32 0.0, %v2160
  %2162 = vmatmul.bf16.gmra.mxu0 %v2068
  %v2163 = vpop.f32.mrf.mxu0
  %v2164 = vadd.f32 0.0, %v2163
  %v2165 = vpop.f32.mrf.mxu0
  %v2166 = vadd.f32 0.0, %v2165
  %2167 = vmatmul.bf16.gmra.mxu0 %v2077
  %v2168 = vpop.f32.mrf.mxu0
  %v2169 = vadd.f32 0.0, %v2168
  %v2170 = vpop.f32.mrf.mxu0
  %v2171 = vadd.f32 0.0, %v2170
  %2172 = vmatmul.bf16.gmra.mxu0 %v2086
  %v2173 = vpop.f32.mrf.mxu0
  %v2174 = vadd.f32 0.0, %v2173
  %v2175 = vpop.f32.mrf.mxu0
  %v2176 = vadd.f32 0.0, %v2175
  %2177 = vmatmul.bf16.gmra.mxu0 %v2095
  %v2178 = vpop.f32.mrf.mxu0
  %v2179 = vadd.f32 0.0, %v2178
  %v2180 = vpop.f32.mrf.mxu0
  %v2181 = vadd.f32 0.0, %v2180
  %2182 = vdwg.mxu0
  %v2183 = vadd.f32 %v1977, %v2159
  %v2184 = vadd.f32 %v1978, %v2161
  %v2185 = vadd.f32 %v1979, %v2164
  %v2186 = vadd.f32 %v1980, %v2166
  %v2187 = vadd.f32 %v1981, %v2169
  %v2188 = vadd.f32 %v1982, %v2171
  %v2189 = vadd.f32 %v1983, %v2174
  %v2190 = vadd.f32 %v1984, %v2176
  %v2191 = vadd.f32 %v1985, %v2179
  %v2192 = vadd.f32 %v1986, %v2181
  %2193 = vst [vmem:[#allocation4] sm:$0xff] %v2183
  %2194 = vst [vmem:[#allocation4 + $0x8] sm:$0xff] %v2184
  %2195 = vst [vmem:[#allocation4 + $0x10] sm:$0xff] %v2185
  %2196 = vst [vmem:[#allocation4 + $0x18] sm:$0xff] %v2186
  %2197 = vst [vmem:[#allocation4 + $0x20] sm:$0xff] %v2187
  %2198 = vst [vmem:[#allocation4 + $0x28] sm:$0xff] %v2188
  %2199 = vst [vmem:[#allocation4 + $0x30] sm:$0xff] %v2189
  %2200 = vst [vmem:[#allocation4 + $0x38] sm:$0xff] %v2190
  %2201 = vst [vmem:[#allocation4 + $0x40] sm:$0xff] %v2191
  %2202 = vst [vmem:[#allocation4 + $0x48] sm:$0xff] %v2192
  %v2203 = vld [vmem:[#allocation4] sm:$0xff]
  %v2204 = vld [vmem:[#allocation4 + $0x8] sm:$0xff]
  %v2205 = vld [vmem:[#allocation4 + $0x10] sm:$0xff]
  %v2206 = vld [vmem:[#allocation4 + $0x18] sm:$0xff]
  %v2207 = vld [vmem:[#allocation4 + $0x20] sm:$0xff]
  %v2208 = vld [vmem:[#allocation4 + $0x28] sm:$0xff]
  %v2209 = vld [vmem:[#allocation4 + $0x30] sm:$0xff]
  %v2210 = vld [vmem:[#allocation4 + $0x38] sm:$0xff]
  %v2211 = vld [vmem:[#allocation4 + $0x40] sm:$0xff]
  %v2212 = vld [vmem:[#allocation4 + $0x48] sm:$0xff]
  %v2213 = vld [vmem:[#allocation3 + $0x4] sm:$0xc]
  %v2214 = vld [vmem:[#allocation3 + $0x8] sm:$0xf]
  %v2215 = vld [vmem:[#allocation3 + $0xc] sm:$0xf]
  %v2216 = vld [vmem:[#allocation3 + $0x10] sm:$0xf]
  %v2217 = vld [vmem:[#allocation3 + $0x14] sm:$0xf]
  %v2218 = vld [vmem:[#allocation3 + $0x18] sm:$0xf]
  %v2219 = vld [vmem:[#allocation3 + $0x1c] sm:$0xf]
  %v2220 = vld [vmem:[#allocation3 + $0x20] sm:$0xf]
  %v2221 = vld [vmem:[#allocation3 + $0x24] sm:$0xf]
  %v2222 = vld [vmem:[#allocation3 + $0x28] sm:$0xf]
  %v2223 = vld [vmem:[#allocation3 + $0x2c] sm:$0x3]
  %s2224 = scalar_lea.vmem %s8, 320
  %v2225 = vld [vmem:[%s2224] sm:$0xf]
  %v2226 = vld [vmem:[%s2224 + $0x4] sm:$0xf]
  %v2227 = vld [vmem:[%s2224 + $0x8] sm:$0xf]
  %v2228 = vld [vmem:[%s2224 + $0xc] sm:$0xf]
  %v2229 = vld [vmem:[%s2224 + $0x10] sm:$0xf]
  %v2230 = vld [vmem:[%s2224 + $0x14] sm:$0xf]
  %v2231 = vld [vmem:[%s2224 + $0x18] sm:$0xf]
  %v2232 = vld [vmem:[%s2224 + $0x1c] sm:$0xf]
  %v2233 = vld [vmem:[%s2224 + $0x20] sm:$0xf]
  %v2234 = vld [vmem:[%s2224 + $0x24] sm:$0xf]
  %v2235 = vld [vmem:[%s2224 + $0x28] sm:$0xf]
  %v2236 = vld [vmem:[%s2224 + $0x2c] sm:$0xf]
  %v2237 = vld [vmem:[%s2224 + $0x30] sm:$0xf]
  %v2238 = vld [vmem:[%s2224 + $0x34] sm:$0xf]
  %v2239 = vld [vmem:[%s2224 + $0x38] sm:$0xf]
  %v2240 = vld [vmem:[%s2224 + $0x3c] sm:$0xf]
  %v2252 = vunpack.c.l.b16 %v2213
  %v2253 = vunpack.c.l.b16 %v2214
  %v2254 = vunpack.c.l.b16 %v2215
  %v2255 = vunpack.c.l.b16 %v2216
  %v2256 = vunpack.c.l.b16 %v2217
  %v2257 = vunpack.c.l.b16 %v2218
  %v2258 = vunpack.c.l.b16 %v2219
  %v2259 = vunpack.c.l.b16 %v2220
  %v2260 = vunpack.c.l.b16 %v2221
  %v2261 = vunpack.c.l.b16 %v2222
  %v2262 = vunpack.c.l.b16 %v2223
  %v2263 = vpack.c.b16 %v2253, %v2252
  %v2264 = vpack.c.b16 %v2255, %v2254
  %v2265 = vpack.c.b16 %v2257, %v2256
  %v2266 = vpack.c.b16 %v2259, %v2258
  %v2267 = vpack.c.b16 %v2261, %v2260
  %v2268 = vpack.c.b16 %v2262, %v2262
  %vm2269 = vcmask 1045504
  %v2270 = vrot.slane %v2263, 2
  %v2271 = vrot.slane %v2264, 2
  %v2272 = vsel %vm2269, %v2270, %v2271
  %v2273 = vrot.slane %v2265, 2
  %v2274 = vsel %vm2269, %v2271, %v2273
  %v2275 = vrot.slane %v2266, 2
  %v2276 = vsel %vm2269, %v2273, %v2275
  %v2277 = vrot.slane %v2267, 2
  %v2278 = vsel %vm2269, %v2275, %v2277
  %v2279 = vrot.slane %v2268, 2
  %v2280 = vsel %vm2269, %v2277, %v2279
  %v2302 = vunpack.c.l.b16 %v2225
  %v2303 = vunpack.c.l.b16 %v2226
  %v2304 = vunpack.c.l.b16 %v2227
  %v2305 = vunpack.c.l.b16 %v2228
  %v2306 = vunpack.c.l.b16 %v2229
  %v2307 = vunpack.c.l.b16 %v2230
  %v2308 = vunpack.c.l.b16 %v2231
  %v2309 = vunpack.c.l.b16 %v2232
  %v2310 = vunpack.c.l.b16 %v2233
  %v2311 = vunpack.c.l.b16 %v2234
  %v2312 = vunpack.c.l.b16 %v2235
  %v2313 = vunpack.c.l.b16 %v2236
  %v2314 = vunpack.c.l.b16 %v2237
  %v2315 = vunpack.c.l.b16 %v2238
  %v2316 = vunpack.c.l.b16 %v2239
  %v2317 = vunpack.c.l.b16 %v2240
  %v2318 = vpack.c.b16 %v2303, %v2302
  %v2319 = vpack.c.b16 %v2305, %v2304
  %v2320 = vpack.c.b16 %v2307, %v2306
  %v2321 = vpack.c.b16 %v2309, %v2308
  %v2322 = vpack.c.b16 %v2311, %v2310
  %v2323 = vpack.c.b16 %v2313, %v2312
  %v2324 = vpack.c.b16 %v2315, %v2314
  %v2325 = vpack.c.b16 %v2317, %v2316
  %2334 = vmatpush.bf16.msra.mxu0 %v2325
  %2335 = vmatpush.bf16.msra.mxu0 %v2324
  %2336 = vmatpush.bf16.msra.mxu0 %v2323
  %2337 = vmatpush.bf16.msra.mxu0 %v2322
  %2338 = vmatpush.bf16.msra.mxu0 %v2321
  %2339 = vmatpush.bf16.msra.mxu0 %v2320
  %2340 = vmatpush.bf16.msra.mxu0 %v2319
  %2341 = vmatpush.bf16.msra.mxu0 %v2318
  %2342 = vmatmul.bf16.gmra.mxu0 %v2272
  %v2343 = vpop.f32.mrf.mxu0
  %v2344 = vadd.f32 0.0, %v2343
  %v2345 = vpop.f32.mrf.mxu0
  %v2346 = vadd.f32 0.0, %v2345
  %2347 = vmatmul.bf16.gmra.mxu0 %v2274
  %v2348 = vpop.f32.mrf.mxu0
  %v2349 = vadd.f32 0.0, %v2348
  %v2350 = vpop.f32.mrf.mxu0
  %v2351 = vadd.f32 0.0, %v2350
  %2352 = vmatmul.bf16.gmra.mxu0 %v2276
  %v2353 = vpop.f32.mrf.mxu0
  %v2354 = vadd.f32 0.0, %v2353
  %v2355 = vpop.f32.mrf.mxu0
  %v2356 = vadd.f32 0.0, %v2355
  %2357 = vmatmul.bf16.gmra.mxu0 %v2278
  %v2358 = vpop.f32.mrf.mxu0
  %v2359 = vadd.f32 0.0, %v2358
  %v2360 = vpop.f32.mrf.mxu0
  %v2361 = vadd.f32 0.0, %v2360
  %2362 = vmatmul.bf16.gmra.mxu0 %v2280
  %v2363 = vpop.f32.mrf.mxu0
  %v2364 = vadd.f32 0.0, %v2363
  %v2365 = vpop.f32.mrf.mxu0
  %v2366 = vadd.f32 0.0, %v2365
  %2367 = vdwg.mxu0
  %v2368 = vadd.f32 %v2203, %v2344
  %v2369 = vadd.f32 %v2204, %v2346
  %v2370 = vadd.f32 %v2205, %v2349
  %v2371 = vadd.f32 %v2206, %v2351
  %v2372 = vadd.f32 %v2207, %v2354
  %v2373 = vadd.f32 %v2208, %v2356
  %v2374 = vadd.f32 %v2209, %v2359
  %v2375 = vadd.f32 %v2210, %v2361
  %v2376 = vadd.f32 %v2211, %v2364
  %v2377 = vadd.f32 %v2212, %v2366
  %2378 = vst [vmem:[#allocation4] sm:$0xff] %v2368
  %2379 = vst [vmem:[#allocation4 + $0x8] sm:$0xff] %v2369
  %2380 = vst [vmem:[#allocation4 + $0x10] sm:$0xff] %v2370
  %2381 = vst [vmem:[#allocation4 + $0x18] sm:$0xff] %v2371
  %2382 = vst [vmem:[#allocation4 + $0x20] sm:$0xff] %v2372
  %2383 = vst [vmem:[#allocation4 + $0x28] sm:$0xff] %v2373
  %2384 = vst [vmem:[#allocation4 + $0x30] sm:$0xff] %v2374
  %2385 = vst [vmem:[#allocation4 + $0x38] sm:$0xff] %v2375
  %2386 = vst [vmem:[#allocation4 + $0x40] sm:$0xff] %v2376
  %2387 = vst [vmem:[#allocation4 + $0x48] sm:$0xff] %v2377
  %v2388 = vld [vmem:[#allocation4] sm:$0xff]
  %v2389 = vld [vmem:[#allocation4 + $0x8] sm:$0xff]
  %v2390 = vld [vmem:[#allocation4 + $0x10] sm:$0xff]
  %v2391 = vld [vmem:[#allocation4 + $0x18] sm:$0xff]
  %v2392 = vld [vmem:[#allocation4 + $0x20] sm:$0xff]
  %v2393 = vld [vmem:[#allocation4 + $0x28] sm:$0xff]
  %v2394 = vld [vmem:[#allocation4 + $0x30] sm:$0xff]
  %v2395 = vld [vmem:[#allocation4 + $0x38] sm:$0xff]
  %v2396 = vld [vmem:[#allocation4 + $0x40] sm:$0xff]
  %v2397 = vld [vmem:[#allocation4 + $0x48] sm:$0xff]
  %v2398 = vld [vmem:[#allocation3 + $0x8] sm:$0xc]
  %v2399 = vld [vmem:[#allocation3 + $0xc] sm:$0xf]
  %v2400 = vld [vmem:[#allocation3 + $0x10] sm:$0xf]
  %v2401 = vld [vmem:[#allocation3 + $0x14] sm:$0xf]
  %v2402 = vld [vmem:[#allocation3 + $0x18] sm:$0xf]
  %v2403 = vld [vmem:[#allocation3 + $0x1c] sm:$0xf]
  %v2404 = vld [vmem:[#allocation3 + $0x20] sm:$0xf]
  %v2405 = vld [vmem:[#allocation3 + $0x24] sm:$0xf]
  %v2406 = vld [vmem:[#allocation3 + $0x28] sm:$0xf]
  %v2407 = vld [vmem:[#allocation3 + $0x2c] sm:$0xf]
  %v2408 = vld [vmem:[#allocation3 + $0x30] sm:$0x3]
  %s2409 = scalar_lea.vmem %s8, 384
  %v2410 = vld [vmem:[%s2409] sm:$0xf]
  %v2411 = vld [vmem:[%s2409 + $0x4] sm:$0xf]
  %v2412 = vld [vmem:[%s2409 + $0x8] sm:$0xf]
  %v2413 = vld [vmem:[%s2409 + $0xc] sm:$0xf]
  %v2414 = vld [vmem:[%s2409 + $0x10] sm:$0xf]
  %v2415 = vld [vmem:[%s2409 + $0x14] sm:$0xf]
  %v2416 = vld [vmem:[%s2409 + $0x18] sm:$0xf]
  %v2417 = vld [vmem:[%s2409 + $0x1c] sm:$0xf]
  %v2418 = vld [vmem:[%s2409 + $0x20] sm:$0xf]
  %v2419 = vld [vmem:[%s2409 + $0x24] sm:$0xf]
  %v2420 = vld [vmem:[%s2409 + $0x28] sm:$0xf]
  %v2421 = vld [vmem:[%s2409 + $0x2c] sm:$0xf]
  %v2422 = vld [vmem:[%s2409 + $0x30] sm:$0xf]
  %v2423 = vld [vmem:[%s2409 + $0x34] sm:$0xf]
  %v2424 = vld [vmem:[%s2409 + $0x38] sm:$0xf]
  %v2425 = vld [vmem:[%s2409 + $0x3c] sm:$0xf]
  %v2437 = vunpack.c.l.b16 %v2398
  %v2438 = vunpack.c.l.b16 %v2399
  %v2439 = vunpack.c.l.b16 %v2400
  %v2440 = vunpack.c.l.b16 %v2401
  %v2441 = vunpack.c.l.b16 %v2402
  %v2442 = vunpack.c.l.b16 %v2403
  %v2443 = vunpack.c.l.b16 %v2404
  %v2444 = vunpack.c.l.b16 %v2405
  %v2445 = vunpack.c.l.b16 %v2406
  %v2446 = vunpack.c.l.b16 %v2407
  %v2447 = vunpack.c.l.b16 %v2408
  %v2448 = vpack.c.b16 %v2438, %v2437
  %v2449 = vpack.c.b16 %v2440, %v2439
  %v2450 = vpack.c.b16 %v2442, %v2441
  %v2451 = vpack.c.b16 %v2444, %v2443
  %v2452 = vpack.c.b16 %v2446, %v2445
  %v2453 = vpack.c.b16 %v2447, %v2447
  %v2454 = vrot.slane %v2448, 2
  %v2455 = vrot.slane %v2449, 2
  %v2456 = vsel %vm2269, %v2454, %v2455
  %v2457 = vrot.slane %v2450, 2
  %v2458 = vsel %vm2269, %v2455, %v2457
  %v2459 = vrot.slane %v2451, 2
  %v2460 = vsel %vm2269, %v2457, %v2459
  %v2461 = vrot.slane %v2452, 2
  %v2462 = vsel %vm2269, %v2459, %v2461
  %v2463 = vrot.slane %v2453, 2
  %v2464 = vsel %vm2269, %v2461, %v2463
  %v2486 = vunpack.c.l.b16 %v2410
  %v2487 = vunpack.c.l.b16 %v2411
  %v2488 = vunpack.c.l.b16 %v2412
  %v2489 = vunpack.c.l.b16 %v2413
  %v2490 = vunpack.c.l.b16 %v2414
  %v2491 = vunpack.c.l.b16 %v2415
  %v2492 = vunpack.c.l.b16 %v2416
  %v2493 = vunpack.c.l.b16 %v2417
  %v2494 = vunpack.c.l.b16 %v2418
  %v2495 = vunpack.c.l.b16 %v2419
  %v2496 = vunpack.c.l.b16 %v2420
  %v2497 = vunpack.c.l.b16 %v2421
  %v2498 = vunpack.c.l.b16 %v2422
  %v2499 = vunpack.c.l.b16 %v2423
  %v2500 = vunpack.c.l.b16 %v2424
  %v2501 = vunpack.c.l.b16 %v2425
  %v2502 = vpack.c.b16 %v2487, %v2486
  %v2503 = vpack.c.b16 %v2489, %v2488
  %v2504 = vpack.c.b16 %v2491, %v2490
  %v2505 = vpack.c.b16 %v2493, %v2492
  %v2506 = vpack.c.b16 %v2495, %v2494
  %v2507 = vpack.c.b16 %v2497, %v2496
  %v2508 = vpack.c.b16 %v2499, %v2498
  %v2509 = vpack.c.b16 %v2501, %v2500
  %2518 = vmatpush.bf16.msra.mxu0 %v2509
  %2519 = vmatpush.bf16.msra.mxu0 %v2508
  %2520 = vmatpush.bf16.msra.mxu0 %v2507
  %2521 = vmatpush.bf16.msra.mxu0 %v2506
  %2522 = vmatpush.bf16.msra.mxu0 %v2505
  %2523 = vmatpush.bf16.msra.mxu0 %v2504
  %2524 = vmatpush.bf16.msra.mxu0 %v2503
  %2525 = vmatpush.bf16.msra.mxu0 %v2502
  %2526 = vmatmul.bf16.gmra.mxu0 %v2456
  %v2527 = vpop.f32.mrf.mxu0
  %v2528 = vadd.f32 0.0, %v2527
  %v2529 = vpop.f32.mrf.mxu0
  %v2530 = vadd.f32 0.0, %v2529
  %2531 = vmatmul.bf16.gmra.mxu0 %v2458
  %v2532 = vpop.f32.mrf.mxu0
  %v2533 = vadd.f32 0.0, %v2532
  %v2534 = vpop.f32.mrf.mxu0
  %v2535 = vadd.f32 0.0, %v2534
  %2536 = vmatmul.bf16.gmra.mxu0 %v2460
  %v2537 = vpop.f32.mrf.mxu0
  %v2538 = vadd.f32 0.0, %v2537
  %v2539 = vpop.f32.mrf.mxu0
  %v2540 = vadd.f32 0.0, %v2539
  %2541 = vmatmul.bf16.gmra.mxu0 %v2462
  %v2542 = vpop.f32.mrf.mxu0
  %v2543 = vadd.f32 0.0, %v2542
  %v2544 = vpop.f32.mrf.mxu0
  %v2545 = vadd.f32 0.0, %v2544
  %2546 = vmatmul.bf16.gmra.mxu0 %v2464
  %v2547 = vpop.f32.mrf.mxu0
  %v2548 = vadd.f32 0.0, %v2547
  %v2549 = vpop.f32.mrf.mxu0
  %v2550 = vadd.f32 0.0, %v2549
  %2551 = vdwg.mxu0
  %v2552 = vadd.f32 %v2388, %v2528
  %v2553 = vadd.f32 %v2389, %v2530
  %v2554 = vadd.f32 %v2390, %v2533
  %v2555 = vadd.f32 %v2391, %v2535
  %v2556 = vadd.f32 %v2392, %v2538
  %v2557 = vadd.f32 %v2393, %v2540
  %v2558 = vadd.f32 %v2394, %v2543
  %v2559 = vadd.f32 %v2395, %v2545
  %v2560 = vadd.f32 %v2396, %v2548
  %v2561 = vadd.f32 %v2397, %v2550
  %2562 = vst [vmem:[#allocation4] sm:$0xff] %v2552
  %2563 = vst [vmem:[#allocation4 + $0x8] sm:$0xff] %v2553
  %2564 = vst [vmem:[#allocation4 + $0x10] sm:$0xff] %v2554
  %2565 = vst [vmem:[#allocation4 + $0x18] sm:$0xff] %v2555
  %2566 = vst [vmem:[#allocation4 + $0x20] sm:$0xff] %v2556
  %2567 = vst [vmem:[#allocation4 + $0x28] sm:$0xff] %v2557
  %2568 = vst [vmem:[#allocation4 + $0x30] sm:$0xff] %v2558
  %2569 = vst [vmem:[#allocation4 + $0x38] sm:$0xff] %v2559
  %2570 = vst [vmem:[#allocation4 + $0x40] sm:$0xff] %v2560
  %2571 = vst [vmem:[#allocation4 + $0x48] sm:$0xff] %v2561
  %v2572 = vld [vmem:[#allocation4] sm:$0xff]
  %v2573 = vld [vmem:[#allocation4 + $0x8] sm:$0xff]
  %v2574 = vld [vmem:[#allocation4 + $0x10] sm:$0xff]
  %v2575 = vld [vmem:[#allocation4 + $0x18] sm:$0xff]
  %v2576 = vld [vmem:[#allocation4 + $0x20] sm:$0xff]
  %v2577 = vld [vmem:[#allocation4 + $0x28] sm:$0xff]
  %v2578 = vld [vmem:[#allocation4 + $0x30] sm:$0xff]
  %v2579 = vld [vmem:[#allocation4 + $0x38] sm:$0xff]
  %v2580 = vld [vmem:[#allocation4 + $0x40] sm:$0xff]
  %v2581 = vld [vmem:[#allocation4 + $0x48] sm:$0xff]
  %v2582 = vld [vmem:[#allocation3 + $0x8] sm:$0xc]
  %v2583 = vld [vmem:[#allocation3 + $0xc] sm:$0xf]
  %v2584 = vld [vmem:[#allocation3 + $0x10] sm:$0xf]
  %v2585 = vld [vmem:[#allocation3 + $0x14] sm:$0xf]
  %v2586 = vld [vmem:[#allocation3 + $0x18] sm:$0xf]
  %v2587 = vld [vmem:[#allocation3 + $0x1c] sm:$0xf]
  %v2588 = vld [vmem:[#allocation3 + $0x20] sm:$0xf]
  %v2589 = vld [vmem:[#allocation3 + $0x24] sm:$0xf]
  %v2590 = vld [vmem:[#allocation3 + $0x28] sm:$0xf]
  %v2591 = vld [vmem:[#allocation3 + $0x2c] sm:$0xf]
  %v2592 = vld [vmem:[#allocation3 + $0x30] sm:$0x7]
  %s2593 = scalar_lea.vmem %s8, 448
  %v2594 = vld [vmem:[%s2593] sm:$0xf]
  %v2595 = vld [vmem:[%s2593 + $0x4] sm:$0xf]
  %v2596 = vld [vmem:[%s2593 + $0x8] sm:$0xf]
  %v2597 = vld [vmem:[%s2593 + $0xc] sm:$0xf]
  %v2598 = vld [vmem:[%s2593 + $0x10] sm:$0xf]
  %v2599 = vld [vmem:[%s2593 + $0x14] sm:$0xf]
  %v2600 = vld [vmem:[%s2593 + $0x18] sm:$0xf]
  %v2601 = vld [vmem:[%s2593 + $0x1c] sm:$0xf]
  %v2602 = vld [vmem:[%s2593 + $0x20] sm:$0xf]
  %v2603 = vld [vmem:[%s2593 + $0x24] sm:$0xf]
  %v2604 = vld [vmem:[%s2593 + $0x28] sm:$0xf]
  %v2605 = vld [vmem:[%s2593 + $0x2c] sm:$0xf]
  %v2606 = vld [vmem:[%s2593 + $0x30] sm:$0xf]
  %v2607 = vld [vmem:[%s2593 + $0x34] sm:$0xf]
  %v2608 = vld [vmem:[%s2593 + $0x38] sm:$0xf]
  %v2609 = vld [vmem:[%s2593 + $0x3c] sm:$0xf]
  %v2621 = vunpack.c.l.b16 %v2582
  %v2622 = vunpack.c.l.b16 %v2583
  %v2623 = vunpack.c.l.b16 %v2584
  %v2624 = vunpack.c.l.b16 %v2585
  %v2625 = vunpack.c.l.b16 %v2586
  %v2626 = vunpack.c.l.b16 %v2587
  %v2627 = vunpack.c.l.b16 %v2588
  %v2628 = vunpack.c.l.b16 %v2589
  %v2629 = vunpack.c.l.b16 %v2590
  %v2630 = vunpack.c.l.b16 %v2591
  %v2631 = vunpack.c.l.b16 %v2592
  %v2632 = vpack.c.b16 %v2622, %v2621
  %v2633 = vpack.c.b16 %v2624, %v2623
  %v2634 = vpack.c.b16 %v2626, %v2625
  %v2635 = vpack.c.b16 %v2628, %v2627
  %v2636 = vpack.c.b16 %v2630, %v2629
  %v2637 = vpack.c.b16 %v2631, %v2631
  %vm2638 = vsmask.f32 5376
  %v2640 = vshrl.u32 %v2632, 16
  %v2642 = vrot.slane %v2640, 2
  %v2643 = vshll.u32 %v2632, 16
  %v2645 = vrot.slane %v2643, 3
  %v2646 = vor.u32 %v2642, %v2645
  %v2648 = vshrl.u32 %v2633, 16
  %v2650 = vrot.slane %v2648, 2
  %v2651 = vshll.u32 %v2633, 16
  %v2653 = vrot.slane %v2651, 3
  %v2654 = vor.u32 %v2650, %v2653
  %v2655 = vsel %vm2638, %v2646, %v2654
  %v2657 = vshrl.u32 %v2634, 16
  %v2659 = vrot.slane %v2657, 2
  %v2660 = vshll.u32 %v2634, 16
  %v2662 = vrot.slane %v2660, 3
  %v2663 = vor.u32 %v2659, %v2662
  %v2664 = vsel %vm2638, %v2654, %v2663
  %v2666 = vshrl.u32 %v2635, 16
  %v2668 = vrot.slane %v2666, 2
  %v2669 = vshll.u32 %v2635, 16
  %v2671 = vrot.slane %v2669, 3
  %v2672 = vor.u32 %v2668, %v2671
  %v2673 = vsel %vm2638, %v2663, %v2672
  %v2675 = vshrl.u32 %v2636, 16
  %v2677 = vrot.slane %v2675, 2
  %v2678 = vshll.u32 %v2636, 16
  %v2680 = vrot.slane %v2678, 3
  %v2681 = vor.u32 %v2677, %v2680
  %v2682 = vsel %vm2638, %v2672, %v2681
  %v2684 = vshrl.u32 %v2637, 16
  %v2686 = vrot.slane %v2684, 2
  %v2687 = vshll.u32 %v2637, 16
  %v2689 = vrot.slane %v2687, 3
  %v2690 = vor.u32 %v2686, %v2689
  %v2691 = vsel %vm2638, %v2681, %v2690
  %v2713 = vunpack.c.l.b16 %v2594
  %v2714 = vunpack.c.l.b16 %v2595
  %v2715 = vunpack.c.l.b16 %v2596
  %v2716 = vunpack.c.l.b16 %v2597
  %v2717 = vunpack.c.l.b16 %v2598
  %v2718 = vunpack.c.l.b16 %v2599
  %v2719 = vunpack.c.l.b16 %v2600
  %v2720 = vunpack.c.l.b16 %v2601
  %v2721 = vunpack.c.l.b16 %v2602
  %v2722 = vunpack.c.l.b16 %v2603
  %v2723 = vunpack.c.l.b16 %v2604
  %v2724 = vunpack.c.l.b16 %v2605
  %v2725 = vunpack.c.l.b16 %v2606
  %v2726 = vunpack.c.l.b16 %v2607
  %v2727 = vunpack.c.l.b16 %v2608
  %v2728 = vunpack.c.l.b16 %v2609
  %v2729 = vpack.c.b16 %v2714, %v2713
  %v2730 = vpack.c.b16 %v2716, %v2715
  %v2731 = vpack.c.b16 %v2718, %v2717
  %v2732 = vpack.c.b16 %v2720, %v2719
  %v2733 = vpack.c.b16 %v2722, %v2721
  %v2734 = vpack.c.b16 %v2724, %v2723
  %v2735 = vpack.c.b16 %v2726, %v2725
  %v2736 = vpack.c.b16 %v2728, %v2727
  %2745 = vmatpush.bf16.msra.mxu0 %v2736
  %2746 = vmatpush.bf16.msra.mxu0 %v2735
  %2747 = vmatpush.bf16.msra.mxu0 %v2734
  %2748 = vmatpush.bf16.msra.mxu0 %v2733
  %2749 = vmatpush.bf16.msra.mxu0 %v2732
  %2750 = vmatpush.bf16.msra.mxu0 %v2731
  %2751 = vmatpush.bf16.msra.mxu0 %v2730
  %2752 = vmatpush.bf16.msra.mxu0 %v2729
  %2753 = vmatmul.bf16.gmra.mxu0 %v2655
  %v2754 = vpop.f32.mrf.mxu0
  %v2755 = vadd.f32 0.0, %v2754
  %v2756 = vpop.f32.mrf.mxu0
  %v2757 = vadd.f32 0.0, %v2756
  %2758 = vmatmul.bf16.gmra.mxu0 %v2664
  %v2759 = vpop.f32.mrf.mxu0
  %v2760 = vadd.f32 0.0, %v2759
  %v2761 = vpop.f32.mrf.mxu0
  %v2762 = vadd.f32 0.0, %v2761
  %2763 = vmatmul.bf16.gmra.mxu0 %v2673
  %v2764 = vpop.f32.mrf.mxu0
  %v2765 = vadd.f32 0.0, %v2764
  %v2766 = vpop.f32.mrf.mxu0
  %v2767 = vadd.f32 0.0, %v2766
  %2768 = vmatmul.bf16.gmra.mxu0 %v2682
  %v2769 = vpop.f32.mrf.mxu0
  %v2770 = vadd.f32 0.0, %v2769
  %v2771 = vpop.f32.mrf.mxu0
  %v2772 = vadd.f32 0.0, %v2771
  %2773 = vmatmul.bf16.gmra.mxu0 %v2691
  %v2774 = vpop.f32.mrf.mxu0
  %v2775 = vadd.f32 0.0, %v2774
  %v2776 = vpop.f32.mrf.mxu0
  %v2777 = vadd.f32 0.0, %v2776
  %2778 = vdwg.mxu0
  %v2779 = vadd.f32 %v2572, %v2755
  %v2780 = vadd.f32 %v2573, %v2757
  %v2781 = vadd.f32 %v2574, %v2760
  %v2782 = vadd.f32 %v2575, %v2762
  %v2783 = vadd.f32 %v2576, %v2765
  %v2784 = vadd.f32 %v2577, %v2767
  %v2785 = vadd.f32 %v2578, %v2770
  %v2786 = vadd.f32 %v2579, %v2772
  %v2787 = vadd.f32 %v2580, %v2775
  %v2788 = vadd.f32 %v2581, %v2777
  %2789 = vst [vmem:[#allocation4] sm:$0xff] %v2779
  %2790 = vst [vmem:[#allocation4 + $0x8] sm:$0xff] %v2780
  %2791 = vst [vmem:[#allocation4 + $0x10] sm:$0xff] %v2781
  %2792 = vst [vmem:[#allocation4 + $0x18] sm:$0xff] %v2782
  %2793 = vst [vmem:[#allocation4 + $0x20] sm:$0xff] %v2783
  %2794 = vst [vmem:[#allocation4 + $0x28] sm:$0xff] %v2784
  %2795 = vst [vmem:[#allocation4 + $0x30] sm:$0xff] %v2785
  %2796 = vst [vmem:[#allocation4 + $0x38] sm:$0xff] %v2786
  %2797 = vst [vmem:[#allocation4 + $0x40] sm:$0xff] %v2787
  %2798 = vst [vmem:[#allocation4 + $0x48] sm:$0xff] %v2788
  %v2799 = vld [vmem:[#allocation4] sm:$0xff]
  %v2800 = vld [vmem:[#allocation4 + $0x8] sm:$0xff]
  %v2801 = vld [vmem:[#allocation4 + $0x10] sm:$0xff]
  %v2802 = vld [vmem:[#allocation4 + $0x18] sm:$0xff]
  %v2803 = vld [vmem:[#allocation4 + $0x20] sm:$0xff]
  %v2804 = vld [vmem:[#allocation4 + $0x28] sm:$0xff]
  %v2805 = vld [vmem:[#allocation4 + $0x30] sm:$0xff]
  %v2806 = vld [vmem:[#allocation4 + $0x38] sm:$0xff]
  %v2807 = vld [vmem:[#allocation4 + $0x40] sm:$0xff]
  %v2808 = vld [vmem:[#allocation4 + $0x48] sm:$0xff]
  %v2809 = vld [vmem:[#allocation3 + $0x8] sm:$0x8]
  %v2810 = vld [vmem:[#allocation3 + $0xc] sm:$0xf]
  %v2811 = vld [vmem:[#allocation3 + $0x10] sm:$0xf]
  %v2812 = vld [vmem:[#allocation3 + $0x14] sm:$0xf]
  %v2813 = vld [vmem:[#allocation3 + $0x18] sm:$0xf]
  %v2814 = vld [vmem:[#allocation3 + $0x1c] sm:$0xf]
  %v2815 = vld [vmem:[#allocation3 + $0x20] sm:$0xf]
  %v2816 = vld [vmem:[#allocation3 + $0x24] sm:$0xf]
  %v2817 = vld [vmem:[#allocation3 + $0x28] sm:$0xf]
  %v2818 = vld [vmem:[#allocation3 + $0x2c] sm:$0xf]
  %v2819 = vld [vmem:[#allocation3 + $0x30] sm:$0x7]
  %s2820 = scalar_lea.vmem %s8, 512
  %v2821 = vld [vmem:[%s2820] sm:$0xf]
  %v2822 = vld [vmem:[%s2820 + $0x4] sm:$0xf]
  %v2823 = vld [vmem:[%s2820 + $0x8] sm:$0xf]
  %v2824 = vld [vmem:[%s2820 + $0xc] sm:$0xf]
  %v2825 = vld [vmem:[%s2820 + $0x10] sm:$0xf]
  %v2826 = vld [vmem:[%s2820 + $0x14] sm:$0xf]
  %v2827 = vld [vmem:[%s2820 + $0x18] sm:$0xf]
  %v2828 = vld [vmem:[%s2820 + $0x1c] sm:$0xf]
  %v2829 = vld [vmem:[%s2820 + $0x20] sm:$0xf]
  %v2830 = vld [vmem:[%s2820 + $0x24] sm:$0xf]
  %v2831 = vld [vmem:[%s2820 + $0x28] sm:$0xf]
  %v2832 = vld [vmem:[%s2820 + $0x2c] sm:$0xf]
  %v2833 = vld [vmem:[%s2820 + $0x30] sm:$0xf]
  %v2834 = vld [vmem:[%s2820 + $0x34] sm:$0xf]
  %v2835 = vld [vmem:[%s2820 + $0x38] sm:$0xf]
  %v2836 = vld [vmem:[%s2820 + $0x3c] sm:$0xf]
  %v2848 = vunpack.c.l.b16 %v2809
  %v2849 = vunpack.c.l.b16 %v2810
  %v2850 = vunpack.c.l.b16 %v2811
  %v2851 = vunpack.c.l.b16 %v2812
  %v2852 = vunpack.c.l.b16 %v2813
  %v2853 = vunpack.c.l.b16 %v2814
  %v2854 = vunpack.c.l.b16 %v2815
  %v2855 = vunpack.c.l.b16 %v2816
  %v2856 = vunpack.c.l.b16 %v2817
  %v2857 = vunpack.c.l.b16 %v2818
  %v2858 = vunpack.c.l.b16 %v2819
  %v2859 = vpack.c.b16 %v2849, %v2848
  %v2860 = vpack.c.b16 %v2851, %v2850
  %v2861 = vpack.c.b16 %v2853, %v2852
  %v2862 = vpack.c.b16 %v2855, %v2854
  %v2863 = vpack.c.b16 %v2857, %v2856
  %v2864 = vpack.c.b16 %v2858, %v2858
  %vm2865 = vcmask 1044480
  %v2866 = vrot.slane %v2859, 3
  %v2867 = vrot.slane %v2860, 3
  %v2868 = vsel %vm2865, %v2866, %v2867
  %v2869 = vrot.slane %v2861, 3
  %v2870 = vsel %vm2865, %v2867, %v2869
  %v2871 = vrot.slane %v2862, 3
  %v2872 = vsel %vm2865, %v2869, %v2871
  %v2873 = vrot.slane %v2863, 3
  %v2874 = vsel %vm2865, %v2871, %v2873
  %v2875 = vrot.slane %v2864, 3
  %v2876 = vsel %vm2865, %v2873, %v2875
  %v2898 = vunpack.c.l.b16 %v2821
  %v2899 = vunpack.c.l.b16 %v2822
  %v2900 = vunpack.c.l.b16 %v2823
  %v2901 = vunpack.c.l.b16 %v2824
  %v2902 = vunpack.c.l.b16 %v2825
  %v2903 = vunpack.c.l.b16 %v2826
  %v2904 = vunpack.c.l.b16 %v2827
  %v2905 = vunpack.c.l.b16 %v2828
  %v2906 = vunpack.c.l.b16 %v2829
  %v2907 = vunpack.c.l.b16 %v2830
  %v2908 = vunpack.c.l.b16 %v2831
  %v2909 = vunpack.c.l.b16 %v2832
  %v2910 = vunpack.c.l.b16 %v2833
  %v2911 = vunpack.c.l.b16 %v2834
  %v2912 = vunpack.c.l.b16 %v2835
  %v2913 = vunpack.c.l.b16 %v2836
  %v2914 = vpack.c.b16 %v2899, %v2898
  %v2915 = vpack.c.b16 %v2901, %v2900
  %v2916 = vpack.c.b16 %v2903, %v2902
  %v2917 = vpack.c.b16 %v2905, %v2904
  %v2918 = vpack.c.b16 %v2907, %v2906
  %v2919 = vpack.c.b16 %v2909, %v2908
  %v2920 = vpack.c.b16 %v2911, %v2910
  %v2921 = vpack.c.b16 %v2913, %v2912
  %2930 = vmatpush.bf16.msra.mxu0 %v2921
  %2931 = vmatpush.bf16.msra.mxu0 %v2920
  %2932 = vmatpush.bf16.msra.mxu0 %v2919
  %2933 = vmatpush.bf16.msra.mxu0 %v2918
  %2934 = vmatpush.bf16.msra.mxu0 %v2917
  %2935 = vmatpush.bf16.msra.mxu0 %v2916
  %2936 = vmatpush.bf16.msra.mxu0 %v2915
  %2937 = vmatpush.bf16.msra.mxu0 %v2914
  %2938 = vmatmul.bf16.gmra.mxu0 %v2868
  %v2939 = vpop.f32.mrf.mxu0
  %v2940 = vadd.f32 0.0, %v2939
  %v2941 = vpop.f32.mrf.mxu0
  %v2942 = vadd.f32 0.0, %v2941
  %2943 = vmatmul.bf16.gmra.mxu0 %v2870
  %v2944 = vpop.f32.mrf.mxu0
  %v2945 = vadd.f32 0.0, %v2944
  %v2946 = vpop.f32.mrf.mxu0
  %v2947 = vadd.f32 0.0, %v2946
  %2948 = vmatmul.bf16.gmra.mxu0 %v2872
  %v2949 = vpop.f32.mrf.mxu0
  %v2950 = vadd.f32 0.0, %v2949
  %v2951 = vpop.f32.mrf.mxu0
  %v2952 = vadd.f32 0.0, %v2951
  %2953 = vmatmul.bf16.gmra.mxu0 %v2874
  %v2954 = vpop.f32.mrf.mxu0
  %v2955 = vadd.f32 0.0, %v2954
  %v2956 = vpop.f32.mrf.mxu0
  %v2957 = vadd.f32 0.0, %v2956
  %2958 = vmatmul.bf16.gmra.mxu0 %v2876
  %v2959 = vpop.f32.mrf.mxu0
  %v2960 = vadd.f32 0.0, %v2959
  %v2961 = vpop.f32.mrf.mxu0
  %v2962 = vadd.f32 0.0, %v2961
  %2963 = vdwg.mxu0
  %v2964 = vadd.f32 %v2799, %v2940
  %v2965 = vadd.f32 %v2800, %v2942
  %v2966 = vadd.f32 %v2801, %v2945
  %v2967 = vadd.f32 %v2802, %v2947
  %v2968 = vadd.f32 %v2803, %v2950
  %v2969 = vadd.f32 %v2804, %v2952
  %v2970 = vadd.f32 %v2805, %v2955
  %v2971 = vadd.f32 %v2806, %v2957
  %v2972 = vadd.f32 %v2807, %v2960
  %v2973 = vadd.f32 %v2808, %v2962
  %2974 = vst [vmem:[#allocation4] sm:$0xff] %v2964
  %2975 = vst [vmem:[#allocation4 + $0x8] sm:$0xff] %v2965
  %2976 = vst [vmem:[#allocation4 + $0x10] sm:$0xff] %v2966
  %2977 = vst [vmem:[#allocation4 + $0x18] sm:$0xff] %v2967
  %2978 = vst [vmem:[#allocation4 + $0x20] sm:$0xff] %v2968
  %2979 = vst [vmem:[#allocation4 + $0x28] sm:$0xff] %v2969
  %2980 = vst [vmem:[#allocation4 + $0x30] sm:$0xff] %v2970
  %2981 = vst [vmem:[#allocation4 + $0x38] sm:$0xff] %v2971
  %2982 = vst [vmem:[#allocation4 + $0x40] sm:$0xff] %v2972
  %2983 = vst [vmem:[#allocation4 + $0x48] sm:$0xff] %v2973
  %v2984 = vld [vmem:[#allocation4] sm:$0xff]
  %v2985 = vld [vmem:[#allocation4 + $0x8] sm:$0xff]
  %v2986 = vld [vmem:[#allocation4 + $0x10] sm:$0xff]
  %v2987 = vld [vmem:[#allocation4 + $0x18] sm:$0xff]
  %v2988 = vld [vmem:[#allocation4 + $0x20] sm:$0xff]
  %v2989 = vld [vmem:[#allocation4 + $0x28] sm:$0xff]
  %v2990 = vld [vmem:[#allocation4 + $0x30] sm:$0xff]
  %v2991 = vld [vmem:[#allocation4 + $0x38] sm:$0xff]
  %v2992 = vld [vmem:[#allocation4 + $0x40] sm:$0xff]
  %v2993 = vld [vmem:[#allocation4 + $0x48] sm:$0xff]
  %2994 = vst [vmem:[%s10] sm:$0xff] %v2984
  %2995 = vst [vmem:[%s10 + $0x8] sm:$0xff] %v2985
  %2996 = vst [vmem:[%s10 + $0x10] sm:$0xff] %v2986
  %2997 = vst [vmem:[%s10 + $0x18] sm:$0xff] %v2987
  %2998 = vst [vmem:[%s10 + $0x20] sm:$0xff] %v2988
  %2999 = vst [vmem:[%s10 + $0x28] sm:$0xff] %v2989
  %3000 = vst [vmem:[%s10 + $0x30] sm:$0xff] %v2990
  %3001 = vst [vmem:[%s10 + $0x38] sm:$0xff] %v2991
  %3002 = vst [vmem:[%s10 + $0x40] sm:$0xff] %v2992
  %3003 = vst [vmem:[%s10 + $0x48] sm:$0xff] %v2993
  %s3004 = scalar_lea.vmem %s0, 96
  %v3005 = vld [vmem:[%s3004] sm:$0xff]
  %v3006 = vld [vmem:[%s3004 + $0x8] sm:$0xff]
  %v3007 = vld [vmem:[%s3004 + $0x10] sm:$0xff]
  %v3008 = vld [vmem:[%s3004 + $0x18] sm:$0xff]
  %v3009 = vld [vmem:[%s3004 + $0x20] sm:$0xff]
  %v3010 = vld [vmem:[%s3004 + $0x28] sm:$0xff]
  %v3011 = vld [vmem:[%s3004 + $0x30] sm:$0xff]
  %v3012 = vld [vmem:[%s3004 + $0x38] sm:$0xff]
  %v3013 = vld [vmem:[%s3004 + $0x40] sm:$0xff]
  %v3014 = vld [vmem:[%s3004 + $0x48] sm:$0xff]
  %v3015 = vld [vmem:[%s3004 + $0x50] sm:$0xff]
  %v3016 = vld [vmem:[%s3004 + $0x58] sm:$0xff]
  %v3017 = vld [vmem:[%s3] sm:$0x1]
  %v3019 = vperm.slane %v3017, 0
  %v3021 = vmul.f32 %v3005, %v3019
  %v3022 = vmul.f32 %v3006, %v3019
  %v3023 = vmul.f32 %v3007, %v3019
  %v3024 = vmul.f32 %v3008, %v3019
  %v3025 = vmul.f32 %v3009, %v3019
  %v3026 = vmul.f32 %v3010, %v3019
  %v3027 = vmul.f32 %v3011, %v3019
  %v3028 = vmul.f32 %v3012, %v3019
  %v3029 = vmul.f32 %v3013, %v3019
  %v3030 = vmul.f32 %v3014, %v3019
  %v3031 = vmul.f32 %v3015, %v3019
  %v3032 = vmul.f32 %v3016, %v3019
  %v3033 = vld [vmem:[%s4] sm:$0x1]
  %v3035 = vperm.slane %v3033, 0
  %v3037 = vadd.f32 %v3021, %v3035
  %v3038 = vadd.f32 %v3022, %v3035
  %v3039 = vadd.f32 %v3023, %v3035
  %v3040 = vadd.f32 %v3024, %v3035
  %v3041 = vadd.f32 %v3025, %v3035
  %v3042 = vadd.f32 %v3026, %v3035
  %v3043 = vadd.f32 %v3027, %v3035
  %v3044 = vadd.f32 %v3028, %v3035
  %v3045 = vadd.f32 %v3029, %v3035
  %v3046 = vadd.f32 %v3030, %v3035
  %v3047 = vadd.f32 %v3031, %v3035
  %v3048 = vadd.f32 %v3032, %v3035
  %v3049 = vmax.f32 %v3037, 0.0
  %v3050 = vmax.f32 %v3038, 0.0
  %v3051 = vmax.f32 %v3039, 0.0
  %v3052 = vmax.f32 %v3040, 0.0
  %v3053 = vmax.f32 %v3041, 0.0
  %v3054 = vmax.f32 %v3042, 0.0
  %v3055 = vmax.f32 %v3043, 0.0
  %v3056 = vmax.f32 %v3044, 0.0
  %v3057 = vmax.f32 %v3045, 0.0
  %v3058 = vmax.f32 %v3046, 0.0
  %v3059 = vmax.f32 %v3047, 0.0
  %v3060 = vmax.f32 %v3048, 0.0
  %v3061 = vld [vmem:[%s1] sm:$0xff]
  %v3062 = vld [vmem:[%s1 + $0x8] sm:$0xff]
  %v3063 = vld [vmem:[%s1 + $0x10] sm:$0xff]
  %v3064 = vld [vmem:[%s1 + $0x18] sm:$0xff]
  %v3065 = vld [vmem:[%s1 + $0x20] sm:$0xff]
  %v3066 = vld [vmem:[%s1 + $0x28] sm:$0xff]
  %v3067 = vld [vmem:[%s1 + $0x30] sm:$0xff]
  %v3068 = vld [vmem:[%s1 + $0x38] sm:$0xff]
  %v3069 = vld [vmem:[%s1 + $0x40] sm:$0xff]
  %v3070 = vld [vmem:[%s1 + $0x48] sm:$0xff]
  %v3071 = vld [vmem:[%s1 + $0x50] sm:$0xff]
  %v3072 = vld [vmem:[%s1 + $0x58] sm:$0xff]
  %3074 = vset.pattern.permute.xlu0 0
  %3075 = vperm.xlu0 %3074, %v3061
  %v3076 = vpop.permute.xlu0 %3075
  %3079 = vset.pattern.permute.xlu0 0
  %3080 = vperm.xlu0 %3079, %v3062
  %v3081 = vpop.permute.xlu0 %3080
  %3084 = vset.pattern.permute.xlu0 0
  %3085 = vperm.xlu0 %3084, %v3063
  %v3086 = vpop.permute.xlu0 %3085
  %3089 = vset.pattern.permute.xlu0 0
  %3090 = vperm.xlu0 %3089, %v3064
  %v3091 = vpop.permute.xlu0 %3090
  %3094 = vset.pattern.permute.xlu0 0
  %3095 = vperm.xlu0 %3094, %v3065
  %v3096 = vpop.permute.xlu0 %3095
  %3099 = vset.pattern.permute.xlu0 0
  %3100 = vperm.xlu0 %3099, %v3066
  %v3101 = vpop.permute.xlu0 %3100
  %3104 = vset.pattern.permute.xlu0 0
  %3105 = vperm.xlu0 %3104, %v3067
  %v3106 = vpop.permute.xlu0 %3105
  %3109 = vset.pattern.permute.xlu0 0
  %3110 = vperm.xlu0 %3109, %v3068
  %v3111 = vpop.permute.xlu0 %3110
  %3114 = vset.pattern.permute.xlu0 0
  %3115 = vperm.xlu0 %3114, %v3069
  %v3116 = vpop.permute.xlu0 %3115
  %3119 = vset.pattern.permute.xlu0 0
  %3120 = vperm.xlu0 %3119, %v3070
  %v3121 = vpop.permute.xlu0 %3120
  %3124 = vset.pattern.permute.xlu0 0
  %3125 = vperm.xlu0 %3124, %v3071
  %v3126 = vpop.permute.xlu0 %3125
  %3129 = vset.pattern.permute.xlu0 0
  %3130 = vperm.xlu0 %3129, %v3072
  %v3131 = vpop.permute.xlu0 %3130
  %v3133 = vmul.f32 %v3049, %v3076
  %v3134 = vmul.f32 %v3050, %v3081
  %v3135 = vmul.f32 %v3051, %v3086
  %v3136 = vmul.f32 %v3052, %v3091
  %v3137 = vmul.f32 %v3053, %v3096
  %v3138 = vmul.f32 %v3054, %v3101
  %v3139 = vmul.f32 %v3055, %v3106
  %v3140 = vmul.f32 %v3056, %v3111
  %v3141 = vmul.f32 %v3057, %v3116
  %v3142 = vmul.f32 %v3058, %v3121
  %v3143 = vmul.f32 %v3059, %v3126
  %v3144 = vmul.f32 %v3060, %v3131
  %v3145 = vpack.c.bf16 %v3133, %v3133
  %v3146 = vpack.c.bf16 %v3134, %v3134
  %v3147 = vpack.c.bf16 %v3135, %v3135
  %v3148 = vpack.c.bf16 %v3136, %v3136
  %v3149 = vpack.c.bf16 %v3137, %v3137
  %v3150 = vpack.c.bf16 %v3138, %v3138
  %v3151 = vpack.c.bf16 %v3139, %v3139
  %v3152 = vpack.c.bf16 %v3140, %v3140
  %v3153 = vpack.c.bf16 %v3141, %v3141
  %v3154 = vpack.c.bf16 %v3142, %v3142
  %v3155 = vpack.c.bf16 %v3143, %v3143
  %v3156 = vpack.c.bf16 %v3144, %v3144
  %3157 = vst.msk [vmem:[#allocation2] sm:$0xf] %vm188, %v3145
  %3158 = vst.msk [vmem:[#allocation2 + $0x4] sm:$0xf] %vm188, %v3146
  %3159 = vst.msk [vmem:[#allocation2 + $0x8] sm:$0xf] %vm188, %v3147
  %3160 = vst.msk [vmem:[#allocation2 + $0xc] sm:$0xf] %vm188, %v3148
  %3161 = vst.msk [vmem:[#allocation2 + $0x10] sm:$0xf] %vm188, %v3149
  %3162 = vst.msk [vmem:[#allocation2 + $0x14] sm:$0xf] %vm188, %v3150
  %3163 = vst.msk [vmem:[#allocation2 + $0x18] sm:$0xf] %vm188, %v3151
  %3164 = vst.msk [vmem:[#allocation2 + $0x1c] sm:$0xf] %vm188, %v3152
  %3165 = vst.msk [vmem:[#allocation2 + $0x20] sm:$0xf] %vm188, %v3153
  %3166 = vst.msk [vmem:[#allocation2 + $0x24] sm:$0xf] %vm188, %v3154
  %3167 = vst.msk [vmem:[#allocation2 + $0x28] sm:$0xf] %vm188, %v3155
  %3168 = vst.msk [vmem:[#allocation2 + $0x2c] sm:$0xf] %vm188, %v3156
  %v3169 = vld [vmem:[#allocation2] sm:$0xf]
  %v3170 = vld [vmem:[#allocation2 + $0x4] sm:$0xf]
  %v3171 = vld [vmem:[#allocation2 + $0x8] sm:$0xf]
  %v3172 = vld [vmem:[#allocation2 + $0xc] sm:$0xf]
  %v3173 = vld [vmem:[#allocation2 + $0x10] sm:$0xf]
  %v3174 = vld [vmem:[#allocation2 + $0x14] sm:$0xf]
  %v3175 = vld [vmem:[#allocation2 + $0x18] sm:$0xf]
  %v3176 = vld [vmem:[#allocation2 + $0x1c] sm:$0xf]
  %v3177 = vld [vmem:[#allocation2 + $0x20] sm:$0xf]
  %v3178 = vld [vmem:[#allocation2 + $0x24] sm:$0xf]
  %v3179 = vld [vmem:[%s5] sm:$0xf]
  %v3180 = vld [vmem:[%s5 + $0x4] sm:$0xf]
  %v3191 = vunpack.c.l.b16 %v3169
  %v3192 = vunpack.c.l.b16 %v3170
  %v3193 = vunpack.c.l.b16 %v3171
  %v3194 = vunpack.c.l.b16 %v3172
  %v3195 = vunpack.c.l.b16 %v3173
  %v3196 = vunpack.c.l.b16 %v3174
  %v3197 = vunpack.c.l.b16 %v3175
  %v3198 = vunpack.c.l.b16 %v3176
  %v3199 = vunpack.c.l.b16 %v3177
  %v3200 = vunpack.c.l.b16 %v3178
  %v3201 = vpack.c.b16 %v3192, %v3191
  %v3202 = vpack.c.b16 %v3194, %v3193
  %v3203 = vpack.c.b16 %v3196, %v3195
  %v3204 = vpack.c.b16 %v3198, %v3197
  %v3205 = vpack.c.b16 %v3200, %v3199
  %v3208 = vunpack.c.l.b16 %v3179
  %v3209 = vunpack.c.l.b16 %v3180
  %v3210 = vpack.c.b16 %v3209, %v3208
  %v3213 = vsel %vm244, %v3201, 0
  %v3216 = vsel %vm244, %v3202, 0
  %v3219 = vsel %vm244, %v3203, 0
  %v3222 = vsel %vm244, %v3204, 0
  %v3225 = vsel %vm244, %v3205, 0
  %3227 = vmatpush.bf16.msra.mxu0 0
  %3228 = vmatpush.bf16.msra.mxu0 0
  %3229 = vmatpush.bf16.msra.mxu0 0
  %3230 = vmatpush.bf16.msra.mxu0 0
  %3231 = vmatpush.bf16.msra.mxu0 0
  %3232 = vmatpush.bf16.msra.mxu0 0
  %3233 = vmatpush.bf16.msra.mxu0 0
  %3234 = vmatpush.bf16.msra.mxu0 %v3210
  %3235 = vmatmul.bf16.gmra.mxu0 %v3213
  %v3236 = vpop.f32.mrf.mxu0
  %v3237 = vadd.f32 0.0, %v3236
  %v3238 = vpop.f32.mrf.mxu0
  %v3239 = vadd.f32 0.0, %v3238
  %3240 = vmatmul.bf16.gmra.mxu0 %v3216
  %v3241 = vpop.f32.mrf.mxu0
  %v3242 = vadd.f32 0.0, %v3241
  %v3243 = vpop.f32.mrf.mxu0
  %v3244 = vadd.f32 0.0, %v3243
  %3245 = vmatmul.bf16.gmra.mxu0 %v3219
  %v3246 = vpop.f32.mrf.mxu0
  %v3247 = vadd.f32 0.0, %v3246
  %v3248 = vpop.f32.mrf.mxu0
  %v3249 = vadd.f32 0.0, %v3248
  %3250 = vmatmul.bf16.gmra.mxu0 %v3222
  %v3251 = vpop.f32.mrf.mxu0
  %v3252 = vadd.f32 0.0, %v3251
  %v3253 = vpop.f32.mrf.mxu0
  %v3254 = vadd.f32 0.0, %v3253
  %3255 = vmatmul.bf16.gmra.mxu0 %v3225
  %v3256 = vpop.f32.mrf.mxu0
  %v3257 = vadd.f32 0.0, %v3256
  %v3258 = vpop.f32.mrf.mxu0
  %v3259 = vadd.f32 0.0, %v3258
  %3260 = vdwg.mxu0
  %3261 = vst [vmem:[#allocation4] sm:$0xff] %v3237
  %3262 = vst [vmem:[#allocation4 + $0x8] sm:$0xff] %v3239
  %3263 = vst [vmem:[#allocation4 + $0x10] sm:$0xff] %v3242
  %3264 = vst [vmem:[#allocation4 + $0x18] sm:$0xff] %v3244
  %3265 = vst [vmem:[#allocation4 + $0x20] sm:$0xff] %v3247
  %3266 = vst [vmem:[#allocation4 + $0x28] sm:$0xff] %v3249
  %3267 = vst [vmem:[#allocation4 + $0x30] sm:$0xff] %v3252
  %3268 = vst [vmem:[#allocation4 + $0x38] sm:$0xff] %v3254
  %3269 = vst [vmem:[#allocation4 + $0x40] sm:$0xff] %v3257
  %3270 = vst [vmem:[#allocation4 + $0x48] sm:$0xff] %v3259
  %v3271 = vld [vmem:[#allocation2] sm:$0xf]
  %v3272 = vld [vmem:[#allocation2 + $0x4] sm:$0xf]
  %v3273 = vld [vmem:[#allocation2 + $0x8] sm:$0xf]
  %v3274 = vld [vmem:[#allocation2 + $0xc] sm:$0xf]
  %v3275 = vld [vmem:[#allocation2 + $0x10] sm:$0xf]
  %v3276 = vld [vmem:[#allocation2 + $0x14] sm:$0xf]
  %v3277 = vld [vmem:[#allocation2 + $0x18] sm:$0xf]
  %v3278 = vld [vmem:[#allocation2 + $0x1c] sm:$0xf]
  %v3279 = vld [vmem:[#allocation2 + $0x20] sm:$0xf]
  %v3280 = vld [vmem:[#allocation2 + $0x24] sm:$0xf]
  %v3281 = vld [vmem:[#allocation2 + $0x28] sm:$0x1]
  %v3282 = vld [vmem:[%s315] sm:$0xf]
  %v3283 = vld [vmem:[%s315 + $0x4] sm:$0xf]
  %v3295 = vunpack.c.l.b16 %v3271
  %v3296 = vunpack.c.l.b16 %v3272
  %v3297 = vunpack.c.l.b16 %v3273
  %v3298 = vunpack.c.l.b16 %v3274
  %v3299 = vunpack.c.l.b16 %v3275
  %v3300 = vunpack.c.l.b16 %v3276
  %v3301 = vunpack.c.l.b16 %v3277
  %v3302 = vunpack.c.l.b16 %v3278
  %v3303 = vunpack.c.l.b16 %v3279
  %v3304 = vunpack.c.l.b16 %v3280
  %v3305 = vunpack.c.l.b16 %v3281
  %v3306 = vpack.c.b16 %v3296, %v3295
  %v3307 = vpack.c.b16 %v3298, %v3297
  %v3308 = vpack.c.b16 %v3300, %v3299
  %v3309 = vpack.c.b16 %v3302, %v3301
  %v3310 = vpack.c.b16 %v3304, %v3303
  %v3311 = vpack.c.b16 %v3305, %v3305
  %v3313 = vshrl.u32 %v3306, 16
  %v3315 = vshll.u32 %v3306, 16
  %v3317 = vrot.slane %v3315, 1
  %v3318 = vor.u32 %v3313, %v3317
  %v3320 = vshll.u32 %v3307, 16
  %v3322 = vrot.slane %v3320, 1
  %v3323 = vsel %vm346, %v3318, %v3322
  %v3324 = vshrl.u32 %v3307, 16
  %v3326 = vor.u32 %v3324, %v3322
  %v3328 = vshll.u32 %v3308, 16
  %v3330 = vrot.slane %v3328, 1
  %v3331 = vsel %vm346, %v3326, %v3330
  %v3332 = vshrl.u32 %v3308, 16
  %v3334 = vor.u32 %v3332, %v3330
  %v3336 = vshll.u32 %v3309, 16
  %v3338 = vrot.slane %v3336, 1
  %v3339 = vsel %vm346, %v3334, %v3338
  %v3340 = vshrl.u32 %v3309, 16
  %v3342 = vor.u32 %v3340, %v3338
  %v3344 = vshll.u32 %v3310, 16
  %v3346 = vrot.slane %v3344, 1
  %v3347 = vsel %vm346, %v3342, %v3346
  %v3348 = vshrl.u32 %v3310, 16
  %v3350 = vor.u32 %v3348, %v3346
  %v3352 = vshll.u32 %v3311, 16
  %v3354 = vrot.slane %v3352, 1
  %v3355 = vsel %vm346, %v3350, %v3354
  %v3358 = vunpack.c.l.b16 %v3282
  %v3359 = vunpack.c.l.b16 %v3283
  %v3360 = vpack.c.b16 %v3359, %v3358
  %v3363 = vsel %vm244, %v3323, 0
  %v3366 = vsel %vm244, %v3331, 0
  %v3369 = vsel %vm244, %v3339, 0
  %v3372 = vsel %vm244, %v3347, 0
  %v3375 = vsel %vm244, %v3355, 0
  %3377 = vmatpush.bf16.msra.mxu0 0
  %3378 = vmatpush.bf16.msra.mxu0 0
  %3379 = vmatpush.bf16.msra.mxu0 0
  %3380 = vmatpush.bf16.msra.mxu0 0
  %3381 = vmatpush.bf16.msra.mxu0 0
  %3382 = vmatpush.bf16.msra.mxu0 0
  %3383 = vmatpush.bf16.msra.mxu0 0
  %3384 = vmatpush.bf16.msra.mxu0 %v3360
  %3385 = vmatmul.bf16.gmra.mxu0 %v3363
  %v3386 = vpop.f32.mrf.mxu0
  %v3387 = vadd.f32 0.0, %v3386
  %v3388 = vpop.f32.mrf.mxu0
  %v3389 = vadd.f32 0.0, %v3388
  %3390 = vmatmul.bf16.gmra.mxu0 %v3366
  %v3391 = vpop.f32.mrf.mxu0
  %v3392 = vadd.f32 0.0, %v3391
  %v3393 = vpop.f32.mrf.mxu0
  %v3394 = vadd.f32 0.0, %v3393
  %3395 = vmatmul.bf16.gmra.mxu0 %v3369
  %v3396 = vpop.f32.mrf.mxu0
  %v3397 = vadd.f32 0.0, %v3396
  %v3398 = vpop.f32.mrf.mxu0
  %v3399 = vadd.f32 0.0, %v3398
  %3400 = vmatmul.bf16.gmra.mxu0 %v3372
  %v3401 = vpop.f32.mrf.mxu0
  %v3402 = vadd.f32 0.0, %v3401
  %v3403 = vpop.f32.mrf.mxu0
  %v3404 = vadd.f32 0.0, %v3403
  %3405 = vmatmul.bf16.gmra.mxu0 %v3375
  %v3406 = vpop.f32.mrf.mxu0
  %v3407 = vadd.f32 0.0, %v3406
  %v3408 = vpop.f32.mrf.mxu0
  %v3409 = vadd.f32 0.0, %v3408
  %3410 = vdwg.mxu0
  %v3411 = vld [vmem:[#allocation4] sm:$0xff]
  %v3412 = vld [vmem:[#allocation4 + $0x8] sm:$0xff]
  %v3413 = vld [vmem:[#allocation4 + $0x10] sm:$0xff]
  %v3414 = vld [vmem:[#allocation4 + $0x18] sm:$0xff]
  %v3415 = vld [vmem:[#allocation4 + $0x20] sm:$0xff]
  %v3416 = vld [vmem:[#allocation4 + $0x28] sm:$0xff]
  %v3417 = vld [vmem:[#allocation4 + $0x30] sm:$0xff]
  %v3418 = vld [vmem:[#allocation4 + $0x38] sm:$0xff]
  %v3419 = vld [vmem:[#allocation4 + $0x40] sm:$0xff]
  %v3420 = vld [vmem:[#allocation4 + $0x48] sm:$0xff]
  %v3421 = vadd.f32 %v3411, %v3387
  %v3422 = vadd.f32 %v3412, %v3389
  %v3423 = vadd.f32 %v3413, %v3392
  %v3424 = vadd.f32 %v3414, %v3394
  %v3425 = vadd.f32 %v3415, %v3397
  %v3426 = vadd.f32 %v3416, %v3399
  %v3427 = vadd.f32 %v3417, %v3402
  %v3428 = vadd.f32 %v3418, %v3404
  %v3429 = vadd.f32 %v3419, %v3407
  %v3430 = vadd.f32 %v3420, %v3409
  %3431 = vst [vmem:[#allocation4] sm:$0xff] %v3421
  %3432 = vst [vmem:[#allocation4 + $0x8] sm:$0xff] %v3422
  %3433 = vst [vmem:[#allocation4 + $0x10] sm:$0xff] %v3423
  %3434 = vst [vmem:[#allocation4 + $0x18] sm:$0xff] %v3424
  %3435 = vst [vmem:[#allocation4 + $0x20] sm:$0xff] %v3425
  %3436 = vst [vmem:[#allocation4 + $0x28] sm:$0xff] %v3426
  %3437 = vst [vmem:[#allocation4 + $0x30] sm:$0xff] %v3427
  %3438 = vst [vmem:[#allocation4 + $0x38] sm:$0xff] %v3428
  %3439 = vst [vmem:[#allocation4 + $0x40] sm:$0xff] %v3429
  %3440 = vst [vmem:[#allocation4 + $0x48] sm:$0xff] %v3430
  %v3441 = vld [vmem:[#allocation2 + $0x4] sm:$0xe]
  %v3442 = vld [vmem:[#allocation2 + $0x8] sm:$0xf]
  %v3443 = vld [vmem:[#allocation2 + $0xc] sm:$0xf]
  %v3444 = vld [vmem:[#allocation2 + $0x10] sm:$0xf]
  %v3445 = vld [vmem:[#allocation2 + $0x14] sm:$0xf]
  %v3446 = vld [vmem:[#allocation2 + $0x18] sm:$0xf]
  %v3447 = vld [vmem:[#allocation2 + $0x1c] sm:$0xf]
  %v3448 = vld [vmem:[#allocation2 + $0x20] sm:$0xf]
  %v3449 = vld [vmem:[#allocation2 + $0x24] sm:$0xf]
  %v3450 = vld [vmem:[#allocation2 + $0x28] sm:$0xf]
  %v3451 = vld [vmem:[#allocation2 + $0x2c] sm:$0x1]
  %v3452 = vld [vmem:[%s487] sm:$0xf]
  %v3453 = vld [vmem:[%s487 + $0x4] sm:$0xf]
  %v3465 = vunpack.c.l.b16 %v3441
  %v3466 = vunpack.c.l.b16 %v3442
  %v3467 = vunpack.c.l.b16 %v3443
  %v3468 = vunpack.c.l.b16 %v3444
  %v3469 = vunpack.c.l.b16 %v3445
  %v3470 = vunpack.c.l.b16 %v3446
  %v3471 = vunpack.c.l.b16 %v3447
  %v3472 = vunpack.c.l.b16 %v3448
  %v3473 = vunpack.c.l.b16 %v3449
  %v3474 = vunpack.c.l.b16 %v3450
  %v3475 = vunpack.c.l.b16 %v3451
  %v3476 = vpack.c.b16 %v3466, %v3465
  %v3477 = vpack.c.b16 %v3468, %v3467
  %v3478 = vpack.c.b16 %v3470, %v3469
  %v3479 = vpack.c.b16 %v3472, %v3471
  %v3480 = vpack.c.b16 %v3474, %v3473
  %v3481 = vpack.c.b16 %v3475, %v3475
  %v3482 = vrot.slane %v3476, 1
  %v3483 = vrot.slane %v3477, 1
  %v3484 = vsel %vm518, %v3482, %v3483
  %v3485 = vrot.slane %v3478, 1
  %v3486 = vsel %vm518, %v3483, %v3485
  %v3487 = vrot.slane %v3479, 1
  %v3488 = vsel %vm518, %v3485, %v3487
  %v3489 = vrot.slane %v3480, 1
  %v3490 = vsel %vm518, %v3487, %v3489
  %v3491 = vrot.slane %v3481, 1
  %v3492 = vsel %vm518, %v3489, %v3491
  %v3495 = vunpack.c.l.b16 %v3452
  %v3496 = vunpack.c.l.b16 %v3453
  %v3497 = vpack.c.b16 %v3496, %v3495
  %v3500 = vsel %vm244, %v3484, 0
  %v3503 = vsel %vm244, %v3486, 0
  %v3506 = vsel %vm244, %v3488, 0
  %v3509 = vsel %vm244, %v3490, 0
  %v3512 = vsel %vm244, %v3492, 0
  %3514 = vmatpush.bf16.msra.mxu0 0
  %3515 = vmatpush.bf16.msra.mxu0 0
  %3516 = vmatpush.bf16.msra.mxu0 0
  %3517 = vmatpush.bf16.msra.mxu0 0
  %3518 = vmatpush.bf16.msra.mxu0 0
  %3519 = vmatpush.bf16.msra.mxu0 0
  %3520 = vmatpush.bf16.msra.mxu0 0
  %3521 = vmatpush.bf16.msra.mxu0 %v3497
  %3522 = vmatmul.bf16.gmra.mxu0 %v3500
  %v3523 = vpop.f32.mrf.mxu0
  %v3524 = vadd.f32 0.0, %v3523
  %v3525 = vpop.f32.mrf.mxu0
  %v3526 = vadd.f32 0.0, %v3525
  %3527 = vmatmul.bf16.gmra.mxu0 %v3503
  %v3528 = vpop.f32.mrf.mxu0
  %v3529 = vadd.f32 0.0, %v3528
  %v3530 = vpop.f32.mrf.mxu0
  %v3531 = vadd.f32 0.0, %v3530
  %3532 = vmatmul.bf16.gmra.mxu0 %v3506
  %v3533 = vpop.f32.mrf.mxu0
  %v3534 = vadd.f32 0.0, %v3533
  %v3535 = vpop.f32.mrf.mxu0
  %v3536 = vadd.f32 0.0, %v3535
  %3537 = vmatmul.bf16.gmra.mxu0 %v3509
  %v3538 = vpop.f32.mrf.mxu0
  %v3539 = vadd.f32 0.0, %v3538
  %v3540 = vpop.f32.mrf.mxu0
  %v3541 = vadd.f32 0.0, %v3540
  %3542 = vmatmul.bf16.gmra.mxu0 %v3512
  %v3543 = vpop.f32.mrf.mxu0
  %v3544 = vadd.f32 0.0, %v3543
  %v3545 = vpop.f32.mrf.mxu0
  %v3546 = vadd.f32 0.0, %v3545
  %3547 = vdwg.mxu0
  %v3548 = vld [vmem:[#allocation4] sm:$0xff]
  %v3549 = vld [vmem:[#allocation4 + $0x8] sm:$0xff]
  %v3550 = vld [vmem:[#allocation4 + $0x10] sm:$0xff]
  %v3551 = vld [vmem:[#allocation4 + $0x18] sm:$0xff]
  %v3552 = vld [vmem:[#allocation4 + $0x20] sm:$0xff]
  %v3553 = vld [vmem:[#allocation4 + $0x28] sm:$0xff]
  %v3554 = vld [vmem:[#allocation4 + $0x30] sm:$0xff]
  %v3555 = vld [vmem:[#allocation4 + $0x38] sm:$0xff]
  %v3556 = vld [vmem:[#allocation4 + $0x40] sm:$0xff]
  %v3557 = vld [vmem:[#allocation4 + $0x48] sm:$0xff]
  %v3558 = vadd.f32 %v3548, %v3524
  %v3559 = vadd.f32 %v3549, %v3526
  %v3560 = vadd.f32 %v3550, %v3529
  %v3561 = vadd.f32 %v3551, %v3531
  %v3562 = vadd.f32 %v3552, %v3534
  %v3563 = vadd.f32 %v3553, %v3536
  %v3564 = vadd.f32 %v3554, %v3539
  %v3565 = vadd.f32 %v3555, %v3541
  %v3566 = vadd.f32 %v3556, %v3544
  %v3567 = vadd.f32 %v3557, %v3546
  %3568 = vst [vmem:[#allocation4] sm:$0xff] %v3558
  %3569 = vst [vmem:[#allocation4 + $0x8] sm:$0xff] %v3559
  %3570 = vst [vmem:[#allocation4 + $0x10] sm:$0xff] %v3560
  %3571 = vst [vmem:[#allocation4 + $0x18] sm:$0xff] %v3561
  %3572 = vst [vmem:[#allocation4 + $0x20] sm:$0xff] %v3562
  %3573 = vst [vmem:[#allocation4 + $0x28] sm:$0xff] %v3563
  %3574 = vst [vmem:[#allocation4 + $0x30] sm:$0xff] %v3564
  %3575 = vst [vmem:[#allocation4 + $0x38] sm:$0xff] %v3565
  %3576 = vst [vmem:[#allocation4 + $0x40] sm:$0xff] %v3566
  %3577 = vst [vmem:[#allocation4 + $0x48] sm:$0xff] %v3567
  %v3578 = vld [vmem:[#allocation2 + $0x4] sm:$0xe]
  %v3579 = vld [vmem:[#allocation2 + $0x8] sm:$0xf]
  %v3580 = vld [vmem:[#allocation2 + $0xc] sm:$0xf]
  %v3581 = vld [vmem:[#allocation2 + $0x10] sm:$0xf]
  %v3582 = vld [vmem:[#allocation2 + $0x14] sm:$0xf]
  %v3583 = vld [vmem:[#allocation2 + $0x18] sm:$0xf]
  %v3584 = vld [vmem:[#allocation2 + $0x1c] sm:$0xf]
  %v3585 = vld [vmem:[#allocation2 + $0x20] sm:$0xf]
  %v3586 = vld [vmem:[#allocation2 + $0x24] sm:$0xf]
  %v3587 = vld [vmem:[#allocation2 + $0x28] sm:$0xf]
  %v3588 = vld [vmem:[#allocation2 + $0x2c] sm:$0x3]
  %v3589 = vld [vmem:[%s626] sm:$0xf]
  %v3590 = vld [vmem:[%s626 + $0x4] sm:$0xf]
  %v3602 = vunpack.c.l.b16 %v3578
  %v3603 = vunpack.c.l.b16 %v3579
  %v3604 = vunpack.c.l.b16 %v3580
  %v3605 = vunpack.c.l.b16 %v3581
  %v3606 = vunpack.c.l.b16 %v3582
  %v3607 = vunpack.c.l.b16 %v3583
  %v3608 = vunpack.c.l.b16 %v3584
  %v3609 = vunpack.c.l.b16 %v3585
  %v3610 = vunpack.c.l.b16 %v3586
  %v3611 = vunpack.c.l.b16 %v3587
  %v3612 = vunpack.c.l.b16 %v3588
  %v3613 = vpack.c.b16 %v3603, %v3602
  %v3614 = vpack.c.b16 %v3605, %v3604
  %v3615 = vpack.c.b16 %v3607, %v3606
  %v3616 = vpack.c.b16 %v3609, %v3608
  %v3617 = vpack.c.b16 %v3611, %v3610
  %v3618 = vpack.c.b16 %v3612, %v3612
  %v3620 = vshrl.u32 %v3613, 16
  %v3622 = vrot.slane %v3620, 1
  %v3623 = vshll.u32 %v3613, 16
  %v3625 = vrot.slane %v3623, 2
  %v3626 = vor.u32 %v3622, %v3625
  %v3628 = vshrl.u32 %v3614, 16
  %v3630 = vrot.slane %v3628, 1
  %v3631 = vshll.u32 %v3614, 16
  %v3633 = vrot.slane %v3631, 2
  %v3634 = vor.u32 %v3630, %v3633
  %v3635 = vsel %vm657, %v3626, %v3634
  %v3637 = vshrl.u32 %v3615, 16
  %v3639 = vrot.slane %v3637, 1
  %v3640 = vshll.u32 %v3615, 16
  %v3642 = vrot.slane %v3640, 2
  %v3643 = vor.u32 %v3639, %v3642
  %v3644 = vsel %vm657, %v3634, %v3643
  %v3646 = vshrl.u32 %v3616, 16
  %v3648 = vrot.slane %v3646, 1
  %v3649 = vshll.u32 %v3616, 16
  %v3651 = vrot.slane %v3649, 2
  %v3652 = vor.u32 %v3648, %v3651
  %v3653 = vsel %vm657, %v3643, %v3652
  %v3655 = vshrl.u32 %v3617, 16
  %v3657 = vrot.slane %v3655, 1
  %v3658 = vshll.u32 %v3617, 16
  %v3660 = vrot.slane %v3658, 2
  %v3661 = vor.u32 %v3657, %v3660
  %v3662 = vsel %vm657, %v3652, %v3661
  %v3664 = vshrl.u32 %v3618, 16
  %v3666 = vrot.slane %v3664, 1
  %v3667 = vshll.u32 %v3618, 16
  %v3669 = vrot.slane %v3667, 2
  %v3670 = vor.u32 %v3666, %v3669
  %v3671 = vsel %vm657, %v3661, %v3670
  %v3674 = vunpack.c.l.b16 %v3589
  %v3675 = vunpack.c.l.b16 %v3590
  %v3676 = vpack.c.b16 %v3675, %v3674
  %v3679 = vsel %vm244, %v3635, 0
  %v3682 = vsel %vm244, %v3644, 0
  %v3685 = vsel %vm244, %v3653, 0
  %v3688 = vsel %vm244, %v3662, 0
  %v3691 = vsel %vm244, %v3671, 0
  %3693 = vmatpush.bf16.msra.mxu0 0
  %3694 = vmatpush.bf16.msra.mxu0 0
  %3695 = vmatpush.bf16.msra.mxu0 0
  %3696 = vmatpush.bf16.msra.mxu0 0
  %3697 = vmatpush.bf16.msra.mxu0 0
  %3698 = vmatpush.bf16.msra.mxu0 0
  %3699 = vmatpush.bf16.msra.mxu0 0
  %3700 = vmatpush.bf16.msra.mxu0 %v3676
  %3701 = vmatmul.bf16.gmra.mxu0 %v3679
  %v3702 = vpop.f32.mrf.mxu0
  %v3703 = vadd.f32 0.0, %v3702
  %v3704 = vpop.f32.mrf.mxu0
  %v3705 = vadd.f32 0.0, %v3704
  %3706 = vmatmul.bf16.gmra.mxu0 %v3682
  %v3707 = vpop.f32.mrf.mxu0
  %v3708 = vadd.f32 0.0, %v3707
  %v3709 = vpop.f32.mrf.mxu0
  %v3710 = vadd.f32 0.0, %v3709
  %3711 = vmatmul.bf16.gmra.mxu0 %v3685
  %v3712 = vpop.f32.mrf.mxu0
  %v3713 = vadd.f32 0.0, %v3712
  %v3714 = vpop.f32.mrf.mxu0
  %v3715 = vadd.f32 0.0, %v3714
  %3716 = vmatmul.bf16.gmra.mxu0 %v3688
  %v3717 = vpop.f32.mrf.mxu0
  %v3718 = vadd.f32 0.0, %v3717
  %v3719 = vpop.f32.mrf.mxu0
  %v3720 = vadd.f32 0.0, %v3719
  %3721 = vmatmul.bf16.gmra.mxu0 %v3691
  %v3722 = vpop.f32.mrf.mxu0
  %v3723 = vadd.f32 0.0, %v3722
  %v3724 = vpop.f32.mrf.mxu0
  %v3725 = vadd.f32 0.0, %v3724
  %3726 = vdwg.mxu0
  %v3727 = vld [vmem:[#allocation4] sm:$0xff]
  %v3728 = vld [vmem:[#allocation4 + $0x8] sm:$0xff]
  %v3729 = vld [vmem:[#allocation4 + $0x10] sm:$0xff]
  %v3730 = vld [vmem:[#allocation4 + $0x18] sm:$0xff]
  %v3731 = vld [vmem:[#allocation4 + $0x20] sm:$0xff]
  %v3732 = vld [vmem:[#allocation4 + $0x28] sm:$0xff]
  %v3733 = vld [vmem:[#allocation4 + $0x30] sm:$0xff]
  %v3734 = vld [vmem:[#allocation4 + $0x38] sm:$0xff]
  %v3735 = vld [vmem:[#allocation4 + $0x40] sm:$0xff]
  %v3736 = vld [vmem:[#allocation4 + $0x48] sm:$0xff]
  %v3737 = vadd.f32 %v3727, %v3703
  %v3738 = vadd.f32 %v3728, %v3705
  %v3739 = vadd.f32 %v3729, %v3708
  %v3740 = vadd.f32 %v3730, %v3710
  %v3741 = vadd.f32 %v3731, %v3713
  %v3742 = vadd.f32 %v3732, %v3715
  %v3743 = vadd.f32 %v3733, %v3718
  %v3744 = vadd.f32 %v3734, %v3720
  %v3745 = vadd.f32 %v3735, %v3723
  %v3746 = vadd.f32 %v3736, %v3725
  %3747 = vst [vmem:[#allocation4] sm:$0xff] %v3737
  %3748 = vst [vmem:[#allocation4 + $0x8] sm:$0xff] %v3738
  %3749 = vst [vmem:[#allocation4 + $0x10] sm:$0xff] %v3739
  %3750 = vst [vmem:[#allocation4 + $0x18] sm:$0xff] %v3740
  %3751 = vst [vmem:[#allocation4 + $0x20] sm:$0xff] %v3741
  %3752 = vst [vmem:[#allocation4 + $0x28] sm:$0xff] %v3742
  %3753 = vst [vmem:[#allocation4 + $0x30] sm:$0xff] %v3743
  %3754 = vst [vmem:[#allocation4 + $0x38] sm:$0xff] %v3744
  %3755 = vst [vmem:[#allocation4 + $0x40] sm:$0xff] %v3745
  %3756 = vst [vmem:[#allocation4 + $0x48] sm:$0xff] %v3746
  %v3757 = vld [vmem:[#allocation4] sm:$0xff]
  %v3758 = vld [vmem:[#allocation4 + $0x8] sm:$0xff]
  %v3759 = vld [vmem:[#allocation4 + $0x10] sm:$0xff]
  %v3760 = vld [vmem:[#allocation4 + $0x18] sm:$0xff]
  %v3761 = vld [vmem:[#allocation4 + $0x20] sm:$0xff]
  %v3762 = vld [vmem:[#allocation4 + $0x28] sm:$0xff]
  %v3763 = vld [vmem:[#allocation4 + $0x30] sm:$0xff]
  %v3764 = vld [vmem:[#allocation4 + $0x38] sm:$0xff]
  %v3765 = vld [vmem:[#allocation4 + $0x40] sm:$0xff]
  %v3766 = vld [vmem:[#allocation4 + $0x48] sm:$0xff]
  %v3767 = vld [vmem:[%s6] sm:$0x1]
  %v3769 = vperm.slane %v3767, 0
  %v3771 = vmul.f32 %v3757, %v3769
  %v3772 = vmul.f32 %v3758, %v3769
  %v3773 = vmul.f32 %v3759, %v3769
  %v3774 = vmul.f32 %v3760, %v3769
  %v3775 = vmul.f32 %v3761, %v3769
  %v3776 = vmul.f32 %v3762, %v3769
  %v3777 = vmul.f32 %v3763, %v3769
  %v3778 = vmul.f32 %v3764, %v3769
  %v3779 = vmul.f32 %v3765, %v3769
  %v3780 = vmul.f32 %v3766, %v3769
  %v3781 = vld [vmem:[%s7] sm:$0x1]
  %v3783 = vperm.slane %v3781, 0
  %v3785 = vadd.f32 %v3771, %v3783
  %v3786 = vadd.f32 %v3772, %v3783
  %v3787 = vadd.f32 %v3773, %v3783
  %v3788 = vadd.f32 %v3774, %v3783
  %v3789 = vadd.f32 %v3775, %v3783
  %v3790 = vadd.f32 %v3776, %v3783
  %v3791 = vadd.f32 %v3777, %v3783
  %v3792 = vadd.f32 %v3778, %v3783
  %v3793 = vadd.f32 %v3779, %v3783
  %v3794 = vadd.f32 %v3780, %v3783
  %v3795 = vmax.f32 %v3785, 0.0
  %v3796 = vmax.f32 %v3786, 0.0
  %v3797 = vmax.f32 %v3787, 0.0
  %v3798 = vmax.f32 %v3788, 0.0
  %v3799 = vmax.f32 %v3789, 0.0
  %v3800 = vmax.f32 %v3790, 0.0
  %v3801 = vmax.f32 %v3791, 0.0
  %v3802 = vmax.f32 %v3792, 0.0
  %v3803 = vmax.f32 %v3793, 0.0
  %v3804 = vmax.f32 %v3794, 0.0
  %v3805 = vld [vmem:[%s2] sm:$0xff]
  %v3806 = vld [vmem:[%s2 + $0x8] sm:$0xff]
  %v3807 = vld [vmem:[%s2 + $0x10] sm:$0xff]
  %v3808 = vld [vmem:[%s2 + $0x18] sm:$0xff]
  %v3809 = vld [vmem:[%s2 + $0x20] sm:$0xff]
  %v3810 = vld [vmem:[%s2 + $0x28] sm:$0xff]
  %v3811 = vld [vmem:[%s2 + $0x30] sm:$0xff]
  %v3812 = vld [vmem:[%s2 + $0x38] sm:$0xff]
  %v3813 = vld [vmem:[%s2 + $0x40] sm:$0xff]
  %v3814 = vld [vmem:[%s2 + $0x48] sm:$0xff]
  %3816 = vset.pattern.permute.xlu0 0
  %3817 = vperm.xlu0 %3816, %v3805
  %v3818 = vpop.permute.xlu0 %3817
  %3821 = vset.pattern.permute.xlu0 0
  %3822 = vperm.xlu0 %3821, %v3806
  %v3823 = vpop.permute.xlu0 %3822
  %3826 = vset.pattern.permute.xlu0 0
  %3827 = vperm.xlu0 %3826, %v3807
  %v3828 = vpop.permute.xlu0 %3827
  %3831 = vset.pattern.permute.xlu0 0
  %3832 = vperm.xlu0 %3831, %v3808
  %v3833 = vpop.permute.xlu0 %3832
  %3836 = vset.pattern.permute.xlu0 0
  %3837 = vperm.xlu0 %3836, %v3809
  %v3838 = vpop.permute.xlu0 %3837
  %3841 = vset.pattern.permute.xlu0 0
  %3842 = vperm.xlu0 %3841, %v3810
  %v3843 = vpop.permute.xlu0 %3842
  %3846 = vset.pattern.permute.xlu0 0
  %3847 = vperm.xlu0 %3846, %v3811
  %v3848 = vpop.permute.xlu0 %3847
  %3851 = vset.pattern.permute.xlu0 0
  %3852 = vperm.xlu0 %3851, %v3812
  %v3853 = vpop.permute.xlu0 %3852
  %3856 = vset.pattern.permute.xlu0 0
  %3857 = vperm.xlu0 %3856, %v3813
  %v3858 = vpop.permute.xlu0 %3857
  %3861 = vset.pattern.permute.xlu0 0
  %3862 = vperm.xlu0 %3861, %v3814
  %v3863 = vpop.permute.xlu0 %3862
  %v3865 = vmul.f32 %v3795, %v3818
  %v3866 = vmul.f32 %v3796, %v3823
  %v3867 = vmul.f32 %v3797, %v3828
  %v3868 = vmul.f32 %v3798, %v3833
  %v3869 = vmul.f32 %v3799, %v3838
  %v3870 = vmul.f32 %v3800, %v3843
  %v3871 = vmul.f32 %v3801, %v3848
  %v3872 = vmul.f32 %v3802, %v3853
  %v3873 = vmul.f32 %v3803, %v3858
  %v3874 = vmul.f32 %v3804, %v3863
  %3875 = vst [vmem:[#allocation3] sm:$0xf] 0
  %v3876 = vld [vmem:[#allocation3 + $0x4] sm:$0x3]
  %v3877 = vsel %vm917, 0, %v3876
  %3878 = vst [vmem:[#allocation3 + $0x4] sm:$0x3] %v3877
  %v3879 = vld [vmem:[#allocation3 + $0x2c] sm:$0xe]
  %v3880 = vsel %vm923, 0, %v3879
  %3881 = vst [vmem:[#allocation3 + $0x2c] sm:$0xe] %v3880
  %3882 = vst [vmem:[#allocation3 + $0x30] sm:$0xf] 0
  %v3883 = vpack.c.bf16 %v3865, %v3865
  %v3884 = vpack.c.bf16 %v3866, %v3866
  %v3885 = vpack.c.bf16 %v3867, %v3867
  %v3886 = vpack.c.bf16 %v3868, %v3868
  %v3887 = vpack.c.bf16 %v3869, %v3869
  %v3888 = vpack.c.bf16 %v3870, %v3870
  %v3889 = vpack.c.bf16 %v3871, %v3871
  %v3890 = vpack.c.bf16 %v3872, %v3872
  %v3891 = vpack.c.bf16 %v3873, %v3873
  %v3892 = vpack.c.bf16 %v3874, %v3874
  %v3894 = vshrl.u32 %v3883, 16
  %v3896 = vrot.slane %v3894, 6
  %v3897 = vshll.u32 %v3883, 16
  %v3899 = vrot.slane %v3897, 7
  %v3900 = vor.u32 %v3896, %v3899
  %v3901 = vrot.slane %v3900, 4
  %v3903 = vshrl.u32 %v3884, 16
  %v3905 = vrot.slane %v3903, 6
  %v3906 = vshll.u32 %v3884, 16
  %v3908 = vrot.slane %v3906, 7
  %v3909 = vor.u32 %v3905, %v3908
  %v3910 = vsel %vm939, %v3901, %v3909
  %v3911 = vrot.slane %v3909, 4
  %v3913 = vshrl.u32 %v3885, 16
  %v3915 = vrot.slane %v3913, 6
  %v3916 = vshll.u32 %v3885, 16
  %v3918 = vrot.slane %v3916, 7
  %v3919 = vor.u32 %v3915, %v3918
  %v3920 = vsel %vm939, %v3911, %v3919
  %v3921 = vrot.slane %v3919, 4
  %v3923 = vshrl.u32 %v3886, 16
  %v3925 = vrot.slane %v3923, 6
  %v3926 = vshll.u32 %v3886, 16
  %v3928 = vrot.slane %v3926, 7
  %v3929 = vor.u32 %v3925, %v3928
  %v3930 = vsel %vm939, %v3921, %v3929
  %v3931 = vrot.slane %v3929, 4
  %v3933 = vshrl.u32 %v3887, 16
  %v3935 = vrot.slane %v3933, 6
  %v3936 = vshll.u32 %v3887, 16
  %v3938 = vrot.slane %v3936, 7
  %v3939 = vor.u32 %v3935, %v3938
  %v3940 = vsel %vm939, %v3931, %v3939
  %v3941 = vrot.slane %v3939, 4
  %v3943 = vshrl.u32 %v3888, 16
  %v3945 = vrot.slane %v3943, 6
  %v3946 = vshll.u32 %v3888, 16
  %v3948 = vrot.slane %v3946, 7
  %v3949 = vor.u32 %v3945, %v3948
  %v3950 = vsel %vm939, %v3941, %v3949
  %v3951 = vrot.slane %v3949, 4
  %v3953 = vshrl.u32 %v3889, 16
  %v3955 = vrot.slane %v3953, 6
  %v3956 = vshll.u32 %v3889, 16
  %v3958 = vrot.slane %v3956, 7
  %v3959 = vor.u32 %v3955, %v3958
  %v3960 = vsel %vm939, %v3951, %v3959
  %v3961 = vrot.slane %v3959, 4
  %v3963 = vshrl.u32 %v3890, 16
  %v3965 = vrot.slane %v3963, 6
  %v3966 = vshll.u32 %v3890, 16
  %v3968 = vrot.slane %v3966, 7
  %v3969 = vor.u32 %v3965, %v3968
  %v3970 = vsel %vm939, %v3961, %v3969
  %v3971 = vrot.slane %v3969, 4
  %v3973 = vshrl.u32 %v3891, 16
  %v3975 = vrot.slane %v3973, 6
  %v3976 = vshll.u32 %v3891, 16
  %v3978 = vrot.slane %v3976, 7
  %v3979 = vor.u32 %v3975, %v3978
  %v3980 = vsel %vm939, %v3971, %v3979
  %v3981 = vrot.slane %v3979, 4
  %v3983 = vshrl.u32 %v3892, 16
  %v3985 = vrot.slane %v3983, 6
  %v3986 = vshll.u32 %v3892, 16
  %v3988 = vrot.slane %v3986, 7
  %v3989 = vor.u32 %v3985, %v3988
  %v3990 = vsel %vm939, %v3981, %v3989
  %v3991 = vrot.slane %v3989, 4
  %v4003 = vld [vmem:[#allocation3 + $0x4] sm:$0xe]
  %v4004 = vsel %vm923, %v3900, %v4003
  %4005 = vst [vmem:[#allocation3 + $0x4] sm:$0xe] %v4004
  %4006 = vst [vmem:[#allocation3 + $0x8] sm:$0xf] %v3910
  %4007 = vst [vmem:[#allocation3 + $0xc] sm:$0xf] %v3920
  %4008 = vst [vmem:[#allocation3 + $0x10] sm:$0xf] %v3930
  %4009 = vst [vmem:[#allocation3 + $0x14] sm:$0xf] %v3940
  %4010 = vst [vmem:[#allocation3 + $0x18] sm:$0xf] %v3950
  %4011 = vst [vmem:[#allocation3 + $0x1c] sm:$0xf] %v3960
  %4012 = vst [vmem:[#allocation3 + $0x20] sm:$0xf] %v3970
  %4013 = vst [vmem:[#allocation3 + $0x24] sm:$0xf] %v3980
  %4014 = vst [vmem:[#allocation3 + $0x28] sm:$0xf] %v3990
  %v4015 = vld [vmem:[#allocation3 + $0x2c] sm:$0x3]
  %v4016 = vsel %vm917, %v3991, %v4015
  %4017 = vst [vmem:[#allocation3 + $0x2c] sm:$0x3] %v4016
  %v4018 = vld [vmem:[#allocation2 + $0x4] sm:$0xe]
  %v4019 = vld [vmem:[#allocation2 + $0x8] sm:$0xf]
  %v4020 = vld [vmem:[#allocation2 + $0xc] sm:$0xf]
  %v4021 = vld [vmem:[#allocation2 + $0x10] sm:$0xf]
  %v4022 = vld [vmem:[#allocation2 + $0x14] sm:$0xf]
  %v4023 = vld [vmem:[#allocation2 + $0x18] sm:$0xf]
  %v4024 = vld [vmem:[#allocation2 + $0x1c] sm:$0xf]
  %v4025 = vld [vmem:[#allocation2 + $0x20] sm:$0xf]
  %v4026 = vld [vmem:[#allocation2 + $0x24] sm:$0xf]
  %v4027 = vld [vmem:[#allocation2 + $0x28] sm:$0xf]
  %v4028 = vld [vmem:[#allocation2 + $0x2c] sm:$0x3]
  %v4029 = vld [vmem:[%s9] sm:$0xf]
  %v4030 = vld [vmem:[%s9 + $0x4] sm:$0xf]
  %v4042 = vunpack.c.l.b16 %v4018
  %v4043 = vunpack.c.l.b16 %v4019
  %v4044 = vunpack.c.l.b16 %v4020
  %v4045 = vunpack.c.l.b16 %v4021
  %v4046 = vunpack.c.l.b16 %v4022
  %v4047 = vunpack.c.l.b16 %v4023
  %v4048 = vunpack.c.l.b16 %v4024
  %v4049 = vunpack.c.l.b16 %v4025
  %v4050 = vunpack.c.l.b16 %v4026
  %v4051 = vunpack.c.l.b16 %v4027
  %v4052 = vunpack.c.l.b16 %v4028
  %v4053 = vpack.c.b16 %v4043, %v4042
  %v4054 = vpack.c.b16 %v4045, %v4044
  %v4055 = vpack.c.b16 %v4047, %v4046
  %v4056 = vpack.c.b16 %v4049, %v4048
  %v4057 = vpack.c.b16 %v4051, %v4050
  %v4058 = vpack.c.b16 %v4052, %v4052
  %v4060 = vshrl.u32 %v4053, 16
  %v4062 = vrot.slane %v4060, 1
  %v4063 = vshll.u32 %v4053, 16
  %v4065 = vrot.slane %v4063, 2
  %v4066 = vor.u32 %v4062, %v4065
  %v4068 = vshrl.u32 %v4054, 16
  %v4070 = vrot.slane %v4068, 1
  %v4071 = vshll.u32 %v4054, 16
  %v4073 = vrot.slane %v4071, 2
  %v4074 = vor.u32 %v4070, %v4073
  %v4075 = vsel %vm657, %v4066, %v4074
  %v4077 = vshrl.u32 %v4055, 16
  %v4079 = vrot.slane %v4077, 1
  %v4080 = vshll.u32 %v4055, 16
  %v4082 = vrot.slane %v4080, 2
  %v4083 = vor.u32 %v4079, %v4082
  %v4084 = vsel %vm657, %v4074, %v4083
  %v4086 = vshrl.u32 %v4056, 16
  %v4088 = vrot.slane %v4086, 1
  %v4089 = vshll.u32 %v4056, 16
  %v4091 = vrot.slane %v4089, 2
  %v4092 = vor.u32 %v4088, %v4091
  %v4093 = vsel %vm657, %v4083, %v4092
  %v4095 = vshrl.u32 %v4057, 16
  %v4097 = vrot.slane %v4095, 1
  %v4098 = vshll.u32 %v4057, 16
  %v4100 = vrot.slane %v4098, 2
  %v4101 = vor.u32 %v4097, %v4100
  %v4102 = vsel %vm657, %v4092, %v4101
  %v4104 = vshrl.u32 %v4058, 16
  %v4106 = vrot.slane %v4104, 1
  %v4107 = vshll.u32 %v4058, 16
  %v4109 = vrot.slane %v4107, 2
  %v4110 = vor.u32 %v4106, %v4109
  %v4111 = vsel %vm657, %v4101, %v4110
  %v4114 = vunpack.c.l.b16 %v4029
  %v4115 = vunpack.c.l.b16 %v4030
  %v4116 = vpack.c.b16 %v4115, %v4114
  %v4119 = vsel %vm244, %v4075, 0
  %v4122 = vsel %vm244, %v4084, 0
  %v4125 = vsel %vm244, %v4093, 0
  %v4128 = vsel %vm244, %v4102, 0
  %v4131 = vsel %vm244, %v4111, 0
  %4133 = vmatpush.bf16.msra.mxu0 0
  %4134 = vmatpush.bf16.msra.mxu0 0
  %4135 = vmatpush.bf16.msra.mxu0 0
  %4136 = vmatpush.bf16.msra.mxu0 0
  %4137 = vmatpush.bf16.msra.mxu0 0
  %4138 = vmatpush.bf16.msra.mxu0 0
  %4139 = vmatpush.bf16.msra.mxu0 0
  %4140 = vmatpush.bf16.msra.mxu0 %v4116
  %4141 = vmatmul.bf16.gmra.mxu0 %v4119
  %v4142 = vpop.f32.mrf.mxu0
  %v4143 = vadd.f32 0.0, %v4142
  %v4144 = vpop.f32.mrf.mxu0
  %v4145 = vadd.f32 0.0, %v4144
  %4146 = vmatmul.bf16.gmra.mxu0 %v4122
  %v4147 = vpop.f32.mrf.mxu0
  %v4148 = vadd.f32 0.0, %v4147
  %v4149 = vpop.f32.mrf.mxu0
  %v4150 = vadd.f32 0.0, %v4149
  %4151 = vmatmul.bf16.gmra.mxu0 %v4125
  %v4152 = vpop.f32.mrf.mxu0
  %v4153 = vadd.f32 0.0, %v4152
  %v4154 = vpop.f32.mrf.mxu0
  %v4155 = vadd.f32 0.0, %v4154
  %4156 = vmatmul.bf16.gmra.mxu0 %v4128
  %v4157 = vpop.f32.mrf.mxu0
  %v4158 = vadd.f32 0.0, %v4157
  %v4159 = vpop.f32.mrf.mxu0
  %v4160 = vadd.f32 0.0, %v4159
  %4161 = vmatmul.bf16.gmra.mxu0 %v4131
  %v4162 = vpop.f32.mrf.mxu0
  %v4163 = vadd.f32 0.0, %v4162
  %v4164 = vpop.f32.mrf.mxu0
  %v4165 = vadd.f32 0.0, %v4164
  %4166 = vdwg.mxu0
  %4167 = vst [vmem:[#allocation4] sm:$0xff] %v4143
  %4168 = vst [vmem:[#allocation4 + $0x8] sm:$0xff] %v4145
  %4169 = vst [vmem:[#allocation4 + $0x10] sm:$0xff] %v4148
  %4170 = vst [vmem:[#allocation4 + $0x18] sm:$0xff] %v4150
  %4171 = vst [vmem:[#allocation4 + $0x20] sm:$0xff] %v4153
  %4172 = vst [vmem:[#allocation4 + $0x28] sm:$0xff] %v4155
  %4173 = vst [vmem:[#allocation4 + $0x30] sm:$0xff] %v4158
  %4174 = vst [vmem:[#allocation4 + $0x38] sm:$0xff] %v4160
  %4175 = vst [vmem:[#allocation4 + $0x40] sm:$0xff] %v4163
  %4176 = vst [vmem:[#allocation4 + $0x48] sm:$0xff] %v4165
  %v4177 = vld [vmem:[#allocation4] sm:$0xff]
  %v4178 = vld [vmem:[#allocation4 + $0x8] sm:$0xff]
  %v4179 = vld [vmem:[#allocation4 + $0x10] sm:$0xff]
  %v4180 = vld [vmem:[#allocation4 + $0x18] sm:$0xff]
  %v4181 = vld [vmem:[#allocation4 + $0x20] sm:$0xff]
  %v4182 = vld [vmem:[#allocation4 + $0x28] sm:$0xff]
  %v4183 = vld [vmem:[#allocation4 + $0x30] sm:$0xff]
  %v4184 = vld [vmem:[#allocation4 + $0x38] sm:$0xff]
  %v4185 = vld [vmem:[#allocation4 + $0x40] sm:$0xff]
  %v4186 = vld [vmem:[#allocation4 + $0x48] sm:$0xff]
  %v4187 = vld [vmem:[#allocation3] sm:$0xf]
  %v4188 = vld [vmem:[#allocation3 + $0x4] sm:$0xf]
  %v4189 = vld [vmem:[#allocation3 + $0x8] sm:$0xf]
  %v4190 = vld [vmem:[#allocation3 + $0xc] sm:$0xf]
  %v4191 = vld [vmem:[#allocation3 + $0x10] sm:$0xf]
  %v4192 = vld [vmem:[#allocation3 + $0x14] sm:$0xf]
  %v4193 = vld [vmem:[#allocation3 + $0x18] sm:$0xf]
  %v4194 = vld [vmem:[#allocation3 + $0x1c] sm:$0xf]
  %v4195 = vld [vmem:[#allocation3 + $0x20] sm:$0xf]
  %v4196 = vld [vmem:[#allocation3 + $0x24] sm:$0xf]
  %v4197 = vld [vmem:[%s8] sm:$0xf]
  %v4198 = vld [vmem:[%s8 + $0x4] sm:$0xf]
  %v4199 = vld [vmem:[%s8 + $0x8] sm:$0xf]
  %v4200 = vld [vmem:[%s8 + $0xc] sm:$0xf]
  %v4201 = vld [vmem:[%s8 + $0x10] sm:$0xf]
  %v4202 = vld [vmem:[%s8 + $0x14] sm:$0xf]
  %v4203 = vld [vmem:[%s8 + $0x18] sm:$0xf]
  %v4204 = vld [vmem:[%s8 + $0x1c] sm:$0xf]
  %v4205 = vld [vmem:[%s8 + $0x20] sm:$0xf]
  %v4206 = vld [vmem:[%s8 + $0x24] sm:$0xf]
  %v4207 = vld [vmem:[%s8 + $0x28] sm:$0xf]
  %v4208 = vld [vmem:[%s8 + $0x2c] sm:$0xf]
  %v4209 = vld [vmem:[%s8 + $0x30] sm:$0xf]
  %v4210 = vld [vmem:[%s8 + $0x34] sm:$0xf]
  %v4211 = vld [vmem:[%s8 + $0x38] sm:$0xf]
  %v4212 = vld [vmem:[%s8 + $0x3c] sm:$0xf]
  %v4223 = vunpack.c.l.b16 %v4187
  %v4224 = vunpack.c.l.b16 %v4188
  %v4225 = vunpack.c.l.b16 %v4189
  %v4226 = vunpack.c.l.b16 %v4190
  %v4227 = vunpack.c.l.b16 %v4191
  %v4228 = vunpack.c.l.b16 %v4192
  %v4229 = vunpack.c.l.b16 %v4193
  %v4230 = vunpack.c.l.b16 %v4194
  %v4231 = vunpack.c.l.b16 %v4195
  %v4232 = vunpack.c.l.b16 %v4196
  %v4233 = vpack.c.b16 %v4224, %v4223
  %v4234 = vpack.c.b16 %v4226, %v4225
  %v4235 = vpack.c.b16 %v4228, %v4227
  %v4236 = vpack.c.b16 %v4230, %v4229
  %v4237 = vpack.c.b16 %v4232, %v4231
  %v4259 = vunpack.c.l.b16 %v4197
  %v4260 = vunpack.c.l.b16 %v4198
  %v4261 = vunpack.c.l.b16 %v4199
  %v4262 = vunpack.c.l.b16 %v4200
  %v4263 = vunpack.c.l.b16 %v4201
  %v4264 = vunpack.c.l.b16 %v4202
  %v4265 = vunpack.c.l.b16 %v4203
  %v4266 = vunpack.c.l.b16 %v4204
  %v4267 = vunpack.c.l.b16 %v4205
  %v4268 = vunpack.c.l.b16 %v4206
  %v4269 = vunpack.c.l.b16 %v4207
  %v4270 = vunpack.c.l.b16 %v4208
  %v4271 = vunpack.c.l.b16 %v4209
  %v4272 = vunpack.c.l.b16 %v4210
  %v4273 = vunpack.c.l.b16 %v4211
  %v4274 = vunpack.c.l.b16 %v4212
  %v4275 = vpack.c.b16 %v4260, %v4259
  %v4276 = vpack.c.b16 %v4262, %v4261
  %v4277 = vpack.c.b16 %v4264, %v4263
  %v4278 = vpack.c.b16 %v4266, %v4265
  %v4279 = vpack.c.b16 %v4268, %v4267
  %v4280 = vpack.c.b16 %v4270, %v4269
  %v4281 = vpack.c.b16 %v4272, %v4271
  %v4282 = vpack.c.b16 %v4274, %v4273
  %4291 = vmatpush.bf16.msra.mxu0 %v4282
  %4292 = vmatpush.bf16.msra.mxu0 %v4281
  %4293 = vmatpush.bf16.msra.mxu0 %v4280
  %4294 = vmatpush.bf16.msra.mxu0 %v4279
  %4295 = vmatpush.bf16.msra.mxu0 %v4278
  %4296 = vmatpush.bf16.msra.mxu0 %v4277
  %4297 = vmatpush.bf16.msra.mxu0 %v4276
  %4298 = vmatpush.bf16.msra.mxu0 %v4275
  %4299 = vmatmul.bf16.gmra.mxu0 %v4233
  %v4300 = vpop.f32.mrf.mxu0
  %v4301 = vadd.f32 0.0, %v4300
  %v4302 = vpop.f32.mrf.mxu0
  %v4303 = vadd.f32 0.0, %v4302
  %4304 = vmatmul.bf16.gmra.mxu0 %v4234
  %v4305 = vpop.f32.mrf.mxu0
  %v4306 = vadd.f32 0.0, %v4305
  %v4307 = vpop.f32.mrf.mxu0
  %v4308 = vadd.f32 0.0, %v4307
  %4309 = vmatmul.bf16.gmra.mxu0 %v4235
  %v4310 = vpop.f32.mrf.mxu0
  %v4311 = vadd.f32 0.0, %v4310
  %v4312 = vpop.f32.mrf.mxu0
  %v4313 = vadd.f32 0.0, %v4312
  %4314 = vmatmul.bf16.gmra.mxu0 %v4236
  %v4315 = vpop.f32.mrf.mxu0
  %v4316 = vadd.f32 0.0, %v4315
  %v4317 = vpop.f32.mrf.mxu0
  %v4318 = vadd.f32 0.0, %v4317
  %4319 = vmatmul.bf16.gmra.mxu0 %v4237
  %v4320 = vpop.f32.mrf.mxu0
  %v4321 = vadd.f32 0.0, %v4320
  %v4322 = vpop.f32.mrf.mxu0
  %v4323 = vadd.f32 0.0, %v4322
  %4324 = vdwg.mxu0
  %v4325 = vadd.f32 %v4177, %v4301
  %v4326 = vadd.f32 %v4178, %v4303
  %v4327 = vadd.f32 %v4179, %v4306
  %v4328 = vadd.f32 %v4180, %v4308
  %v4329 = vadd.f32 %v4181, %v4311
  %v4330 = vadd.f32 %v4182, %v4313
  %v4331 = vadd.f32 %v4183, %v4316
  %v4332 = vadd.f32 %v4184, %v4318
  %v4333 = vadd.f32 %v4185, %v4321
  %v4334 = vadd.f32 %v4186, %v4323
  %4335 = vst [vmem:[#allocation4] sm:$0xff] %v4325
  %4336 = vst [vmem:[#allocation4 + $0x8] sm:$0xff] %v4326
  %4337 = vst [vmem:[#allocation4 + $0x10] sm:$0xff] %v4327
  %4338 = vst [vmem:[#allocation4 + $0x18] sm:$0xff] %v4328
  %4339 = vst [vmem:[#allocation4 + $0x20] sm:$0xff] %v4329
  %4340 = vst [vmem:[#allocation4 + $0x28] sm:$0xff] %v4330
  %4341 = vst [vmem:[#allocation4 + $0x30] sm:$0xff] %v4331
  %4342 = vst [vmem:[#allocation4 + $0x38] sm:$0xff] %v4332
  %4343 = vst [vmem:[#allocation4 + $0x40] sm:$0xff] %v4333
  %4344 = vst [vmem:[#allocation4 + $0x48] sm:$0xff] %v4334
  %v4345 = vld [vmem:[#allocation4] sm:$0xff]
  %v4346 = vld [vmem:[#allocation4 + $0x8] sm:$0xff]
  %v4347 = vld [vmem:[#allocation4 + $0x10] sm:$0xff]
  %v4348 = vld [vmem:[#allocation4 + $0x18] sm:$0xff]
  %v4349 = vld [vmem:[#allocation4 + $0x20] sm:$0xff]
  %v4350 = vld [vmem:[#allocation4 + $0x28] sm:$0xff]
  %v4351 = vld [vmem:[#allocation4 + $0x30] sm:$0xff]
  %v4352 = vld [vmem:[#allocation4 + $0x38] sm:$0xff]
  %v4353 = vld [vmem:[#allocation4 + $0x40] sm:$0xff]
  %v4354 = vld [vmem:[#allocation4 + $0x48] sm:$0xff]
  %v4355 = vld [vmem:[#allocation3] sm:$0xf]
  %v4356 = vld [vmem:[#allocation3 + $0x4] sm:$0xf]
  %v4357 = vld [vmem:[#allocation3 + $0x8] sm:$0xf]
  %v4358 = vld [vmem:[#allocation3 + $0xc] sm:$0xf]
  %v4359 = vld [vmem:[#allocation3 + $0x10] sm:$0xf]
  %v4360 = vld [vmem:[#allocation3 + $0x14] sm:$0xf]
  %v4361 = vld [vmem:[#allocation3 + $0x18] sm:$0xf]
  %v4362 = vld [vmem:[#allocation3 + $0x1c] sm:$0xf]
  %v4363 = vld [vmem:[#allocation3 + $0x20] sm:$0xf]
  %v4364 = vld [vmem:[#allocation3 + $0x24] sm:$0xf]
  %v4365 = vld [vmem:[#allocation3 + $0x28] sm:$0x1]
  %v4366 = vld [vmem:[%s1413] sm:$0xf]
  %v4367 = vld [vmem:[%s1413 + $0x4] sm:$0xf]
  %v4368 = vld [vmem:[%s1413 + $0x8] sm:$0xf]
  %v4369 = vld [vmem:[%s1413 + $0xc] sm:$0xf]
  %v4370 = vld [vmem:[%s1413 + $0x10] sm:$0xf]
  %v4371 = vld [vmem:[%s1413 + $0x14] sm:$0xf]
  %v4372 = vld [vmem:[%s1413 + $0x18] sm:$0xf]
  %v4373 = vld [vmem:[%s1413 + $0x1c] sm:$0xf]
  %v4374 = vld [vmem:[%s1413 + $0x20] sm:$0xf]
  %v4375 = vld [vmem:[%s1413 + $0x24] sm:$0xf]
  %v4376 = vld [vmem:[%s1413 + $0x28] sm:$0xf]
  %v4377 = vld [vmem:[%s1413 + $0x2c] sm:$0xf]
  %v4378 = vld [vmem:[%s1413 + $0x30] sm:$0xf]
  %v4379 = vld [vmem:[%s1413 + $0x34] sm:$0xf]
  %v4380 = vld [vmem:[%s1413 + $0x38] sm:$0xf]
  %v4381 = vld [vmem:[%s1413 + $0x3c] sm:$0xf]
  %v4393 = vunpack.c.l.b16 %v4355
  %v4394 = vunpack.c.l.b16 %v4356
  %v4395 = vunpack.c.l.b16 %v4357
  %v4396 = vunpack.c.l.b16 %v4358
  %v4397 = vunpack.c.l.b16 %v4359
  %v4398 = vunpack.c.l.b16 %v4360
  %v4399 = vunpack.c.l.b16 %v4361
  %v4400 = vunpack.c.l.b16 %v4362
  %v4401 = vunpack.c.l.b16 %v4363
  %v4402 = vunpack.c.l.b16 %v4364
  %v4403 = vunpack.c.l.b16 %v4365
  %v4404 = vpack.c.b16 %v4394, %v4393
  %v4405 = vpack.c.b16 %v4396, %v4395
  %v4406 = vpack.c.b16 %v4398, %v4397
  %v4407 = vpack.c.b16 %v4400, %v4399
  %v4408 = vpack.c.b16 %v4402, %v4401
  %v4409 = vpack.c.b16 %v4403, %v4403
  %v4411 = vshrl.u32 %v4404, 16
  %v4413 = vshll.u32 %v4404, 16
  %v4415 = vrot.slane %v4413, 1
  %v4416 = vor.u32 %v4411, %v4415
  %v4418 = vshll.u32 %v4405, 16
  %v4420 = vrot.slane %v4418, 1
  %v4421 = vsel %vm346, %v4416, %v4420
  %v4422 = vshrl.u32 %v4405, 16
  %v4424 = vor.u32 %v4422, %v4420
  %v4426 = vshll.u32 %v4406, 16
  %v4428 = vrot.slane %v4426, 1
  %v4429 = vsel %vm346, %v4424, %v4428
  %v4430 = vshrl.u32 %v4406, 16
  %v4432 = vor.u32 %v4430, %v4428
  %v4434 = vshll.u32 %v4407, 16
  %v4436 = vrot.slane %v4434, 1
  %v4437 = vsel %vm346, %v4432, %v4436
  %v4438 = vshrl.u32 %v4407, 16
  %v4440 = vor.u32 %v4438, %v4436
  %v4442 = vshll.u32 %v4408, 16
  %v4444 = vrot.slane %v4442, 1
  %v4445 = vsel %vm346, %v4440, %v4444
  %v4446 = vshrl.u32 %v4408, 16
  %v4448 = vor.u32 %v4446, %v4444
  %v4450 = vshll.u32 %v4409, 16
  %v4452 = vrot.slane %v4450, 1
  %v4453 = vsel %vm346, %v4448, %v4452
  %v4475 = vunpack.c.l.b16 %v4366
  %v4476 = vunpack.c.l.b16 %v4367
  %v4477 = vunpack.c.l.b16 %v4368
  %v4478 = vunpack.c.l.b16 %v4369
  %v4479 = vunpack.c.l.b16 %v4370
  %v4480 = vunpack.c.l.b16 %v4371
  %v4481 = vunpack.c.l.b16 %v4372
  %v4482 = vunpack.c.l.b16 %v4373
  %v4483 = vunpack.c.l.b16 %v4374
  %v4484 = vunpack.c.l.b16 %v4375
  %v4485 = vunpack.c.l.b16 %v4376
  %v4486 = vunpack.c.l.b16 %v4377
  %v4487 = vunpack.c.l.b16 %v4378
  %v4488 = vunpack.c.l.b16 %v4379
  %v4489 = vunpack.c.l.b16 %v4380
  %v4490 = vunpack.c.l.b16 %v4381
  %v4491 = vpack.c.b16 %v4476, %v4475
  %v4492 = vpack.c.b16 %v4478, %v4477
  %v4493 = vpack.c.b16 %v4480, %v4479
  %v4494 = vpack.c.b16 %v4482, %v4481
  %v4495 = vpack.c.b16 %v4484, %v4483
  %v4496 = vpack.c.b16 %v4486, %v4485
  %v4497 = vpack.c.b16 %v4488, %v4487
  %v4498 = vpack.c.b16 %v4490, %v4489
  %4507 = vmatpush.bf16.msra.mxu0 %v4498
  %4508 = vmatpush.bf16.msra.mxu0 %v4497
  %4509 = vmatpush.bf16.msra.mxu0 %v4496
  %4510 = vmatpush.bf16.msra.mxu0 %v4495
  %4511 = vmatpush.bf16.msra.mxu0 %v4494
  %4512 = vmatpush.bf16.msra.mxu0 %v4493
  %4513 = vmatpush.bf16.msra.mxu0 %v4492
  %4514 = vmatpush.bf16.msra.mxu0 %v4491
  %4515 = vmatmul.bf16.gmra.mxu0 %v4421
  %v4516 = vpop.f32.mrf.mxu0
  %v4517 = vadd.f32 0.0, %v4516
  %v4518 = vpop.f32.mrf.mxu0
  %v4519 = vadd.f32 0.0, %v4518
  %4520 = vmatmul.bf16.gmra.mxu0 %v4429
  %v4521 = vpop.f32.mrf.mxu0
  %v4522 = vadd.f32 0.0, %v4521
  %v4523 = vpop.f32.mrf.mxu0
  %v4524 = vadd.f32 0.0, %v4523
  %4525 = vmatmul.bf16.gmra.mxu0 %v4437
  %v4526 = vpop.f32.mrf.mxu0
  %v4527 = vadd.f32 0.0, %v4526
  %v4528 = vpop.f32.mrf.mxu0
  %v4529 = vadd.f32 0.0, %v4528
  %4530 = vmatmul.bf16.gmra.mxu0 %v4445
  %v4531 = vpop.f32.mrf.mxu0
  %v4532 = vadd.f32 0.0, %v4531
  %v4533 = vpop.f32.mrf.mxu0
  %v4534 = vadd.f32 0.0, %v4533
  %4535 = vmatmul.bf16.gmra.mxu0 %v4453
  %v4536 = vpop.f32.mrf.mxu0
  %v4537 = vadd.f32 0.0, %v4536
  %v4538 = vpop.f32.mrf.mxu0
  %v4539 = vadd.f32 0.0, %v4538
  %4540 = vdwg.mxu0
  %v4541 = vadd.f32 %v4345, %v4517
  %v4542 = vadd.f32 %v4346, %v4519
  %v4543 = vadd.f32 %v4347, %v4522
  %v4544 = vadd.f32 %v4348, %v4524
  %v4545 = vadd.f32 %v4349, %v4527
  %v4546 = vadd.f32 %v4350, %v4529
  %v4547 = vadd.f32 %v4351, %v4532
  %v4548 = vadd.f32 %v4352, %v4534
  %v4549 = vadd.f32 %v4353, %v4537
  %v4550 = vadd.f32 %v4354, %v4539
  %4551 = vst [vmem:[#allocation4] sm:$0xff] %v4541
  %4552 = vst [vmem:[#allocation4 + $0x8] sm:$0xff] %v4542
  %4553 = vst [vmem:[#allocation4 + $0x10] sm:$0xff] %v4543
  %4554 = vst [vmem:[#allocation4 + $0x18] sm:$0xff] %v4544
  %4555 = vst [vmem:[#allocation4 + $0x20] sm:$0xff] %v4545
  %4556 = vst [vmem:[#allocation4 + $0x28] sm:$0xff] %v4546
  %4557 = vst [vmem:[#allocation4 + $0x30] sm:$0xff] %v4547
  %4558 = vst [vmem:[#allocation4 + $0x38] sm:$0xff] %v4548
  %4559 = vst [vmem:[#allocation4 + $0x40] sm:$0xff] %v4549
  %4560 = vst [vmem:[#allocation4 + $0x48] sm:$0xff] %v4550
  %v4561 = vld [vmem:[#allocation4] sm:$0xff]
  %v4562 = vld [vmem:[#allocation4 + $0x8] sm:$0xff]
  %v4563 = vld [vmem:[#allocation4 + $0x10] sm:$0xff]
  %v4564 = vld [vmem:[#allocation4 + $0x18] sm:$0xff]
  %v4565 = vld [vmem:[#allocation4 + $0x20] sm:$0xff]
  %v4566 = vld [vmem:[#allocation4 + $0x28] sm:$0xff]
  %v4567 = vld [vmem:[#allocation4 + $0x30] sm:$0xff]
  %v4568 = vld [vmem:[#allocation4 + $0x38] sm:$0xff]
  %v4569 = vld [vmem:[#allocation4 + $0x40] sm:$0xff]
  %v4570 = vld [vmem:[#allocation4 + $0x48] sm:$0xff]
  %v4571 = vld [vmem:[#allocation3] sm:$0xe]
  %v4572 = vld [vmem:[#allocation3 + $0x4] sm:$0xf]
  %v4573 = vld [vmem:[#allocation3 + $0x8] sm:$0xf]
  %v4574 = vld [vmem:[#allocation3 + $0xc] sm:$0xf]
  %v4575 = vld [vmem:[#allocation3 + $0x10] sm:$0xf]
  %v4576 = vld [vmem:[#allocation3 + $0x14] sm:$0xf]
  %v4577 = vld [vmem:[#allocation3 + $0x18] sm:$0xf]
  %v4578 = vld [vmem:[#allocation3 + $0x1c] sm:$0xf]
  %v4579 = vld [vmem:[#allocation3 + $0x20] sm:$0xf]
  %v4580 = vld [vmem:[#allocation3 + $0x24] sm:$0xf]
  %v4581 = vld [vmem:[#allocation3 + $0x28] sm:$0x1]
  %v4582 = vld [vmem:[%s1630] sm:$0xf]
  %v4583 = vld [vmem:[%s1630 + $0x4] sm:$0xf]
  %v4584 = vld [vmem:[%s1630 + $0x8] sm:$0xf]
  %v4585 = vld [vmem:[%s1630 + $0xc] sm:$0xf]
  %v4586 = vld [vmem:[%s1630 + $0x10] sm:$0xf]
  %v4587 = vld [vmem:[%s1630 + $0x14] sm:$0xf]
  %v4588 = vld [vmem:[%s1630 + $0x18] sm:$0xf]
  %v4589 = vld [vmem:[%s1630 + $0x1c] sm:$0xf]
  %v4590 = vld [vmem:[%s1630 + $0x20] sm:$0xf]
  %v4591 = vld [vmem:[%s1630 + $0x24] sm:$0xf]
  %v4592 = vld [vmem:[%s1630 + $0x28] sm:$0xf]
  %v4593 = vld [vmem:[%s1630 + $0x2c] sm:$0xf]
  %v4594 = vld [vmem:[%s1630 + $0x30] sm:$0xf]
  %v4595 = vld [vmem:[%s1630 + $0x34] sm:$0xf]
  %v4596 = vld [vmem:[%s1630 + $0x38] sm:$0xf]
  %v4597 = vld [vmem:[%s1630 + $0x3c] sm:$0xf]
  %v4609 = vunpack.c.l.b16 %v4571
  %v4610 = vunpack.c.l.b16 %v4572
  %v4611 = vunpack.c.l.b16 %v4573
  %v4612 = vunpack.c.l.b16 %v4574
  %v4613 = vunpack.c.l.b16 %v4575
  %v4614 = vunpack.c.l.b16 %v4576
  %v4615 = vunpack.c.l.b16 %v4577
  %v4616 = vunpack.c.l.b16 %v4578
  %v4617 = vunpack.c.l.b16 %v4579
  %v4618 = vunpack.c.l.b16 %v4580
  %v4619 = vunpack.c.l.b16 %v4581
  %v4620 = vpack.c.b16 %v4610, %v4609
  %v4621 = vpack.c.b16 %v4612, %v4611
  %v4622 = vpack.c.b16 %v4614, %v4613
  %v4623 = vpack.c.b16 %v4616, %v4615
  %v4624 = vpack.c.b16 %v4618, %v4617
  %v4625 = vpack.c.b16 %v4619, %v4619
  %v4626 = vrot.slane %v4620, 1
  %v4627 = vrot.slane %v4621, 1
  %v4628 = vsel %vm518, %v4626, %v4627
  %v4629 = vrot.slane %v4622, 1
  %v4630 = vsel %vm518, %v4627, %v4629
  %v4631 = vrot.slane %v4623, 1
  %v4632 = vsel %vm518, %v4629, %v4631
  %v4633 = vrot.slane %v4624, 1
  %v4634 = vsel %vm518, %v4631, %v4633
  %v4635 = vrot.slane %v4625, 1
  %v4636 = vsel %vm518, %v4633, %v4635
  %v4658 = vunpack.c.l.b16 %v4582
  %v4659 = vunpack.c.l.b16 %v4583
  %v4660 = vunpack.c.l.b16 %v4584
  %v4661 = vunpack.c.l.b16 %v4585
  %v4662 = vunpack.c.l.b16 %v4586
  %v4663 = vunpack.c.l.b16 %v4587
  %v4664 = vunpack.c.l.b16 %v4588
  %v4665 = vunpack.c.l.b16 %v4589
  %v4666 = vunpack.c.l.b16 %v4590
  %v4667 = vunpack.c.l.b16 %v4591
  %v4668 = vunpack.c.l.b16 %v4592
  %v4669 = vunpack.c.l.b16 %v4593
  %v4670 = vunpack.c.l.b16 %v4594
  %v4671 = vunpack.c.l.b16 %v4595
  %v4672 = vunpack.c.l.b16 %v4596
  %v4673 = vunpack.c.l.b16 %v4597
  %v4674 = vpack.c.b16 %v4659, %v4658
  %v4675 = vpack.c.b16 %v4661, %v4660
  %v4676 = vpack.c.b16 %v4663, %v4662
  %v4677 = vpack.c.b16 %v4665, %v4664
  %v4678 = vpack.c.b16 %v4667, %v4666
  %v4679 = vpack.c.b16 %v4669, %v4668
  %v4680 = vpack.c.b16 %v4671, %v4670
  %v4681 = vpack.c.b16 %v4673, %v4672
  %4690 = vmatpush.bf16.msra.mxu0 %v4681
  %4691 = vmatpush.bf16.msra.mxu0 %v4680
  %4692 = vmatpush.bf16.msra.mxu0 %v4679
  %4693 = vmatpush.bf16.msra.mxu0 %v4678
  %4694 = vmatpush.bf16.msra.mxu0 %v4677
  %4695 = vmatpush.bf16.msra.mxu0 %v4676
  %4696 = vmatpush.bf16.msra.mxu0 %v4675
  %4697 = vmatpush.bf16.msra.mxu0 %v4674
  %4698 = vmatmul.bf16.gmra.mxu0 %v4628
  %v4699 = vpop.f32.mrf.mxu0
  %v4700 = vadd.f32 0.0, %v4699
  %v4701 = vpop.f32.mrf.mxu0
  %v4702 = vadd.f32 0.0, %v4701
  %4703 = vmatmul.bf16.gmra.mxu0 %v4630
  %v4704 = vpop.f32.mrf.mxu0
  %v4705 = vadd.f32 0.0, %v4704
  %v4706 = vpop.f32.mrf.mxu0
  %v4707 = vadd.f32 0.0, %v4706
  %4708 = vmatmul.bf16.gmra.mxu0 %v4632
  %v4709 = vpop.f32.mrf.mxu0
  %v4710 = vadd.f32 0.0, %v4709
  %v4711 = vpop.f32.mrf.mxu0
  %v4712 = vadd.f32 0.0, %v4711
  %4713 = vmatmul.bf16.gmra.mxu0 %v4634
  %v4714 = vpop.f32.mrf.mxu0
  %v4715 = vadd.f32 0.0, %v4714
  %v4716 = vpop.f32.mrf.mxu0
  %v4717 = vadd.f32 0.0, %v4716
  %4718 = vmatmul.bf16.gmra.mxu0 %v4636
  %v4719 = vpop.f32.mrf.mxu0
  %v4720 = vadd.f32 0.0, %v4719
  %v4721 = vpop.f32.mrf.mxu0
  %v4722 = vadd.f32 0.0, %v4721
  %4723 = vdwg.mxu0
  %v4724 = vadd.f32 %v4561, %v4700
  %v4725 = vadd.f32 %v4562, %v4702
  %v4726 = vadd.f32 %v4563, %v4705
  %v4727 = vadd.f32 %v4564, %v4707
  %v4728 = vadd.f32 %v4565, %v4710
  %v4729 = vadd.f32 %v4566, %v4712
  %v4730 = vadd.f32 %v4567, %v4715
  %v4731 = vadd.f32 %v4568, %v4717
  %v4732 = vadd.f32 %v4569, %v4720
  %v4733 = vadd.f32 %v4570, %v4722
  %4734 = vst [vmem:[#allocation4] sm:$0xff] %v4724
  %4735 = vst [vmem:[#allocation4 + $0x8] sm:$0xff] %v4725
  %4736 = vst [vmem:[#allocation4 + $0x10] sm:$0xff] %v4726
  %4737 = vst [vmem:[#allocation4 + $0x18] sm:$0xff] %v4727
  %4738 = vst [vmem:[#allocation4 + $0x20] sm:$0xff] %v4728
  %4739 = vst [vmem:[#allocation4 + $0x28] sm:$0xff] %v4729
  %4740 = vst [vmem:[#allocation4 + $0x30] sm:$0xff] %v4730
  %4741 = vst [vmem:[#allocation4 + $0x38] sm:$0xff] %v4731
  %4742 = vst [vmem:[#allocation4 + $0x40] sm:$0xff] %v4732
  %4743 = vst [vmem:[#allocation4 + $0x48] sm:$0xff] %v4733
  %v4744 = vld [vmem:[#allocation4] sm:$0xff]
  %v4745 = vld [vmem:[#allocation4 + $0x8] sm:$0xff]
  %v4746 = vld [vmem:[#allocation4 + $0x10] sm:$0xff]
  %v4747 = vld [vmem:[#allocation4 + $0x18] sm:$0xff]
  %v4748 = vld [vmem:[#allocation4 + $0x20] sm:$0xff]
  %v4749 = vld [vmem:[#allocation4 + $0x28] sm:$0xff]
  %v4750 = vld [vmem:[#allocation4 + $0x30] sm:$0xff]
  %v4751 = vld [vmem:[#allocation4 + $0x38] sm:$0xff]
  %v4752 = vld [vmem:[#allocation4 + $0x40] sm:$0xff]
  %v4753 = vld [vmem:[#allocation4 + $0x48] sm:$0xff]
  %v4754 = vld [vmem:[#allocation3 + $0x4] sm:$0xe]
  %v4755 = vld [vmem:[#allocation3 + $0x8] sm:$0xf]
  %v4756 = vld [vmem:[#allocation3 + $0xc] sm:$0xf]
  %v4757 = vld [vmem:[#allocation3 + $0x10] sm:$0xf]
  %v4758 = vld [vmem:[#allocation3 + $0x14] sm:$0xf]
  %v4759 = vld [vmem:[#allocation3 + $0x18] sm:$0xf]
  %v4760 = vld [vmem:[#allocation3 + $0x1c] sm:$0xf]
  %v4761 = vld [vmem:[#allocation3 + $0x20] sm:$0xf]
  %v4762 = vld [vmem:[#allocation3 + $0x24] sm:$0xf]
  %v4763 = vld [vmem:[#allocation3 + $0x28] sm:$0xf]
  %v4764 = vld [vmem:[#allocation3 + $0x2c] sm:$0x1]
  %v4765 = vld [vmem:[%s1814] sm:$0xf]
  %v4766 = vld [vmem:[%s1814 + $0x4] sm:$0xf]
  %v4767 = vld [vmem:[%s1814 + $0x8] sm:$0xf]
  %v4768 = vld [vmem:[%s1814 + $0xc] sm:$0xf]
  %v4769 = vld [vmem:[%s1814 + $0x10] sm:$0xf]
  %v4770 = vld [vmem:[%s1814 + $0x14] sm:$0xf]
  %v4771 = vld [vmem:[%s1814 + $0x18] sm:$0xf]
  %v4772 = vld [vmem:[%s1814 + $0x1c] sm:$0xf]
  %v4773 = vld [vmem:[%s1814 + $0x20] sm:$0xf]
  %v4774 = vld [vmem:[%s1814 + $0x24] sm:$0xf]
  %v4775 = vld [vmem:[%s1814 + $0x28] sm:$0xf]
  %v4776 = vld [vmem:[%s1814 + $0x2c] sm:$0xf]
  %v4777 = vld [vmem:[%s1814 + $0x30] sm:$0xf]
  %v4778 = vld [vmem:[%s1814 + $0x34] sm:$0xf]
  %v4779 = vld [vmem:[%s1814 + $0x38] sm:$0xf]
  %v4780 = vld [vmem:[%s1814 + $0x3c] sm:$0xf]
  %v4792 = vunpack.c.l.b16 %v4754
  %v4793 = vunpack.c.l.b16 %v4755
  %v4794 = vunpack.c.l.b16 %v4756
  %v4795 = vunpack.c.l.b16 %v4757
  %v4796 = vunpack.c.l.b16 %v4758
  %v4797 = vunpack.c.l.b16 %v4759
  %v4798 = vunpack.c.l.b16 %v4760
  %v4799 = vunpack.c.l.b16 %v4761
  %v4800 = vunpack.c.l.b16 %v4762
  %v4801 = vunpack.c.l.b16 %v4763
  %v4802 = vunpack.c.l.b16 %v4764
  %v4803 = vpack.c.b16 %v4793, %v4792
  %v4804 = vpack.c.b16 %v4795, %v4794
  %v4805 = vpack.c.b16 %v4797, %v4796
  %v4806 = vpack.c.b16 %v4799, %v4798
  %v4807 = vpack.c.b16 %v4801, %v4800
  %v4808 = vpack.c.b16 %v4802, %v4802
  %v4809 = vrot.slane %v4803, 1
  %v4810 = vrot.slane %v4804, 1
  %v4811 = vsel %vm518, %v4809, %v4810
  %v4812 = vrot.slane %v4805, 1
  %v4813 = vsel %vm518, %v4810, %v4812
  %v4814 = vrot.slane %v4806, 1
  %v4815 = vsel %vm518, %v4812, %v4814
  %v4816 = vrot.slane %v4807, 1
  %v4817 = vsel %vm518, %v4814, %v4816
  %v4818 = vrot.slane %v4808, 1
  %v4819 = vsel %vm518, %v4816, %v4818
  %v4841 = vunpack.c.l.b16 %v4765
  %v4842 = vunpack.c.l.b16 %v4766
  %v4843 = vunpack.c.l.b16 %v4767
  %v4844 = vunpack.c.l.b16 %v4768
  %v4845 = vunpack.c.l.b16 %v4769
  %v4846 = vunpack.c.l.b16 %v4770
  %v4847 = vunpack.c.l.b16 %v4771
  %v4848 = vunpack.c.l.b16 %v4772
  %v4849 = vunpack.c.l.b16 %v4773
  %v4850 = vunpack.c.l.b16 %v4774
  %v4851 = vunpack.c.l.b16 %v4775
  %v4852 = vunpack.c.l.b16 %v4776
  %v4853 = vunpack.c.l.b16 %v4777
  %v4854 = vunpack.c.l.b16 %v4778
  %v4855 = vunpack.c.l.b16 %v4779
  %v4856 = vunpack.c.l.b16 %v4780
  %v4857 = vpack.c.b16 %v4842, %v4841
  %v4858 = vpack.c.b16 %v4844, %v4843
  %v4859 = vpack.c.b16 %v4846, %v4845
  %v4860 = vpack.c.b16 %v4848, %v4847
  %v4861 = vpack.c.b16 %v4850, %v4849
  %v4862 = vpack.c.b16 %v4852, %v4851
  %v4863 = vpack.c.b16 %v4854, %v4853
  %v4864 = vpack.c.b16 %v4856, %v4855
  %4873 = vmatpush.bf16.msra.mxu0 %v4864
  %4874 = vmatpush.bf16.msra.mxu0 %v4863
  %4875 = vmatpush.bf16.msra.mxu0 %v4862
  %4876 = vmatpush.bf16.msra.mxu0 %v4861
  %4877 = vmatpush.bf16.msra.mxu0 %v4860
  %4878 = vmatpush.bf16.msra.mxu0 %v4859
  %4879 = vmatpush.bf16.msra.mxu0 %v4858
  %4880 = vmatpush.bf16.msra.mxu0 %v4857
  %4881 = vmatmul.bf16.gmra.mxu0 %v4811
  %v4882 = vpop.f32.mrf.mxu0
  %v4883 = vadd.f32 0.0, %v4882
  %v4884 = vpop.f32.mrf.mxu0
  %v4885 = vadd.f32 0.0, %v4884
  %4886 = vmatmul.bf16.gmra.mxu0 %v4813
  %v4887 = vpop.f32.mrf.mxu0
  %v4888 = vadd.f32 0.0, %v4887
  %v4889 = vpop.f32.mrf.mxu0
  %v4890 = vadd.f32 0.0, %v4889
  %4891 = vmatmul.bf16.gmra.mxu0 %v4815
  %v4892 = vpop.f32.mrf.mxu0
  %v4893 = vadd.f32 0.0, %v4892
  %v4894 = vpop.f32.mrf.mxu0
  %v4895 = vadd.f32 0.0, %v4894
  %4896 = vmatmul.bf16.gmra.mxu0 %v4817
  %v4897 = vpop.f32.mrf.mxu0
  %v4898 = vadd.f32 0.0, %v4897
  %v4899 = vpop.f32.mrf.mxu0
  %v4900 = vadd.f32 0.0, %v4899
  %4901 = vmatmul.bf16.gmra.mxu0 %v4819
  %v4902 = vpop.f32.mrf.mxu0
  %v4903 = vadd.f32 0.0, %v4902
  %v4904 = vpop.f32.mrf.mxu0
  %v4905 = vadd.f32 0.0, %v4904
  %4906 = vdwg.mxu0
  %v4907 = vadd.f32 %v4744, %v4883
  %v4908 = vadd.f32 %v4745, %v4885
  %v4909 = vadd.f32 %v4746, %v4888
  %v4910 = vadd.f32 %v4747, %v4890
  %v4911 = vadd.f32 %v4748, %v4893
  %v4912 = vadd.f32 %v4749, %v4895
  %v4913 = vadd.f32 %v4750, %v4898
  %v4914 = vadd.f32 %v4751, %v4900
  %v4915 = vadd.f32 %v4752, %v4903
  %v4916 = vadd.f32 %v4753, %v4905
  %4917 = vst [vmem:[#allocation4] sm:$0xff] %v4907
  %4918 = vst [vmem:[#allocation4 + $0x8] sm:$0xff] %v4908
  %4919 = vst [vmem:[#allocation4 + $0x10] sm:$0xff] %v4909
  %4920 = vst [vmem:[#allocation4 + $0x18] sm:$0xff] %v4910
  %4921 = vst [vmem:[#allocation4 + $0x20] sm:$0xff] %v4911
  %4922 = vst [vmem:[#allocation4 + $0x28] sm:$0xff] %v4912
  %4923 = vst [vmem:[#allocation4 + $0x30] sm:$0xff] %v4913
  %4924 = vst [vmem:[#allocation4 + $0x38] sm:$0xff] %v4914
  %4925 = vst [vmem:[#allocation4 + $0x40] sm:$0xff] %v4915
  %4926 = vst [vmem:[#allocation4 + $0x48] sm:$0xff] %v4916
  %v4927 = vld [vmem:[#allocation4] sm:$0xff]
  %v4928 = vld [vmem:[#allocation4 + $0x8] sm:$0xff]
  %v4929 = vld [vmem:[#allocation4 + $0x10] sm:$0xff]
  %v4930 = vld [vmem:[#allocation4 + $0x18] sm:$0xff]
  %v4931 = vld [vmem:[#allocation4 + $0x20] sm:$0xff]
  %v4932 = vld [vmem:[#allocation4 + $0x28] sm:$0xff]
  %v4933 = vld [vmem:[#allocation4 + $0x30] sm:$0xff]
  %v4934 = vld [vmem:[#allocation4 + $0x38] sm:$0xff]
  %v4935 = vld [vmem:[#allocation4 + $0x40] sm:$0xff]
  %v4936 = vld [vmem:[#allocation4 + $0x48] sm:$0xff]
  %v4937 = vld [vmem:[#allocation3 + $0x4] sm:$0xe]
  %v4938 = vld [vmem:[#allocation3 + $0x8] sm:$0xf]
  %v4939 = vld [vmem:[#allocation3 + $0xc] sm:$0xf]
  %v4940 = vld [vmem:[#allocation3 + $0x10] sm:$0xf]
  %v4941 = vld [vmem:[#allocation3 + $0x14] sm:$0xf]
  %v4942 = vld [vmem:[#allocation3 + $0x18] sm:$0xf]
  %v4943 = vld [vmem:[#allocation3 + $0x1c] sm:$0xf]
  %v4944 = vld [vmem:[#allocation3 + $0x20] sm:$0xf]
  %v4945 = vld [vmem:[#allocation3 + $0x24] sm:$0xf]
  %v4946 = vld [vmem:[#allocation3 + $0x28] sm:$0xf]
  %v4947 = vld [vmem:[#allocation3 + $0x2c] sm:$0x3]
  %v4948 = vld [vmem:[%s1998] sm:$0xf]
  %v4949 = vld [vmem:[%s1998 + $0x4] sm:$0xf]
  %v4950 = vld [vmem:[%s1998 + $0x8] sm:$0xf]
  %v4951 = vld [vmem:[%s1998 + $0xc] sm:$0xf]
  %v4952 = vld [vmem:[%s1998 + $0x10] sm:$0xf]
  %v4953 = vld [vmem:[%s1998 + $0x14] sm:$0xf]
  %v4954 = vld [vmem:[%s1998 + $0x18] sm:$0xf]
  %v4955 = vld [vmem:[%s1998 + $0x1c] sm:$0xf]
  %v4956 = vld [vmem:[%s1998 + $0x20] sm:$0xf]
  %v4957 = vld [vmem:[%s1998 + $0x24] sm:$0xf]
  %v4958 = vld [vmem:[%s1998 + $0x28] sm:$0xf]
  %v4959 = vld [vmem:[%s1998 + $0x2c] sm:$0xf]
  %v4960 = vld [vmem:[%s1998 + $0x30] sm:$0xf]
  %v4961 = vld [vmem:[%s1998 + $0x34] sm:$0xf]
  %v4962 = vld [vmem:[%s1998 + $0x38] sm:$0xf]
  %v4963 = vld [vmem:[%s1998 + $0x3c] sm:$0xf]
  %v4975 = vunpack.c.l.b16 %v4937
  %v4976 = vunpack.c.l.b16 %v4938
  %v4977 = vunpack.c.l.b16 %v4939
  %v4978 = vunpack.c.l.b16 %v4940
  %v4979 = vunpack.c.l.b16 %v4941
  %v4980 = vunpack.c.l.b16 %v4942
  %v4981 = vunpack.c.l.b16 %v4943
  %v4982 = vunpack.c.l.b16 %v4944
  %v4983 = vunpack.c.l.b16 %v4945
  %v4984 = vunpack.c.l.b16 %v4946
  %v4985 = vunpack.c.l.b16 %v4947
  %v4986 = vpack.c.b16 %v4976, %v4975
  %v4987 = vpack.c.b16 %v4978, %v4977
  %v4988 = vpack.c.b16 %v4980, %v4979
  %v4989 = vpack.c.b16 %v4982, %v4981
  %v4990 = vpack.c.b16 %v4984, %v4983
  %v4991 = vpack.c.b16 %v4985, %v4985
  %v4993 = vshrl.u32 %v4986, 16
  %v4995 = vrot.slane %v4993, 1
  %v4996 = vshll.u32 %v4986, 16
  %v4998 = vrot.slane %v4996, 2
  %v4999 = vor.u32 %v4995, %v4998
  %v5001 = vshrl.u32 %v4987, 16
  %v5003 = vrot.slane %v5001, 1
  %v5004 = vshll.u32 %v4987, 16
  %v5006 = vrot.slane %v5004, 2
  %v5007 = vor.u32 %v5003, %v5006
  %v5008 = vsel %vm657, %v4999, %v5007
  %v5010 = vshrl.u32 %v4988, 16
  %v5012 = vrot.slane %v5010, 1
  %v5013 = vshll.u32 %v4988, 16
  %v5015 = vrot.slane %v5013, 2
  %v5016 = vor.u32 %v5012, %v5015
  %v5017 = vsel %vm657, %v5007, %v5016
  %v5019 = vshrl.u32 %v4989, 16
  %v5021 = vrot.slane %v5019, 1
  %v5022 = vshll.u32 %v4989, 16
  %v5024 = vrot.slane %v5022, 2
  %v5025 = vor.u32 %v5021, %v5024
  %v5026 = vsel %vm657, %v5016, %v5025
  %v5028 = vshrl.u32 %v4990, 16
  %v5030 = vrot.slane %v5028, 1
  %v5031 = vshll.u32 %v4990, 16
  %v5033 = vrot.slane %v5031, 2
  %v5034 = vor.u32 %v5030, %v5033
  %v5035 = vsel %vm657, %v5025, %v5034
  %v5037 = vshrl.u32 %v4991, 16
  %v5039 = vrot.slane %v5037, 1
  %v5040 = vshll.u32 %v4991, 16
  %v5042 = vrot.slane %v5040, 2
  %v5043 = vor.u32 %v5039, %v5042
  %v5044 = vsel %vm657, %v5034, %v5043
  %v5066 = vunpack.c.l.b16 %v4948
  %v5067 = vunpack.c.l.b16 %v4949
  %v5068 = vunpack.c.l.b16 %v4950
  %v5069 = vunpack.c.l.b16 %v4951
  %v5070 = vunpack.c.l.b16 %v4952
  %v5071 = vunpack.c.l.b16 %v4953
  %v5072 = vunpack.c.l.b16 %v4954
  %v5073 = vunpack.c.l.b16 %v4955
  %v5074 = vunpack.c.l.b16 %v4956
  %v5075 = vunpack.c.l.b16 %v4957
  %v5076 = vunpack.c.l.b16 %v4958
  %v5077 = vunpack.c.l.b16 %v4959
  %v5078 = vunpack.c.l.b16 %v4960
  %v5079 = vunpack.c.l.b16 %v4961
  %v5080 = vunpack.c.l.b16 %v4962
  %v5081 = vunpack.c.l.b16 %v4963
  %v5082 = vpack.c.b16 %v5067, %v5066
  %v5083 = vpack.c.b16 %v5069, %v5068
  %v5084 = vpack.c.b16 %v5071, %v5070
  %v5085 = vpack.c.b16 %v5073, %v5072
  %v5086 = vpack.c.b16 %v5075, %v5074
  %v5087 = vpack.c.b16 %v5077, %v5076
  %v5088 = vpack.c.b16 %v5079, %v5078
  %v5089 = vpack.c.b16 %v5081, %v5080
  %5098 = vmatpush.bf16.msra.mxu0 %v5089
  %5099 = vmatpush.bf16.msra.mxu0 %v5088
  %5100 = vmatpush.bf16.msra.mxu0 %v5087
  %5101 = vmatpush.bf16.msra.mxu0 %v5086
  %5102 = vmatpush.bf16.msra.mxu0 %v5085
  %5103 = vmatpush.bf16.msra.mxu0 %v5084
  %5104 = vmatpush.bf16.msra.mxu0 %v5083
  %5105 = vmatpush.bf16.msra.mxu0 %v5082
  %5106 = vmatmul.bf16.gmra.mxu0 %v5008
  %v5107 = vpop.f32.mrf.mxu0
  %v5108 = vadd.f32 0.0, %v5107
  %v5109 = vpop.f32.mrf.mxu0
  %v5110 = vadd.f32 0.0, %v5109
  %5111 = vmatmul.bf16.gmra.mxu0 %v5017
  %v5112 = vpop.f32.mrf.mxu0
  %v5113 = vadd.f32 0.0, %v5112
  %v5114 = vpop.f32.mrf.mxu0
  %v5115 = vadd.f32 0.0, %v5114
  %5116 = vmatmul.bf16.gmra.mxu0 %v5026
  %v5117 = vpop.f32.mrf.mxu0
  %v5118 = vadd.f32 0.0, %v5117
  %v5119 = vpop.f32.mrf.mxu0
  %v5120 = vadd.f32 0.0, %v5119
  %5121 = vmatmul.bf16.gmra.mxu0 %v5035
  %v5122 = vpop.f32.mrf.mxu0
  %v5123 = vadd.f32 0.0, %v5122
  %v5124 = vpop.f32.mrf.mxu0
  %v5125 = vadd.f32 0.0, %v5124
  %5126 = vmatmul.bf16.gmra.mxu0 %v5044
  %v5127 = vpop.f32.mrf.mxu0
  %v5128 = vadd.f32 0.0, %v5127
  %v5129 = vpop.f32.mrf.mxu0
  %v5130 = vadd.f32 0.0, %v5129
  %5131 = vdwg.mxu0
  %v5132 = vadd.f32 %v4927, %v5108
  %v5133 = vadd.f32 %v4928, %v5110
  %v5134 = vadd.f32 %v4929, %v5113
  %v5135 = vadd.f32 %v4930, %v5115
  %v5136 = vadd.f32 %v4931, %v5118
  %v5137 = vadd.f32 %v4932, %v5120
  %v5138 = vadd.f32 %v4933, %v5123
  %v5139 = vadd.f32 %v4934, %v5125
  %v5140 = vadd.f32 %v4935, %v5128
  %v5141 = vadd.f32 %v4936, %v5130
  %5142 = vst [vmem:[#allocation4] sm:$0xff] %v5132
  %5143 = vst [vmem:[#allocation4 + $0x8] sm:$0xff] %v5133
  %5144 = vst [vmem:[#allocation4 + $0x10] sm:$0xff] %v5134
  %5145 = vst [vmem:[#allocation4 + $0x18] sm:$0xff] %v5135
  %5146 = vst [vmem:[#allocation4 + $0x20] sm:$0xff] %v5136
  %5147 = vst [vmem:[#allocation4 + $0x28] sm:$0xff] %v5137
  %5148 = vst [vmem:[#allocation4 + $0x30] sm:$0xff] %v5138
  %5149 = vst [vmem:[#allocation4 + $0x38] sm:$0xff] %v5139
  %5150 = vst [vmem:[#allocation4 + $0x40] sm:$0xff] %v5140
  %5151 = vst [vmem:[#allocation4 + $0x48] sm:$0xff] %v5141
  %v5152 = vld [vmem:[#allocation4] sm:$0xff]
  %v5153 = vld [vmem:[#allocation4 + $0x8] sm:$0xff]
  %v5154 = vld [vmem:[#allocation4 + $0x10] sm:$0xff]
  %v5155 = vld [vmem:[#allocation4 + $0x18] sm:$0xff]
  %v5156 = vld [vmem:[#allocation4 + $0x20] sm:$0xff]
  %v5157 = vld [vmem:[#allocation4 + $0x28] sm:$0xff]
  %v5158 = vld [vmem:[#allocation4 + $0x30] sm:$0xff]
  %v5159 = vld [vmem:[#allocation4 + $0x38] sm:$0xff]
  %v5160 = vld [vmem:[#allocation4 + $0x40] sm:$0xff]
  %v5161 = vld [vmem:[#allocation4 + $0x48] sm:$0xff]
  %v5162 = vld [vmem:[#allocation3 + $0x4] sm:$0xc]
  %v5163 = vld [vmem:[#allocation3 + $0x8] sm:$0xf]
  %v5164 = vld [vmem:[#allocation3 + $0xc] sm:$0xf]
  %v5165 = vld [vmem:[#allocation3 + $0x10] sm:$0xf]
  %v5166 = vld [vmem:[#allocation3 + $0x14] sm:$0xf]
  %v5167 = vld [vmem:[#allocation3 + $0x18] sm:$0xf]
  %v5168 = vld [vmem:[#allocation3 + $0x1c] sm:$0xf]
  %v5169 = vld [vmem:[#allocation3 + $0x20] sm:$0xf]
  %v5170 = vld [vmem:[#allocation3 + $0x24] sm:$0xf]
  %v5171 = vld [vmem:[#allocation3 + $0x28] sm:$0xf]
  %v5172 = vld [vmem:[#allocation3 + $0x2c] sm:$0x3]
  %v5173 = vld [vmem:[%s2224] sm:$0xf]
  %v5174 = vld [vmem:[%s2224 + $0x4] sm:$0xf]
  %v5175 = vld [vmem:[%s2224 + $0x8] sm:$0xf]
  %v5176 = vld [vmem:[%s2224 + $0xc] sm:$0xf]
  %v5177 = vld [vmem:[%s2224 + $0x10] sm:$0xf]
  %v5178 = vld [vmem:[%s2224 + $0x14] sm:$0xf]
  %v5179 = vld [vmem:[%s2224 + $0x18] sm:$0xf]
  %v5180 = vld [vmem:[%s2224 + $0x1c] sm:$0xf]
  %v5181 = vld [vmem:[%s2224 + $0x20] sm:$0xf]
  %v5182 = vld [vmem:[%s2224 + $0x24] sm:$0xf]
  %v5183 = vld [vmem:[%s2224 + $0x28] sm:$0xf]
  %v5184 = vld [vmem:[%s2224 + $0x2c] sm:$0xf]
  %v5185 = vld [vmem:[%s2224 + $0x30] sm:$0xf]
  %v5186 = vld [vmem:[%s2224 + $0x34] sm:$0xf]
  %v5187 = vld [vmem:[%s2224 + $0x38] sm:$0xf]
  %v5188 = vld [vmem:[%s2224 + $0x3c] sm:$0xf]
  %v5200 = vunpack.c.l.b16 %v5162
  %v5201 = vunpack.c.l.b16 %v5163
  %v5202 = vunpack.c.l.b16 %v5164
  %v5203 = vunpack.c.l.b16 %v5165
  %v5204 = vunpack.c.l.b16 %v5166
  %v5205 = vunpack.c.l.b16 %v5167
  %v5206 = vunpack.c.l.b16 %v5168
  %v5207 = vunpack.c.l.b16 %v5169
  %v5208 = vunpack.c.l.b16 %v5170
  %v5209 = vunpack.c.l.b16 %v5171
  %v5210 = vunpack.c.l.b16 %v5172
  %v5211 = vpack.c.b16 %v5201, %v5200
  %v5212 = vpack.c.b16 %v5203, %v5202
  %v5213 = vpack.c.b16 %v5205, %v5204
  %v5214 = vpack.c.b16 %v5207, %v5206
  %v5215 = vpack.c.b16 %v5209, %v5208
  %v5216 = vpack.c.b16 %v5210, %v5210
  %v5217 = vrot.slane %v5211, 2
  %v5218 = vrot.slane %v5212, 2
  %v5219 = vsel %vm2269, %v5217, %v5218
  %v5220 = vrot.slane %v5213, 2
  %v5221 = vsel %vm2269, %v5218, %v5220
  %v5222 = vrot.slane %v5214, 2
  %v5223 = vsel %vm2269, %v5220, %v5222
  %v5224 = vrot.slane %v5215, 2
  %v5225 = vsel %vm2269, %v5222, %v5224
  %v5226 = vrot.slane %v5216, 2
  %v5227 = vsel %vm2269, %v5224, %v5226
  %v5249 = vunpack.c.l.b16 %v5173
  %v5250 = vunpack.c.l.b16 %v5174
  %v5251 = vunpack.c.l.b16 %v5175
  %v5252 = vunpack.c.l.b16 %v5176
  %v5253 = vunpack.c.l.b16 %v5177
  %v5254 = vunpack.c.l.b16 %v5178
  %v5255 = vunpack.c.l.b16 %v5179
  %v5256 = vunpack.c.l.b16 %v5180
  %v5257 = vunpack.c.l.b16 %v5181
  %v5258 = vunpack.c.l.b16 %v5182
  %v5259 = vunpack.c.l.b16 %v5183
  %v5260 = vunpack.c.l.b16 %v5184
  %v5261 = vunpack.c.l.b16 %v5185
  %v5262 = vunpack.c.l.b16 %v5186
  %v5263 = vunpack.c.l.b16 %v5187
  %v5264 = vunpack.c.l.b16 %v5188
  %v5265 = vpack.c.b16 %v5250, %v5249
  %v5266 = vpack.c.b16 %v5252, %v5251
  %v5267 = vpack.c.b16 %v5254, %v5253
  %v5268 = vpack.c.b16 %v5256, %v5255
  %v5269 = vpack.c.b16 %v5258, %v5257
  %v5270 = vpack.c.b16 %v5260, %v5259
  %v5271 = vpack.c.b16 %v5262, %v5261
  %v5272 = vpack.c.b16 %v5264, %v5263
  %5281 = vmatpush.bf16.msra.mxu0 %v5272
  %5282 = vmatpush.bf16.msra.mxu0 %v5271
  %5283 = vmatpush.bf16.msra.mxu0 %v5270
  %5284 = vmatpush.bf16.msra.mxu0 %v5269
  %5285 = vmatpush.bf16.msra.mxu0 %v5268
  %5286 = vmatpush.bf16.msra.mxu0 %v5267
  %5287 = vmatpush.bf16.msra.mxu0 %v5266
  %5288 = vmatpush.bf16.msra.mxu0 %v5265
  %5289 = vmatmul.bf16.gmra.mxu0 %v5219
  %v5290 = vpop.f32.mrf.mxu0
  %v5291 = vadd.f32 0.0, %v5290
  %v5292 = vpop.f32.mrf.mxu0
  %v5293 = vadd.f32 0.0, %v5292
  %5294 = vmatmul.bf16.gmra.mxu0 %v5221
  %v5295 = vpop.f32.mrf.mxu0
  %v5296 = vadd.f32 0.0, %v5295
  %v5297 = vpop.f32.mrf.mxu0
  %v5298 = vadd.f32 0.0, %v5297
  %5299 = vmatmul.bf16.gmra.mxu0 %v5223
  %v5300 = vpop.f32.mrf.mxu0
  %v5301 = vadd.f32 0.0, %v5300
  %v5302 = vpop.f32.mrf.mxu0
  %v5303 = vadd.f32 0.0, %v5302
  %5304 = vmatmul.bf16.gmra.mxu0 %v5225
  %v5305 = vpop.f32.mrf.mxu0
  %v5306 = vadd.f32 0.0, %v5305
  %v5307 = vpop.f32.mrf.mxu0
  %v5308 = vadd.f32 0.0, %v5307
  %5309 = vmatmul.bf16.gmra.mxu0 %v5227
  %v5310 = vpop.f32.mrf.mxu0
  %v5311 = vadd.f32 0.0, %v5310
  %v5312 = vpop.f32.mrf.mxu0
  %v5313 = vadd.f32 0.0, %v5312
  %5314 = vdwg.mxu0
  %v5315 = vadd.f32 %v5152, %v5291
  %v5316 = vadd.f32 %v5153, %v5293
  %v5317 = vadd.f32 %v5154, %v5296
  %v5318 = vadd.f32 %v5155, %v5298
  %v5319 = vadd.f32 %v5156, %v5301
  %v5320 = vadd.f32 %v5157, %v5303
  %v5321 = vadd.f32 %v5158, %v5306
  %v5322 = vadd.f32 %v5159, %v5308
  %v5323 = vadd.f32 %v5160, %v5311
  %v5324 = vadd.f32 %v5161, %v5313
  %5325 = vst [vmem:[#allocation4] sm:$0xff] %v5315
  %5326 = vst [vmem:[#allocation4 + $0x8] sm:$0xff] %v5316
  %5327 = vst [vmem:[#allocation4 + $0x10] sm:$0xff] %v5317
  %5328 = vst [vmem:[#allocation4 + $0x18] sm:$0xff] %v5318
  %5329 = vst [vmem:[#allocation4 + $0x20] sm:$0xff] %v5319
  %5330 = vst [vmem:[#allocation4 + $0x28] sm:$0xff] %v5320
  %5331 = vst [vmem:[#allocation4 + $0x30] sm:$0xff] %v5321
  %5332 = vst [vmem:[#allocation4 + $0x38] sm:$0xff] %v5322
  %5333 = vst [vmem:[#allocation4 + $0x40] sm:$0xff] %v5323
  %5334 = vst [vmem:[#allocation4 + $0x48] sm:$0xff] %v5324
  %v5335 = vld [vmem:[#allocation4] sm:$0xff]
  %v5336 = vld [vmem:[#allocation4 + $0x8] sm:$0xff]
  %v5337 = vld [vmem:[#allocation4 + $0x10] sm:$0xff]
  %v5338 = vld [vmem:[#allocation4 + $0x18] sm:$0xff]
  %v5339 = vld [vmem:[#allocation4 + $0x20] sm:$0xff]
  %v5340 = vld [vmem:[#allocation4 + $0x28] sm:$0xff]
  %v5341 = vld [vmem:[#allocation4 + $0x30] sm:$0xff]
  %v5342 = vld [vmem:[#allocation4 + $0x38] sm:$0xff]
  %v5343 = vld [vmem:[#allocation4 + $0x40] sm:$0xff]
  %v5344 = vld [vmem:[#allocation4 + $0x48] sm:$0xff]
  %v5345 = vld [vmem:[#allocation3 + $0x8] sm:$0xc]
  %v5346 = vld [vmem:[#allocation3 + $0xc] sm:$0xf]
  %v5347 = vld [vmem:[#allocation3 + $0x10] sm:$0xf]
  %v5348 = vld [vmem:[#allocation3 + $0x14] sm:$0xf]
  %v5349 = vld [vmem:[#allocation3 + $0x18] sm:$0xf]
  %v5350 = vld [vmem:[#allocation3 + $0x1c] sm:$0xf]
  %v5351 = vld [vmem:[#allocation3 + $0x20] sm:$0xf]
  %v5352 = vld [vmem:[#allocation3 + $0x24] sm:$0xf]
  %v5353 = vld [vmem:[#allocation3 + $0x28] sm:$0xf]
  %v5354 = vld [vmem:[#allocation3 + $0x2c] sm:$0xf]
  %v5355 = vld [vmem:[#allocation3 + $0x30] sm:$0x3]
  %v5356 = vld [vmem:[%s2409] sm:$0xf]
  %v5357 = vld [vmem:[%s2409 + $0x4] sm:$0xf]
  %v5358 = vld [vmem:[%s2409 + $0x8] sm:$0xf]
  %v5359 = vld [vmem:[%s2409 + $0xc] sm:$0xf]
  %v5360 = vld [vmem:[%s2409 + $0x10] sm:$0xf]
  %v5361 = vld [vmem:[%s2409 + $0x14] sm:$0xf]
  %v5362 = vld [vmem:[%s2409 + $0x18] sm:$0xf]
  %v5363 = vld [vmem:[%s2409 + $0x1c] sm:$0xf]
  %v5364 = vld [vmem:[%s2409 + $0x20] sm:$0xf]
  %v5365 = vld [vmem:[%s2409 + $0x24] sm:$0xf]
  %v5366 = vld [vmem:[%s2409 + $0x28] sm:$0xf]
  %v5367 = vld [vmem:[%s2409 + $0x2c] sm:$0xf]
  %v5368 = vld [vmem:[%s2409 + $0x30] sm:$0xf]
  %v5369 = vld [vmem:[%s2409 + $0x34] sm:$0xf]
  %v5370 = vld [vmem:[%s2409 + $0x38] sm:$0xf]
  %v5371 = vld [vmem:[%s2409 + $0x3c] sm:$0xf]
  %v5383 = vunpack.c.l.b16 %v5345
  %v5384 = vunpack.c.l.b16 %v5346
  %v5385 = vunpack.c.l.b16 %v5347
  %v5386 = vunpack.c.l.b16 %v5348
  %v5387 = vunpack.c.l.b16 %v5349
  %v5388 = vunpack.c.l.b16 %v5350
  %v5389 = vunpack.c.l.b16 %v5351
  %v5390 = vunpack.c.l.b16 %v5352
  %v5391 = vunpack.c.l.b16 %v5353
  %v5392 = vunpack.c.l.b16 %v5354
  %v5393 = vunpack.c.l.b16 %v5355
  %v5394 = vpack.c.b16 %v5384, %v5383
  %v5395 = vpack.c.b16 %v5386, %v5385
  %v5396 = vpack.c.b16 %v5388, %v5387
  %v5397 = vpack.c.b16 %v5390, %v5389
  %v5398 = vpack.c.b16 %v5392, %v5391
  %v5399 = vpack.c.b16 %v5393, %v5393
  %v5400 = vrot.slane %v5394, 2
  %v5401 = vrot.slane %v5395, 2
  %v5402 = vsel %vm2269, %v5400, %v5401
  %v5403 = vrot.slane %v5396, 2
  %v5404 = vsel %vm2269, %v5401, %v5403
  %v5405 = vrot.slane %v5397, 2
  %v5406 = vsel %vm2269, %v5403, %v5405
  %v5407 = vrot.slane %v5398, 2
  %v5408 = vsel %vm2269, %v5405, %v5407
  %v5409 = vrot.slane %v5399, 2
  %v5410 = vsel %vm2269, %v5407, %v5409
  %v5432 = vunpack.c.l.b16 %v5356
  %v5433 = vunpack.c.l.b16 %v5357
  %v5434 = vunpack.c.l.b16 %v5358
  %v5435 = vunpack.c.l.b16 %v5359
  %v5436 = vunpack.c.l.b16 %v5360
  %v5437 = vunpack.c.l.b16 %v5361
  %v5438 = vunpack.c.l.b16 %v5362
  %v5439 = vunpack.c.l.b16 %v5363
  %v5440 = vunpack.c.l.b16 %v5364
  %v5441 = vunpack.c.l.b16 %v5365
  %v5442 = vunpack.c.l.b16 %v5366
  %v5443 = vunpack.c.l.b16 %v5367
  %v5444 = vunpack.c.l.b16 %v5368
  %v5445 = vunpack.c.l.b16 %v5369
  %v5446 = vunpack.c.l.b16 %v5370
  %v5447 = vunpack.c.l.b16 %v5371
  %v5448 = vpack.c.b16 %v5433, %v5432
  %v5449 = vpack.c.b16 %v5435, %v5434
  %v5450 = vpack.c.b16 %v5437, %v5436
  %v5451 = vpack.c.b16 %v5439, %v5438
  %v5452 = vpack.c.b16 %v5441, %v5440
  %v5453 = vpack.c.b16 %v5443, %v5442
  %v5454 = vpack.c.b16 %v5445, %v5444
  %v5455 = vpack.c.b16 %v5447, %v5446
  %5464 = vmatpush.bf16.msra.mxu0 %v5455
  %5465 = vmatpush.bf16.msra.mxu0 %v5454
  %5466 = vmatpush.bf16.msra.mxu0 %v5453
  %5467 = vmatpush.bf16.msra.mxu0 %v5452
  %5468 = vmatpush.bf16.msra.mxu0 %v5451
  %5469 = vmatpush.bf16.msra.mxu0 %v5450
  %5470 = vmatpush.bf16.msra.mxu0 %v5449
  %5471 = vmatpush.bf16.msra.mxu0 %v5448
  %5472 = vmatmul.bf16.gmra.mxu0 %v5402
  %v5473 = vpop.f32.mrf.mxu0
  %v5474 = vadd.f32 0.0, %v5473
  %v5475 = vpop.f32.mrf.mxu0
  %v5476 = vadd.f32 0.0, %v5475
  %5477 = vmatmul.bf16.gmra.mxu0 %v5404
  %v5478 = vpop.f32.mrf.mxu0
  %v5479 = vadd.f32 0.0, %v5478
  %v5480 = vpop.f32.mrf.mxu0
  %v5481 = vadd.f32 0.0, %v5480
  %5482 = vmatmul.bf16.gmra.mxu0 %v5406
  %v5483 = vpop.f32.mrf.mxu0
  %v5484 = vadd.f32 0.0, %v5483
  %v5485 = vpop.f32.mrf.mxu0
  %v5486 = vadd.f32 0.0, %v5485
  %5487 = vmatmul.bf16.gmra.mxu0 %v5408
  %v5488 = vpop.f32.mrf.mxu0
  %v5489 = vadd.f32 0.0, %v5488
  %v5490 = vpop.f32.mrf.mxu0
  %v5491 = vadd.f32 0.0, %v5490
  %5492 = vmatmul.bf16.gmra.mxu0 %v5410
  %v5493 = vpop.f32.mrf.mxu0
  %v5494 = vadd.f32 0.0, %v5493
  %v5495 = vpop.f32.mrf.mxu0
  %v5496 = vadd.f32 0.0, %v5495
  %5497 = vdwg.mxu0
  %v5498 = vadd.f32 %v5335, %v5474
  %v5499 = vadd.f32 %v5336, %v5476
  %v5500 = vadd.f32 %v5337, %v5479
  %v5501 = vadd.f32 %v5338, %v5481
  %v5502 = vadd.f32 %v5339, %v5484
  %v5503 = vadd.f32 %v5340, %v5486
  %v5504 = vadd.f32 %v5341, %v5489
  %v5505 = vadd.f32 %v5342, %v5491
  %v5506 = vadd.f32 %v5343, %v5494
  %v5507 = vadd.f32 %v5344, %v5496
  %5508 = vst [vmem:[#allocation4] sm:$0xff] %v5498
  %5509 = vst [vmem:[#allocation4 + $0x8] sm:$0xff] %v5499
  %5510 = vst [vmem:[#allocation4 + $0x10] sm:$0xff] %v5500
  %5511 = vst [vmem:[#allocation4 + $0x18] sm:$0xff] %v5501
  %5512 = vst [vmem:[#allocation4 + $0x20] sm:$0xff] %v5502
  %5513 = vst [vmem:[#allocation4 + $0x28] sm:$0xff] %v5503
  %5514 = vst [vmem:[#allocation4 + $0x30] sm:$0xff] %v5504
  %5515 = vst [vmem:[#allocation4 + $0x38] sm:$0xff] %v5505
  %5516 = vst [vmem:[#allocation4 + $0x40] sm:$0xff] %v5506
  %5517 = vst [vmem:[#allocation4 + $0x48] sm:$0xff] %v5507
  %v5518 = vld [vmem:[#allocation4] sm:$0xff]
  %v5519 = vld [vmem:[#allocation4 + $0x8] sm:$0xff]
  %v5520 = vld [vmem:[#allocation4 + $0x10] sm:$0xff]
  %v5521 = vld [vmem:[#allocation4 + $0x18] sm:$0xff]
  %v5522 = vld [vmem:[#allocation4 + $0x20] sm:$0xff]
  %v5523 = vld [vmem:[#allocation4 + $0x28] sm:$0xff]
  %v5524 = vld [vmem:[#allocation4 + $0x30] sm:$0xff]
  %v5525 = vld [vmem:[#allocation4 + $0x38] sm:$0xff]
  %v5526 = vld [vmem:[#allocation4 + $0x40] sm:$0xff]
  %v5527 = vld [vmem:[#allocation4 + $0x48] sm:$0xff]
  %v5528 = vld [vmem:[#allocation3 + $0x8] sm:$0xc]
  %v5529 = vld [vmem:[#allocation3 + $0xc] sm:$0xf]
  %v5530 = vld [vmem:[#allocation3 + $0x10] sm:$0xf]
  %v5531 = vld [vmem:[#allocation3 + $0x14] sm:$0xf]
  %v5532 = vld [vmem:[#allocation3 + $0x18] sm:$0xf]
  %v5533 = vld [vmem:[#allocation3 + $0x1c] sm:$0xf]
  %v5534 = vld [vmem:[#allocation3 + $0x20] sm:$0xf]
  %v5535 = vld [vmem:[#allocation3 + $0x24] sm:$0xf]
  %v5536 = vld [vmem:[#allocation3 + $0x28] sm:$0xf]
  %v5537 = vld [vmem:[#allocation3 + $0x2c] sm:$0xf]
  %v5538 = vld [vmem:[#allocation3 + $0x30] sm:$0x7]
  %v5539 = vld [vmem:[%s2593] sm:$0xf]
  %v5540 = vld [vmem:[%s2593 + $0x4] sm:$0xf]
  %v5541 = vld [vmem:[%s2593 + $0x8] sm:$0xf]
  %v5542 = vld [vmem:[%s2593 + $0xc] sm:$0xf]
  %v5543 = vld [vmem:[%s2593 + $0x10] sm:$0xf]
  %v5544 = vld [vmem:[%s2593 + $0x14] sm:$0xf]
  %v5545 = vld [vmem:[%s2593 + $0x18] sm:$0xf]
  %v5546 = vld [vmem:[%s2593 + $0x1c] sm:$0xf]
  %v5547 = vld [vmem:[%s2593 + $0x20] sm:$0xf]
  %v5548 = vld [vmem:[%s2593 + $0x24] sm:$0xf]
  %v5549 = vld [vmem:[%s2593 + $0x28] sm:$0xf]
  %v5550 = vld [vmem:[%s2593 + $0x2c] sm:$0xf]
  %v5551 = vld [vmem:[%s2593 + $0x30] sm:$0xf]
  %v5552 = vld [vmem:[%s2593 + $0x34] sm:$0xf]
  %v5553 = vld [vmem:[%s2593 + $0x38] sm:$0xf]
  %v5554 = vld [vmem:[%s2593 + $0x3c] sm:$0xf]
  %v5566 = vunpack.c.l.b16 %v5528
  %v5567 = vunpack.c.l.b16 %v5529
  %v5568 = vunpack.c.l.b16 %v5530
  %v5569 = vunpack.c.l.b16 %v5531
  %v5570 = vunpack.c.l.b16 %v5532
  %v5571 = vunpack.c.l.b16 %v5533
  %v5572 = vunpack.c.l.b16 %v5534
  %v5573 = vunpack.c.l.b16 %v5535
  %v5574 = vunpack.c.l.b16 %v5536
  %v5575 = vunpack.c.l.b16 %v5537
  %v5576 = vunpack.c.l.b16 %v5538
  %v5577 = vpack.c.b16 %v5567, %v5566
  %v5578 = vpack.c.b16 %v5569, %v5568
  %v5579 = vpack.c.b16 %v5571, %v5570
  %v5580 = vpack.c.b16 %v5573, %v5572
  %v5581 = vpack.c.b16 %v5575, %v5574
  %v5582 = vpack.c.b16 %v5576, %v5576
  %v5584 = vshrl.u32 %v5577, 16
  %v5586 = vrot.slane %v5584, 2
  %v5587 = vshll.u32 %v5577, 16
  %v5589 = vrot.slane %v5587, 3
  %v5590 = vor.u32 %v5586, %v5589
  %v5592 = vshrl.u32 %v5578, 16
  %v5594 = vrot.slane %v5592, 2
  %v5595 = vshll.u32 %v5578, 16
  %v5597 = vrot.slane %v5595, 3
  %v5598 = vor.u32 %v5594, %v5597
  %v5599 = vsel %vm2638, %v5590, %v5598
  %v5601 = vshrl.u32 %v5579, 16
  %v5603 = vrot.slane %v5601, 2
  %v5604 = vshll.u32 %v5579, 16
  %v5606 = vrot.slane %v5604, 3
  %v5607 = vor.u32 %v5603, %v5606
  %v5608 = vsel %vm2638, %v5598, %v5607
  %v5610 = vshrl.u32 %v5580, 16
  %v5612 = vrot.slane %v5610, 2
  %v5613 = vshll.u32 %v5580, 16
  %v5615 = vrot.slane %v5613, 3
  %v5616 = vor.u32 %v5612, %v5615
  %v5617 = vsel %vm2638, %v5607, %v5616
  %v5619 = vshrl.u32 %v5581, 16
  %v5621 = vrot.slane %v5619, 2
  %v5622 = vshll.u32 %v5581, 16
  %v5624 = vrot.slane %v5622, 3
  %v5625 = vor.u32 %v5621, %v5624
  %v5626 = vsel %vm2638, %v5616, %v5625
  %v5628 = vshrl.u32 %v5582, 16
  %v5630 = vrot.slane %v5628, 2
  %v5631 = vshll.u32 %v5582, 16
  %v5633 = vrot.slane %v5631, 3
  %v5634 = vor.u32 %v5630, %v5633
  %v5635 = vsel %vm2638, %v5625, %v5634
  %v5657 = vunpack.c.l.b16 %v5539
  %v5658 = vunpack.c.l.b16 %v5540
  %v5659 = vunpack.c.l.b16 %v5541
  %v5660 = vunpack.c.l.b16 %v5542
  %v5661 = vunpack.c.l.b16 %v5543
  %v5662 = vunpack.c.l.b16 %v5544
  %v5663 = vunpack.c.l.b16 %v5545
  %v5664 = vunpack.c.l.b16 %v5546
  %v5665 = vunpack.c.l.b16 %v5547
  %v5666 = vunpack.c.l.b16 %v5548
  %v5667 = vunpack.c.l.b16 %v5549
  %v5668 = vunpack.c.l.b16 %v5550
  %v5669 = vunpack.c.l.b16 %v5551
  %v5670 = vunpack.c.l.b16 %v5552
  %v5671 = vunpack.c.l.b16 %v5553
  %v5672 = vunpack.c.l.b16 %v5554
  %v5673 = vpack.c.b16 %v5658, %v5657
  %v5674 = vpack.c.b16 %v5660, %v5659
  %v5675 = vpack.c.b16 %v5662, %v5661
  %v5676 = vpack.c.b16 %v5664, %v5663
  %v5677 = vpack.c.b16 %v5666, %v5665
  %v5678 = vpack.c.b16 %v5668, %v5667
  %v5679 = vpack.c.b16 %v5670, %v5669
  %v5680 = vpack.c.b16 %v5672, %v5671
  %5689 = vmatpush.bf16.msra.mxu0 %v5680
  %5690 = vmatpush.bf16.msra.mxu0 %v5679
  %5691 = vmatpush.bf16.msra.mxu0 %v5678
  %5692 = vmatpush.bf16.msra.mxu0 %v5677
  %5693 = vmatpush.bf16.msra.mxu0 %v5676
  %5694 = vmatpush.bf16.msra.mxu0 %v5675
  %5695 = vmatpush.bf16.msra.mxu0 %v5674
  %5696 = vmatpush.bf16.msra.mxu0 %v5673
  %5697 = vmatmul.bf16.gmra.mxu0 %v5599
  %v5698 = vpop.f32.mrf.mxu0
  %v5699 = vadd.f32 0.0, %v5698
  %v5700 = vpop.f32.mrf.mxu0
  %v5701 = vadd.f32 0.0, %v5700
  %5702 = vmatmul.bf16.gmra.mxu0 %v5608
  %v5703 = vpop.f32.mrf.mxu0
  %v5704 = vadd.f32 0.0, %v5703
  %v5705 = vpop.f32.mrf.mxu0
  %v5706 = vadd.f32 0.0, %v5705
  %5707 = vmatmul.bf16.gmra.mxu0 %v5617
  %v5708 = vpop.f32.mrf.mxu0
  %v5709 = vadd.f32 0.0, %v5708
  %v5710 = vpop.f32.mrf.mxu0
  %v5711 = vadd.f32 0.0, %v5710
  %5712 = vmatmul.bf16.gmra.mxu0 %v5626
  %v5713 = vpop.f32.mrf.mxu0
  %v5714 = vadd.f32 0.0, %v5713
  %v5715 = vpop.f32.mrf.mxu0
  %v5716 = vadd.f32 0.0, %v5715
  %5717 = vmatmul.bf16.gmra.mxu0 %v5635
  %v5718 = vpop.f32.mrf.mxu0
  %v5719 = vadd.f32 0.0, %v5718
  %v5720 = vpop.f32.mrf.mxu0
  %v5721 = vadd.f32 0.0, %v5720
  %5722 = vdwg.mxu0
  %v5723 = vadd.f32 %v5518, %v5699
  %v5724 = vadd.f32 %v5519, %v5701
  %v5725 = vadd.f32 %v5520, %v5704
  %v5726 = vadd.f32 %v5521, %v5706
  %v5727 = vadd.f32 %v5522, %v5709
  %v5728 = vadd.f32 %v5523, %v5711
  %v5729 = vadd.f32 %v5524, %v5714
  %v5730 = vadd.f32 %v5525, %v5716
  %v5731 = vadd.f32 %v5526, %v5719
  %v5732 = vadd.f32 %v5527, %v5721
  %5733 = vst [vmem:[#allocation4] sm:$0xff] %v5723
  %5734 = vst [vmem:[#allocation4 + $0x8] sm:$0xff] %v5724
  %5735 = vst [vmem:[#allocation4 + $0x10] sm:$0xff] %v5725
  %5736 = vst [vmem:[#allocation4 + $0x18] sm:$0xff] %v5726
  %5737 = vst [vmem:[#allocation4 + $0x20] sm:$0xff] %v5727
  %5738 = vst [vmem:[#allocation4 + $0x28] sm:$0xff] %v5728
  %5739 = vst [vmem:[#allocation4 + $0x30] sm:$0xff] %v5729
  %5740 = vst [vmem:[#allocation4 + $0x38] sm:$0xff] %v5730
  %5741 = vst [vmem:[#allocation4 + $0x40] sm:$0xff] %v5731
  %5742 = vst [vmem:[#allocation4 + $0x48] sm:$0xff] %v5732
  %v5743 = vld [vmem:[#allocation4] sm:$0xff]
  %v5744 = vld [vmem:[#allocation4 + $0x8] sm:$0xff]
  %v5745 = vld [vmem:[#allocation4 + $0x10] sm:$0xff]
  %v5746 = vld [vmem:[#allocation4 + $0x18] sm:$0xff]
  %v5747 = vld [vmem:[#allocation4 + $0x20] sm:$0xff]
  %v5748 = vld [vmem:[#allocation4 + $0x28] sm:$0xff]
  %v5749 = vld [vmem:[#allocation4 + $0x30] sm:$0xff]
  %v5750 = vld [vmem:[#allocation4 + $0x38] sm:$0xff]
  %v5751 = vld [vmem:[#allocation4 + $0x40] sm:$0xff]
  %v5752 = vld [vmem:[#allocation4 + $0x48] sm:$0xff]
  %v5753 = vld [vmem:[#allocation3 + $0x8] sm:$0x8]
  %v5754 = vld [vmem:[#allocation3 + $0xc] sm:$0xf]
  %v5755 = vld [vmem:[#allocation3 + $0x10] sm:$0xf]
  %v5756 = vld [vmem:[#allocation3 + $0x14] sm:$0xf]
  %v5757 = vld [vmem:[#allocation3 + $0x18] sm:$0xf]
  %v5758 = vld [vmem:[#allocation3 + $0x1c] sm:$0xf]
  %v5759 = vld [vmem:[#allocation3 + $0x20] sm:$0xf]
  %v5760 = vld [vmem:[#allocation3 + $0x24] sm:$0xf]
  %v5761 = vld [vmem:[#allocation3 + $0x28] sm:$0xf]
  %v5762 = vld [vmem:[#allocation3 + $0x2c] sm:$0xf]
  %v5763 = vld [vmem:[#allocation3 + $0x30] sm:$0x7]
  %v5764 = vld [vmem:[%s2820] sm:$0xf]
  %v5765 = vld [vmem:[%s2820 + $0x4] sm:$0xf]
  %v5766 = vld [vmem:[%s2820 + $0x8] sm:$0xf]
  %v5767 = vld [vmem:[%s2820 + $0xc] sm:$0xf]
  %v5768 = vld [vmem:[%s2820 + $0x10] sm:$0xf]
  %v5769 = vld [vmem:[%s2820 + $0x14] sm:$0xf]
  %v5770 = vld [vmem:[%s2820 + $0x18] sm:$0xf]
  %v5771 = vld [vmem:[%s2820 + $0x1c] sm:$0xf]
  %v5772 = vld [vmem:[%s2820 + $0x20] sm:$0xf]
  %v5773 = vld [vmem:[%s2820 + $0x24] sm:$0xf]
  %v5774 = vld [vmem:[%s2820 + $0x28] sm:$0xf]
  %v5775 = vld [vmem:[%s2820 + $0x2c] sm:$0xf]
  %v5776 = vld [vmem:[%s2820 + $0x30] sm:$0xf]
  %v5777 = vld [vmem:[%s2820 + $0x34] sm:$0xf]
  %v5778 = vld [vmem:[%s2820 + $0x38] sm:$0xf]
  %v5779 = vld [vmem:[%s2820 + $0x3c] sm:$0xf]
  %v5791 = vunpack.c.l.b16 %v5753
  %v5792 = vunpack.c.l.b16 %v5754
  %v5793 = vunpack.c.l.b16 %v5755
  %v5794 = vunpack.c.l.b16 %v5756
  %v5795 = vunpack.c.l.b16 %v5757
  %v5796 = vunpack.c.l.b16 %v5758
  %v5797 = vunpack.c.l.b16 %v5759
  %v5798 = vunpack.c.l.b16 %v5760
  %v5799 = vunpack.c.l.b16 %v5761
  %v5800 = vunpack.c.l.b16 %v5762
  %v5801 = vunpack.c.l.b16 %v5763
  %v5802 = vpack.c.b16 %v5792, %v5791
  %v5803 = vpack.c.b16 %v5794, %v5793
  %v5804 = vpack.c.b16 %v5796, %v5795
  %v5805 = vpack.c.b16 %v5798, %v5797
  %v5806 = vpack.c.b16 %v5800, %v5799
  %v5807 = vpack.c.b16 %v5801, %v5801
  %v5808 = vrot.slane %v5802, 3
  %v5809 = vrot.slane %v5803, 3
  %v5810 = vsel %vm2865, %v5808, %v5809
  %v5811 = vrot.slane %v5804, 3
  %v5812 = vsel %vm2865, %v5809, %v5811
  %v5813 = vrot.slane %v5805, 3
  %v5814 = vsel %vm2865, %v5811, %v5813
  %v5815 = vrot.slane %v5806, 3
  %v5816 = vsel %vm2865, %v5813, %v5815
  %v5817 = vrot.slane %v5807, 3
  %v5818 = vsel %vm2865, %v5815, %v5817
  %v5840 = vunpack.c.l.b16 %v5764
  %v5841 = vunpack.c.l.b16 %v5765
  %v5842 = vunpack.c.l.b16 %v5766
  %v5843 = vunpack.c.l.b16 %v5767
  %v5844 = vunpack.c.l.b16 %v5768
  %v5845 = vunpack.c.l.b16 %v5769
  %v5846 = vunpack.c.l.b16 %v5770
  %v5847 = vunpack.c.l.b16 %v5771
  %v5848 = vunpack.c.l.b16 %v5772
  %v5849 = vunpack.c.l.b16 %v5773
  %v5850 = vunpack.c.l.b16 %v5774
  %v5851 = vunpack.c.l.b16 %v5775
  %v5852 = vunpack.c.l.b16 %v5776
  %v5853 = vunpack.c.l.b16 %v5777
  %v5854 = vunpack.c.l.b16 %v5778
  %v5855 = vunpack.c.l.b16 %v5779
  %v5856 = vpack.c.b16 %v5841, %v5840
  %v5857 = vpack.c.b16 %v5843, %v5842
  %v5858 = vpack.c.b16 %v5845, %v5844
  %v5859 = vpack.c.b16 %v5847, %v5846
  %v5860 = vpack.c.b16 %v5849, %v5848
  %v5861 = vpack.c.b16 %v5851, %v5850
  %v5862 = vpack.c.b16 %v5853, %v5852
  %v5863 = vpack.c.b16 %v5855, %v5854
  %5872 = vmatpush.bf16.msra.mxu0 %v5863
  %5873 = vmatpush.bf16.msra.mxu0 %v5862
  %5874 = vmatpush.bf16.msra.mxu0 %v5861
  %5875 = vmatpush.bf16.msra.mxu0 %v5860
  %5876 = vmatpush.bf16.msra.mxu0 %v5859
  %5877 = vmatpush.bf16.msra.mxu0 %v5858
  %5878 = vmatpush.bf16.msra.mxu0 %v5857
  %5879 = vmatpush.bf16.msra.mxu0 %v5856
  %5880 = vmatmul.bf16.gmra.mxu0 %v5810
  %v5881 = vpop.f32.mrf.mxu0
  %v5882 = vadd.f32 0.0, %v5881
  %v5883 = vpop.f32.mrf.mxu0
  %v5884 = vadd.f32 0.0, %v5883
  %5885 = vmatmul.bf16.gmra.mxu0 %v5812
  %v5886 = vpop.f32.mrf.mxu0
  %v5887 = vadd.f32 0.0, %v5886
  %v5888 = vpop.f32.mrf.mxu0
  %v5889 = vadd.f32 0.0, %v5888
  %5890 = vmatmul.bf16.gmra.mxu0 %v5814
  %v5891 = vpop.f32.mrf.mxu0
  %v5892 = vadd.f32 0.0, %v5891
  %v5893 = vpop.f32.mrf.mxu0
  %v5894 = vadd.f32 0.0, %v5893
  %5895 = vmatmul.bf16.gmra.mxu0 %v5816
  %v5896 = vpop.f32.mrf.mxu0
  %v5897 = vadd.f32 0.0, %v5896
  %v5898 = vpop.f32.mrf.mxu0
  %v5899 = vadd.f32 0.0, %v5898
  %5900 = vmatmul.bf16.gmra.mxu0 %v5818
  %v5901 = vpop.f32.mrf.mxu0
  %v5902 = vadd.f32 0.0, %v5901
  %v5903 = vpop.f32.mrf.mxu0
  %v5904 = vadd.f32 0.0, %v5903
  %5905 = vdwg.mxu0
  %v5906 = vadd.f32 %v5743, %v5882
  %v5907 = vadd.f32 %v5744, %v5884
  %v5908 = vadd.f32 %v5745, %v5887
  %v5909 = vadd.f32 %v5746, %v5889
  %v5910 = vadd.f32 %v5747, %v5892
  %v5911 = vadd.f32 %v5748, %v5894
  %v5912 = vadd.f32 %v5749, %v5897
  %v5913 = vadd.f32 %v5750, %v5899
  %v5914 = vadd.f32 %v5751, %v5902
  %v5915 = vadd.f32 %v5752, %v5904
  %5916 = vst [vmem:[#allocation4] sm:$0xff] %v5906
  %5917 = vst [vmem:[#allocation4 + $0x8] sm:$0xff] %v5907
  %5918 = vst [vmem:[#allocation4 + $0x10] sm:$0xff] %v5908
  %5919 = vst [vmem:[#allocation4 + $0x18] sm:$0xff] %v5909
  %5920 = vst [vmem:[#allocation4 + $0x20] sm:$0xff] %v5910
  %5921 = vst [vmem:[#allocation4 + $0x28] sm:$0xff] %v5911
  %5922 = vst [vmem:[#allocation4 + $0x30] sm:$0xff] %v5912
  %5923 = vst [vmem:[#allocation4 + $0x38] sm:$0xff] %v5913
  %5924 = vst [vmem:[#allocation4 + $0x40] sm:$0xff] %v5914
  %5925 = vst [vmem:[#allocation4 + $0x48] sm:$0xff] %v5915
  %v5926 = vld [vmem:[#allocation4] sm:$0xff]
  %v5927 = vld [vmem:[#allocation4 + $0x8] sm:$0xff]
  %v5928 = vld [vmem:[#allocation4 + $0x10] sm:$0xff]
  %v5929 = vld [vmem:[#allocation4 + $0x18] sm:$0xff]
  %v5930 = vld [vmem:[#allocation4 + $0x20] sm:$0xff]
  %v5931 = vld [vmem:[#allocation4 + $0x28] sm:$0xff]
  %v5932 = vld [vmem:[#allocation4 + $0x30] sm:$0xff]
  %v5933 = vld [vmem:[#allocation4 + $0x38] sm:$0xff]
  %v5934 = vld [vmem:[#allocation4 + $0x40] sm:$0xff]
  %v5935 = vld [vmem:[#allocation4 + $0x48] sm:$0xff]
  %s5936 = scalar_lea.vmem %s10, 80
  %5937 = vst [vmem:[%s5936] sm:$0xff] %v5926
  %5938 = vst [vmem:[%s5936 + $0x8] sm:$0xff] %v5927
  %5939 = vst [vmem:[%s5936 + $0x10] sm:$0xff] %v5928
  %5940 = vst [vmem:[%s5936 + $0x18] sm:$0xff] %v5929
  %5941 = vst [vmem:[%s5936 + $0x20] sm:$0xff] %v5930
  %5942 = vst [vmem:[%s5936 + $0x28] sm:$0xff] %v5931
  %5943 = vst [vmem:[%s5936 + $0x30] sm:$0xff] %v5932
  %5944 = vst [vmem:[%s5936 + $0x38] sm:$0xff] %v5933
  %5945 = vst [vmem:[%s5936 + $0x40] sm:$0xff] %v5934
  %5946 = vst [vmem:[%s5936 + $0x48] sm:$0xff] %v5935
  // Predicated region
  $region42: #{basic_block_forward.1} parent=0 // pred_check
    _
  $region43: #{basic_block_forward.1} parent=0 // pred_check_branch
    %5948 = sbr.rel (0) target = $region45
  $region44: #{basic_block_forward.1} parent=0 // pred_region
    _
  $region45: #{basic_block_forward.1} parent=0 // pred_fallthru
    _
  // Predicated region
  $region46: #{basic_block_forward.1} parent=0 // pred_check
    _
  $region47: #{basic_block_forward.1} parent=0 // pred_check_branch
    %5950 = sbr.rel (0) target = $region49
  $region48: #{basic_block_forward.1} parent=0 // pred_region
    _
  $region49: #{basic_block_forward.1} parent=0 // pred_fallthru
    _

</llo_original>
